<compile_context>
chip_gen: v6e
topology: v6e:2x2x1
jax: 0.10.0
libtpu: 0.0.40
codegen_flags: <defaults>
</compile_context>

<pallas_src>
import jax
import jax.numpy as jnp
from jax import lax
from jax.experimental import pallas as pl
from jax.experimental.pallas import tpu as pltpu


_LANE = 128     # vreg lane width
_SUBLANE = 8    # vreg sublane count


def _round_up(x, m):
    return ((x + m - 1) // m) * m


def _char_decoder_kernel(x_ref, h0_ref, c0_ref, wih_ref, whh_ref, b_ref,
                         wout_ref, bout_ref,
                         scores_ref, hout_ref, cout_ref,
                         gx_sc, hall_sc):
    Bp, Hp = h0_ref.shape
    L = x_ref.shape[0] // Bp

    # ---- Prologue: hoist input-to-hidden matmul out of the recurrence.
    # One (L*Bp, E) @ (E, 4*Hp) MXU op + bias instead of L tiny per-step ones.
    gx_sc[...] = (jnp.dot(x_ref[...], wih_ref[...],
                          preferred_element_type=jnp.float32)
                  + b_ref[...])

    # ---- Serial LSTM recurrence; h/c carried as loop values (vregs).
    def step(t, carry):
        h, c = carry
        row = pl.multiple_of(t * Bp, Bp)                     # sublane-aligned
        gates = (gx_sc[pl.ds(row, Bp), :]
                 + jnp.dot(h, whh_ref[...],
                           preferred_element_type=jnp.float32))
        # Hp == 128-lane tile, so every gate slice is lane-block aligned.
        i_g = jax.nn.sigmoid(gates[:, 0 * Hp:1 * Hp])
        f_g = jax.nn.sigmoid(gates[:, 1 * Hp:2 * Hp])
        g_g = jnp.tanh(gates[:, 2 * Hp:3 * Hp])
        o_g = jax.nn.sigmoid(gates[:, 3 * Hp:4 * Hp])
        c_new = f_g * c + i_g * g_g
        h_new = o_g * jnp.tanh(c_new)
        hall_sc[pl.ds(row, Bp), :] = h_new
        return (h_new, c_new)

    h_fin, c_fin = lax.fori_loop(0, L, step, (h0_ref[...], c0_ref[...]),
                                 unroll=True)
    hout_ref[...] = h_fin
    cout_ref[...] = c_fin

    # ---- Epilogue: batched output projection, single lane-dense store.
    scores_ref[...] = (jnp.dot(hall_sc[...], wout_ref[...],
                               preferred_element_type=jnp.float32)
                       + bout_ref[...])


def _pad_gate_cols(w, H, Hp):
    """(K, 4H) -> (K, 4Hp): gate k's H real columns land at [k*Hp, k*Hp+H)."""
    K = w.shape[0]
    out = jnp.zeros((K, 4 * Hp), w.dtype)
    for k in range(4):
        out = out.at[:, k * Hp:k * Hp + H].set(w[:, k * H:(k + 1) * H])
    return out


def char_decoder_forward(char_ids, params, dec_hidden=None):
    """Pallas equivalent of CharDecoder.forward.

    char_ids   : (L, B) int32
    params     : dict with emb (V, E), w_ih (4H, E), w_hh (4H, H),
                 b_ih (4H,), b_hh (4H,), w_out (V, H), b_out (V,)
    dec_hidden : optional tuple of (1, B, H) tensors
    returns    : scores (L, B, V), (h, c) each (1, B, H)
    """
    emb = params["emb"]
    w_ih, w_hh = params["w_ih"], params["w_hh"]
    b_ih, b_hh = params["b_ih"], params["b_hh"]
    w_out, b_out = params["w_out"], params["b_out"]

    L, B = char_ids.shape
    V, E = emb.shape
    H = w_hh.shape[1]

    Hp = _round_up(H, _LANE)      # each gate gets a full 128-lane block
    Vp = _round_up(V, _LANE)      # lane-dense scores output
    Bp = _round_up(B, _SUBLANE)   # sublane-aligned per-step row slices
    f32 = jnp.float32

    # Embedding lookup (gather) as plain-JAX glue; pad batch with zero rows.
    x = jnp.take(emb, char_ids, axis=0).astype(f32)            # (L, B, E)
    x_p = jnp.zeros((L, Bp, E), f32).at[:, :B, :].set(x)
    x2d = x_p.reshape(L * Bp, E)                               # (L*Bp, E)

    if dec_hidden is None:
        h0 = jnp.zeros((B, H), f32)
        c0 = jnp.zeros((B, H), f32)
    else:
        h0 = dec_hidden[0].reshape(B, H).astype(f32)
        c0 = dec_hidden[1].reshape(B, H).astype(f32)
    h0p = jnp.zeros((Bp, Hp), f32).at[:B, :H].set(h0)
    c0p = jnp.zeros((Bp, Hp), f32).at[:B, :H].set(c0)

    # Gate-blocked, lane-padded weights (i, f, g, o blocks, each Hp wide).
    # Zero padding keeps the padded hidden dims exactly 0 through the recurrence.
    wih_p = _pad_gate_cols(w_ih.T.astype(f32), H, Hp)                     # (E, 4Hp)
    whh_p = jnp.zeros((Hp, 4 * Hp), f32).at[:H, :].set(
        _pad_gate_cols(w_hh.T.astype(f32), H, Hp))                        # (Hp, 4Hp)
    bias_p = _pad_gate_cols((b_ih + b_hh).reshape(1, 4 * H).astype(f32),
                            H, Hp)                                        # (1, 4Hp)
    wout_p = jnp.zeros((Hp, Vp), f32).at[:H, :V].set(w_out.T.astype(f32))  # (Hp, Vp)
    bout_p = jnp.zeros((1, Vp), f32).at[:, :V].set(
        b_out.reshape(1, V).astype(f32))                                   # (1, Vp)

    vmem = pl.BlockSpec(memory_space=pltpu.MemorySpace.VMEM)

    scores2d, h_fin, c_fin = pl.pallas_call(
        _char_decoder_kernel,
        out_shape=(
            jax.ShapeDtypeStruct((L * Bp, Vp), f32),
            jax.ShapeDtypeStruct((Bp, Hp), f32),
            jax.ShapeDtypeStruct((Bp, Hp), f32),
        ),
        in_specs=[vmem] * 8,
        out_specs=[vmem] * 3,
        scratch_shapes=[
            pltpu.VMEM((L * Bp, 4 * Hp), f32),   # hoisted x @ W_ih^T + bias
            pltpu.VMEM((L * Bp, Hp), f32),       # all hidden states h_t
        ],
    )(x2d, h0p, c0p, wih_p, whh_p, bias_p, wout_p, bout_p)

    scores = scores2d.reshape(L, Bp, Vp)[:, :B, :V]
    h_out = h_fin[:B, :H][None]
    c_out = c_fin[:B, :H][None]
    return scores, (h_out, c_out)


def _reference_forward(char_ids, params, dec_hidden=None):
    """Pure-JAX reference (lax.scan LSTM) to check the kernel."""
    emb = params["emb"]
    w_ih, w_hh = params["w_ih"], params["w_hh"]
    b_ih, b_hh = params["b_ih"], params["b_hh"]
    w_out, b_out = params["w_out"], params["b_out"]
    L, B = char_ids.shape
    H = w_hh.shape[1]
    x = jnp.take(emb, char_ids, axis=0)
    if dec_hidden is None:
        h0 = jnp.zeros((B, H), jnp.float32)
        c0 = jnp.zeros((B, H), jnp.float32)
    else:
        h0, c0 = dec_hidden[0][0], dec_hidden[1][0]

    def step(carry, x_t):
        h, c = carry
        gates = x_t @ w_ih.T + h @ w_hh.T + b_ih + b_hh
        i, f, g, o = jnp.split(gates, 4, axis=-1)
        i, f, o = jax.nn.sigmoid(i), jax.nn.sigmoid(f), jax.nn.sigmoid(o)
        g = jnp.tanh(g)
        c_new = f * c + i * g
        h_new = o * jnp.tanh(c_new)
        return (h_new, c_new), h_new

    (h_f, c_f), h_ts = jax.lax.scan(step, (h0, c0), x)
    scores = h_ts @ w_out.T + b_out
    return scores, (h_f[None], c_f[None])


if __name__ == "__main__":
    # Small deterministic configuration.
    L, B = 8, 4          # (length, batch)
    E = 32               # char_embedding_size
    H = 32               # hidden_size
    V = 30               # vocab_size (len(target_vocab.char2id)); pad id = 0

    key = jax.random.PRNGKey(0)
    keys = jax.random.split(key, 9)
    scale = 0.1
    emb = scale * jax.random.normal(keys[0], (V, E), jnp.float32)
    emb = emb.at[0].set(0.0)  # padding_idx row zeroed, as nn.Embedding does
    params = {
        "emb": emb,
        "w_ih": scale * jax.random.normal(keys[1], (4 * H, E), jnp.float32),
        "w_hh": scale * jax.random.normal(keys[2], (4 * H, H), jnp.float32),
        "b_ih": scale * jax.random.normal(keys[3], (4 * H,), jnp.float32),
        "b_hh": scale * jax.random.normal(keys[4], (4 * H,), jnp.float32),
        "w_out": scale * jax.random.normal(keys[5], (V, H), jnp.float32),
        "b_out": scale * jax.random.normal(keys[6], (V,), jnp.float32),
    }

    char_ids = jax.random.randint(keys[7], (L, B), 0, V, dtype=jnp.int32)
    h0 = scale * jax.random.normal(keys[8], (1, B, H), jnp.float32)
    c0 = jnp.zeros((1, B, H), jnp.float32)

    scores, (h_out, c_out) = char_decoder_forward(char_ids, params, (h0, c0))
    jax.block_until_ready((scores, h_out, c_out))

    # Verify against pure-JAX reference.
    scores_ref, (h_ref, c_ref) = _reference_forward(char_ids, params, (h0, c0))
    assert scores.shape == (L, B, V)
    assert h_out.shape == (1, B, H) and c_out.shape == (1, B, H)
    assert jnp.allclose(scores, scores_ref, atol=1e-4, rtol=1e-4)
    assert jnp.allclose(h_out, h_ref, atol=1e-4, rtol=1e-4)
    assert jnp.allclose(c_out, c_ref, atol=1e-4, rtol=1e-4)

    # NOTE: matmuls kept in f32 (tiny problem; keeps tolerance tight). Casting
    # operands to bf16 with f32 accumulation is a further optional step.
    # TODO(synk): decode_greedy's string detokenization loop is host-side Python
    # and has no Pallas equivalent; only forward() is implemented as a kernel.
    print("KERNEL_OK")
</pallas_src>

<mosaic_0001>
module attributes {stable_mosaic.version = 11 : i64} {
  func.func @_char_decoder_kernel(%arg0: memref<64x32xf32, #tpu.memory_space<vmem>>, %arg1: memref<8x128xf32, #tpu.memory_space<vmem>>, %arg2: memref<8x128xf32, #tpu.memory_space<vmem>>, %arg3: memref<32x512xf32, #tpu.memory_space<vmem>>, %arg4: memref<128x512xf32, #tpu.memory_space<vmem>>, %arg5: memref<1x512xf32, #tpu.memory_space<vmem>>, %arg6: memref<128x128xf32, #tpu.memory_space<vmem>>, %arg7: memref<1x128xf32, #tpu.memory_space<vmem>>, %arg8: memref<64x128xf32, #tpu.memory_space<vmem>>, %arg9: memref<8x128xf32, #tpu.memory_space<vmem>>, %arg10: memref<8x128xf32, #tpu.memory_space<vmem>>, %arg11: memref<64x512xf32, #tpu.memory_space<vmem>>, %arg12: memref<64x128xf32, #tpu.memory_space<vmem>>) attributes {dimension_semantics = [], scalar_prefetch = 0 : i64, scratch_operands = 2 : i64, tpu.core_type = #tpu.core_type<tc>} {
    %c0 = arith.constant 0 : index
    %c0_0 = arith.constant 0 : index
    %0 = vector.load %arg0[%c0, %c0_0] : memref<64x32xf32, #tpu.memory_space<vmem>>, vector<64x32xf32>
    %c0_1 = arith.constant 0 : index
    %c0_2 = arith.constant 0 : index
    %1 = vector.load %arg3[%c0_1, %c0_2] : memref<32x512xf32, #tpu.memory_space<vmem>>, vector<32x512xf32>
    %cst = arith.constant dense<0.000000e+00> : vector<64x512xf32>
    %2 = tpu.matmul %0, %1, %cst {dimension_numbers = #tpu.dot_dimension_numbers<[1], [0], [0], [1], [0, 0, 1, 1], [], []>} : vector<64x32xf32>, vector<32x512xf32>, vector<64x512xf32> -> vector<64x512xf32>
    %c0_3 = arith.constant 0 : index
    %c0_4 = arith.constant 0 : index
    %3 = vector.load %arg5[%c0_3, %c0_4] : memref<1x512xf32, #tpu.memory_space<vmem>>, vector<1x512xf32>
    %4 = vector.broadcast %3 : vector<1x512xf32> to vector<64x512xf32>
    %5 = arith.addf %2, %4 : vector<64x512xf32>
    %c0_5 = arith.constant 0 : index
    %c0_6 = arith.constant 0 : index
    %6 = vector.load %arg11[%c0_5, %c0_6] : memref<64x512xf32, #tpu.memory_space<vmem>>, vector<64x512xf32>
    tpu.vector_store %arg11[%c0_5, %c0_6], %5 {strides = array<i32>} : memref<64x512xf32, #tpu.memory_space<vmem>>, vector<64x512xf32>,
    %c0_7 = arith.constant 0 : index
    %c0_8 = arith.constant 0 : index
    %7 = vector.load %arg1[%c0_7, %c0_8] : memref<8x128xf32, #tpu.memory_space<vmem>>, vector<8x128xf32>
    %c0_9 = arith.constant 0 : index
    %c0_10 = arith.constant 0 : index
    %8 = vector.load %arg2[%c0_9, %c0_10] : memref<8x128xf32, #tpu.memory_space<vmem>>, vector<8x128xf32>
    %c0_i32 = arith.constant 0 : i32
    %c8_i32 = arith.constant 8 : i32
    %9 = arith.muli %c0_i32, %c8_i32 : i32
    %10 = tpu.assume_multiple %9, 8 : i32
    %11 = arith.index_cast %10 : i32 to index
    %c0_11 = arith.constant 0 : index
    %12 = vector.load %arg11[%11, %c0_11] : memref<64x512xf32, #tpu.memory_space<vmem>>, vector<8x512xf32>
    %c0_12 = arith.constant 0 : index
    %c0_13 = arith.constant 0 : index
    %13 = vector.load %arg4[%c0_12, %c0_13] : memref<128x512xf32, #tpu.memory_space<vmem>>, vector<128x512xf32>
    %cst_14 = arith.constant dense<0.000000e+00> : vector<8x512xf32>
    %14 = tpu.matmul %7, %13, %cst_14 {dimension_numbers = #tpu.dot_dimension_numbers<[1], [0], [0], [1], [0, 0, 1, 1], [], []>} : vector<8x128xf32>, vector<128x512xf32>, vector<8x512xf32> -> vector<8x512xf32>
    %15 = arith.addf %12, %14 : vector<8x512xf32>
    %16 = vector.extract_strided_slice %15 {offsets = [0, 0], sizes = [8, 128], strides = [1, 1]} : vector<8x512xf32> to vector<8x128xf32>
    %17 = arith.negf %16 : vector<8x128xf32>
    %18 = math.exp %17 : vector<8x128xf32>
    %cst_15 = arith.constant 1.000000e+00 : f32
    %19 = vector.broadcast %cst_15 : f32 to vector<8x128xf32>
    %20 = arith.addf %19, %18 : vector<8x128xf32>
    %21 = arith.divf %19, %20 : vector<8x128xf32>
    %22 = vector.extract_strided_slice %15 {offsets = [0, 128], sizes = [8, 128], strides = [1, 1]} : vector<8x512xf32> to vector<8x128xf32>
    %23 = arith.negf %22 : vector<8x128xf32>
    %24 = math.exp %23 : vector<8x128xf32>
    %cst_16 = arith.constant 1.000000e+00 : f32
    %25 = vector.broadcast %cst_16 : f32 to vector<8x128xf32>
    %26 = arith.addf %25, %24 : vector<8x128xf32>
    %27 = arith.divf %25, %26 : vector<8x128xf32>
    %28 = vector.extract_strided_slice %15 {offsets = [0, 256], sizes = [8, 128], strides = [1, 1]} : vector<8x512xf32> to vector<8x128xf32>
    %29 = math.tanh %28 : vector<8x128xf32>
    %30 = vector.extract_strided_slice %15 {offsets = [0, 384], sizes = [8, 128], strides = [1, 1]} : vector<8x512xf32> to vector<8x128xf32>
    %31 = arith.negf %30 : vector<8x128xf32>
    %32 = math.exp %31 : vector<8x128xf32>
    %cst_17 = arith.constant 1.000000e+00 : f32
    %33 = vector.broadcast %cst_17 : f32 to vector<8x128xf32>
    %34 = arith.addf %33, %32 : vector<8x128xf32>
    %35 = arith.divf %33, %34 : vector<8x128xf32>
    %36 = arith.mulf %27, %8 : vector<8x128xf32>
    %37 = arith.mulf %21, %29 : vector<8x128xf32>
    %38 = arith.addf %36, %37 : vector<8x128xf32>
    %39 = math.tanh %38 : vector<8x128xf32>
    %40 = arith.mulf %35, %39 : vector<8x128xf32>
    %41 = arith.index_cast %10 : i32 to index
    %c0_18 = arith.constant 0 : index
    %42 = vector.load %arg12[%41, %c0_18] : memref<64x128xf32, #tpu.memory_space<vmem>>, vector<8x128xf32>
    tpu.vector_store %arg12[%41, %c0_18], %40 {strides = array<i32>} : memref<64x128xf32, #tpu.memory_space<vmem>>, vector<8x128xf32>,
    %c1_i32 = arith.constant 1 : i32
    %c8_i32_19 = arith.constant 8 : i32
    %43 = arith.muli %c1_i32, %c8_i32_19 : i32
    %44 = tpu.assume_multiple %43, 8 : i32
    %45 = arith.index_cast %44 : i32 to index
    %c0_20 = arith.constant 0 : index
    %46 = vector.load %arg11[%45, %c0_20] : memref<64x512xf32, #tpu.memory_space<vmem>>, vector<8x512xf32>
    %c0_21 = arith.constant 0 : index
    %c0_22 = arith.constant 0 : index
    %47 = vector.load %arg4[%c0_21, %c0_22] : memref<128x512xf32, #tpu.memory_space<vmem>>, vector<128x512xf32>
    %cst_23 = arith.constant dense<0.000000e+00> : vector<8x512xf32>
    %48 = tpu.matmul %40, %47, %cst_23 {dimension_numbers = #tpu.dot_dimension_numbers<[1], [0], [0], [1], [0, 0, 1, 1], [], []>} : vector<8x128xf32>, vector<128x512xf32>, vector<8x512xf32> -> vector<8x512xf32>
    %49 = arith.addf %46, %48 : vector<8x512xf32>
    %50 = vector.extract_strided_slice %49 {offsets = [0, 0], sizes = [8, 128], strides = [1, 1]} : vector<8x512xf32> to vector<8x128xf32>
    %51 = arith.negf %50 : vector<8x128xf32>
    %52 = math.exp %51 : vector<8x128xf32>
    %cst_24 = arith.constant 1.000000e+00 : f32
    %53 = vector.broadcast %cst_24 : f32 to vector<8x128xf32>
    %54 = arith.addf %53, %52 : vector<8x128xf32>
    %55 = arith.divf %53, %54 : vector<8x128xf32>
    %56 = vector.extract_strided_slice %49 {offsets = [0, 128], sizes = [8, 128], strides = [1, 1]} : vector<8x512xf32> to vector<8x128xf32>
    %57 = arith.negf %56 : vector<8x128xf32>
    %58 = math.exp %57 : vector<8x128xf32>
    %cst_25 = arith.constant 1.000000e+00 : f32
    %59 = vector.broadcast %cst_25 : f32 to vector<8x128xf32>
    %60 = arith.addf %59, %58 : vector<8x128xf32>
    %61 = arith.divf %59, %60 : vector<8x128xf32>
    %62 = vector.extract_strided_slice %49 {offsets = [0, 256], sizes = [8, 128], strides = [1, 1]} : vector<8x512xf32> to vector<8x128xf32>
    %63 = math.tanh %62 : vector<8x128xf32>
    %64 = vector.extract_strided_slice %49 {offsets = [0, 384], sizes = [8, 128], strides = [1, 1]} : vector<8x512xf32> to vector<8x128xf32>
    %65 = arith.negf %64 : vector<8x128xf32>
    %66 = math.exp %65 : vector<8x128xf32>
    %cst_26 = arith.constant 1.000000e+00 : f32
    %67 = vector.broadcast %cst_26 : f32 to vector<8x128xf32>
    %68 = arith.addf %67, %66 : vector<8x128xf32>
    %69 = arith.divf %67, %68 : vector<8x128xf32>
    %70 = arith.mulf %61, %38 : vector<8x128xf32>
    %71 = arith.mulf %55, %63 : vector<8x128xf32>
    %72 = arith.addf %70, %71 : vector<8x128xf32>
    %73 = math.tanh %72 : vector<8x128xf32>
    %74 = arith.mulf %69, %73 : vector<8x128xf32>
    %75 = arith.index_cast %44 : i32 to index
    %c0_27 = arith.constant 0 : index
    %76 = vector.load %arg12[%75, %c0_27] : memref<64x128xf32, #tpu.memory_space<vmem>>, vector<8x128xf32>
    tpu.vector_store %arg12[%75, %c0_27], %74 {strides = array<i32>} : memref<64x128xf32, #tpu.memory_space<vmem>>, vector<8x128xf32>,
    %c2_i32 = arith.constant 2 : i32
    %c8_i32_28 = arith.constant 8 : i32
    %77 = arith.muli %c2_i32, %c8_i32_28 : i32
    %78 = tpu.assume_multiple %77, 8 : i32
    %79 = arith.index_cast %78 : i32 to index
    %c0_29 = arith.constant 0 : index
    %80 = vector.load %arg11[%79, %c0_29] : memref<64x512xf32, #tpu.memory_space<vmem>>, vector<8x512xf32>
    %c0_30 = arith.constant 0 : index
    %c0_31 = arith.constant 0 : index
    %81 = vector.load %arg4[%c0_30, %c0_31] : memref<128x512xf32, #tpu.memory_space<vmem>>, vector<128x512xf32>
    %cst_32 = arith.constant dense<0.000000e+00> : vector<8x512xf32>
    %82 = tpu.matmul %74, %81, %cst_32 {dimension_numbers = #tpu.dot_dimension_numbers<[1], [0], [0], [1], [0, 0, 1, 1], [], []>} : vector<8x128xf32>, vector<128x512xf32>, vector<8x512xf32> -> vector<8x512xf32>
    %83 = arith.addf %80, %82 : vector<8x512xf32>
    %84 = vector.extract_strided_slice %83 {offsets = [0, 0], sizes = [8, 128], strides = [1, 1]} : vector<8x512xf32> to vector<8x128xf32>
    %85 = arith.negf %84 : vector<8x128xf32>
    %86 = math.exp %85 : vector<8x128xf32>
    %cst_33 = arith.constant 1.000000e+00 : f32
    %87 = vector.broadcast %cst_33 : f32 to vector<8x128xf32>
    %88 = arith.addf %87, %86 : vector<8x128xf32>
    %89 = arith.divf %87, %88 : vector<8x128xf32>
    %90 = vector.extract_strided_slice %83 {offsets = [0, 128], sizes = [8, 128], strides = [1, 1]} : vector<8x512xf32> to vector<8x128xf32>
    %91 = arith.negf %90 : vector<8x128xf32>
    %92 = math.exp %91 : vector<8x128xf32>
    %cst_34 = arith.constant 1.000000e+00 : f32
    %93 = vector.broadcast %cst_34 : f32 to vector<8x128xf32>
    %94 = arith.addf %93, %92 : vector<8x128xf32>
    %95 = arith.divf %93, %94 : vector<8x128xf32>
    %96 = vector.extract_strided_slice %83 {offsets = [0, 256], sizes = [8, 128], strides = [1, 1]} : vector<8x512xf32> to vector<8x128xf32>
    %97 = math.tanh %96 : vector<8x128xf32>
    %98 = vector.extract_strided_slice %83 {offsets = [0, 384], sizes = [8, 128], strides = [1, 1]} : vector<8x512xf32> to vector<8x128xf32>
    %99 = arith.negf %98 : vector<8x128xf32>
    %100 = math.exp %99 : vector<8x128xf32>
    %cst_35 = arith.constant 1.000000e+00 : f32
    %101 = vector.broadcast %cst_35 : f32 to vector<8x128xf32>
    %102 = arith.addf %101, %100 : vector<8x128xf32>
    %103 = arith.divf %101, %102 : vector<8x128xf32>
    %104 = arith.mulf %95, %72 : vector<8x128xf32>
    %105 = arith.mulf %89, %97 : vector<8x128xf32>
    %106 = arith.addf %104, %105 : vector<8x128xf32>
    %107 = math.tanh %106 : vector<8x128xf32>
    %108 = arith.mulf %103, %107 : vector<8x128xf32>
    %109 = arith.index_cast %78 : i32 to index
    %c0_36 = arith.constant 0 : index
    %110 = vector.load %arg12[%109, %c0_36] : memref<64x128xf32, #tpu.memory_space<vmem>>, vector<8x128xf32>
    tpu.vector_store %arg12[%109, %c0_36], %108 {strides = array<i32>} : memref<64x128xf32, #tpu.memory_space<vmem>>, vector<8x128xf32>,
    %c3_i32 = arith.constant 3 : i32
    %c8_i32_37 = arith.constant 8 : i32
    %111 = arith.muli %c3_i32, %c8_i32_37 : i32
    %112 = tpu.assume_multiple %111, 8 : i32
    %113 = arith.index_cast %112 : i32 to index
    %c0_38 = arith.constant 0 : index
    %114 = vector.load %arg11[%113, %c0_38] : memref<64x512xf32, #tpu.memory_space<vmem>>, vector<8x512xf32>
    %c0_39 = arith.constant 0 : index
    %c0_40 = arith.constant 0 : index
    %115 = vector.load %arg4[%c0_39, %c0_40] : memref<128x512xf32, #tpu.memory_space<vmem>>, vector<128x512xf32>
    %cst_41 = arith.constant dense<0.000000e+00> : vector<8x512xf32>
    %116 = tpu.matmul %108, %115, %cst_41 {dimension_numbers = #tpu.dot_dimension_numbers<[1], [0], [0], [1], [0, 0, 1, 1], [], []>} : vector<8x128xf32>, vector<128x512xf32>, vector<8x512xf32> -> vector<8x512xf32>
    %117 = arith.addf %114, %116 : vector<8x512xf32>
    %118 = vector.extract_strided_slice %117 {offsets = [0, 0], sizes = [8, 128], strides = [1, 1]} : vector<8x512xf32> to vector<8x128xf32>
    %119 = arith.negf %118 : vector<8x128xf32>
    %120 = math.exp %119 : vector<8x128xf32>
    %cst_42 = arith.constant 1.000000e+00 : f32
    %121 = vector.broadcast %cst_42 : f32 to vector<8x128xf32>
    %122 = arith.addf %121, %120 : vector<8x128xf32>
    %123 = arith.divf %121, %122 : vector<8x128xf32>
    %124 = vector.extract_strided_slice %117 {offsets = [0, 128], sizes = [8, 128], strides = [1, 1]} : vector<8x512xf32> to vector<8x128xf32>
    %125 = arith.negf %124 : vector<8x128xf32>
    %126 = math.exp %125 : vector<8x128xf32>
    %cst_43 = arith.constant 1.000000e+00 : f32
    %127 = vector.broadcast %cst_43 : f32 to vector<8x128xf32>
    %128 = arith.addf %127, %126 : vector<8x128xf32>
    %129 = arith.divf %127, %128 : vector<8x128xf32>
    %130 = vector.extract_strided_slice %117 {offsets = [0, 256], sizes = [8, 128], strides = [1, 1]} : vector<8x512xf32> to vector<8x128xf32>
    %131 = math.tanh %130 : vector<8x128xf32>
    %132 = vector.extract_strided_slice %117 {offsets = [0, 384], sizes = [8, 128], strides = [1, 1]} : vector<8x512xf32> to vector<8x128xf32>
    %133 = arith.negf %132 : vector<8x128xf32>
    %134 = math.exp %133 : vector<8x128xf32>
    %cst_44 = arith.constant 1.000000e+00 : f32
    %135 = vector.broadcast %cst_44 : f32 to vector<8x128xf32>
    %136 = arith.addf %135, %134 : vector<8x128xf32>
    %137 = arith.divf %135, %136 : vector<8x128xf32>
    %138 = arith.mulf %129, %106 : vector<8x128xf32>
    %139 = arith.mulf %123, %131 : vector<8x128xf32>
    %140 = arith.addf %138, %139 : vector<8x128xf32>
    %141 = math.tanh %140 : vector<8x128xf32>
    %142 = arith.mulf %137, %141 : vector<8x128xf32>
    %143 = arith.index_cast %112 : i32 to index
    %c0_45 = arith.constant 0 : index
    %144 = vector.load %arg12[%143, %c0_45] : memref<64x128xf32, #tpu.memory_space<vmem>>, vector<8x128xf32>
    tpu.vector_store %arg12[%143, %c0_45], %142 {strides = array<i32>} : memref<64x128xf32, #tpu.memory_space<vmem>>, vector<8x128xf32>,
    %c4_i32 = arith.constant 4 : i32
    %c8_i32_46 = arith.constant 8 : i32
    %145 = arith.muli %c4_i32, %c8_i32_46 : i32
    %146 = tpu.assume_multiple %145, 8 : i32
    %147 = arith.index_cast %146 : i32 to index
    %c0_47 = arith.constant 0 : index
    %148 = vector.load %arg11[%147, %c0_47] : memref<64x512xf32, #tpu.memory_space<vmem>>, vector<8x512xf32>
    %c0_48 = arith.constant 0 : index
    %c0_49 = arith.constant 0 : index
    %149 = vector.load %arg4[%c0_48, %c0_49] : memref<128x512xf32, #tpu.memory_space<vmem>>, vector<128x512xf32>
    %cst_50 = arith.constant dense<0.000000e+00> : vector<8x512xf32>
    %150 = tpu.matmul %142, %149, %cst_50 {dimension_numbers = #tpu.dot_dimension_numbers<[1], [0], [0], [1], [0, 0, 1, 1], [], []>} : vector<8x128xf32>, vector<128x512xf32>, vector<8x512xf32> -> vector<8x512xf32>
    %151 = arith.addf %148, %150 : vector<8x512xf32>
    %152 = vector.extract_strided_slice %151 {offsets = [0, 0], sizes = [8, 128], strides = [1, 1]} : vector<8x512xf32> to vector<8x128xf32>
    %153 = arith.negf %152 : vector<8x128xf32>
    %154 = math.exp %153 : vector<8x128xf32>
    %cst_51 = arith.constant 1.000000e+00 : f32
    %155 = vector.broadcast %cst_51 : f32 to vector<8x128xf32>
    %156 = arith.addf %155, %154 : vector<8x128xf32>
    %157 = arith.divf %155, %156 : vector<8x128xf32>
    %158 = vector.extract_strided_slice %151 {offsets = [0, 128], sizes = [8, 128], strides = [1, 1]} : vector<8x512xf32> to vector<8x128xf32>
    %159 = arith.negf %158 : vector<8x128xf32>
    %160 = math.exp %159 : vector<8x128xf32>
    %cst_52 = arith.constant 1.000000e+00 : f32
    %161 = vector.broadcast %cst_52 : f32 to vector<8x128xf32>
    %162 = arith.addf %161, %160 : vector<8x128xf32>
    %163 = arith.divf %161, %162 : vector<8x128xf32>
    %164 = vector.extract_strided_slice %151 {offsets = [0, 256], sizes = [8, 128], strides = [1, 1]} : vector<8x512xf32> to vector<8x128xf32>
    %165 = math.tanh %164 : vector<8x128xf32>
    %166 = vector.extract_strided_slice %151 {offsets = [0, 384], sizes = [8, 128], strides = [1, 1]} : vector<8x512xf32> to vector<8x128xf32>
    %167 = arith.negf %166 : vector<8x128xf32>
    %168 = math.exp %167 : vector<8x128xf32>
    %cst_53 = arith.constant 1.000000e+00 : f32
    %169 = vector.broadcast %cst_53 : f32 to vector<8x128xf32>
    %170 = arith.addf %169, %168 : vector<8x128xf32>
    %171 = arith.divf %169, %170 : vector<8x128xf32>
    %172 = arith.mulf %163, %140 : vector<8x128xf32>
    %173 = arith.mulf %157, %165 : vector<8x128xf32>
    %174 = arith.addf %172, %173 : vector<8x128xf32>
    %175 = math.tanh %174 : vector<8x128xf32>
    %176 = arith.mulf %171, %175 : vector<8x128xf32>
    %177 = arith.index_cast %146 : i32 to index
    %c0_54 = arith.constant 0 : index
    %178 = vector.load %arg12[%177, %c0_54] : memref<64x128xf32, #tpu.memory_space<vmem>>, vector<8x128xf32>
    tpu.vector_store %arg12[%177, %c0_54], %176 {strides = array<i32>} : memref<64x128xf32, #tpu.memory_space<vmem>>, vector<8x128xf32>,
    %c5_i32 = arith.constant 5 : i32
    %c8_i32_55 = arith.constant 8 : i32
    %179 = arith.muli %c5_i32, %c8_i32_55 : i32
    %180 = tpu.assume_multiple %179, 8 : i32
    %181 = arith.index_cast %180 : i32 to index
    %c0_56 = arith.constant 0 : index
    %182 = vector.load %arg11[%181, %c0_56] : memref<64x512xf32, #tpu.memory_space<vmem>>, vector<8x512xf32>
    %c0_57 = arith.constant 0 : index
    %c0_58 = arith.constant 0 : index
    %183 = vector.load %arg4[%c0_57, %c0_58] : memref<128x512xf32, #tpu.memory_space<vmem>>, vector<128x512xf32>
    %cst_59 = arith.constant dense<0.000000e+00> : vector<8x512xf32>
    %184 = tpu.matmul %176, %183, %cst_59 {dimension_numbers = #tpu.dot_dimension_numbers<[1], [0], [0], [1], [0, 0, 1, 1], [], []>} : vector<8x128xf32>, vector<128x512xf32>, vector<8x512xf32> -> vector<8x512xf32>
    %185 = arith.addf %182, %184 : vector<8x512xf32>
    %186 = vector.extract_strided_slice %185 {offsets = [0, 0], sizes = [8, 128], strides = [1, 1]} : vector<8x512xf32> to vector<8x128xf32>
    %187 = arith.negf %186 : vector<8x128xf32>
    %188 = math.exp %187 : vector<8x128xf32>
    %cst_60 = arith.constant 1.000000e+00 : f32
    %189 = vector.broadcast %cst_60 : f32 to vector<8x128xf32>
    %190 = arith.addf %189, %188 : vector<8x128xf32>
    %191 = arith.divf %189, %190 : vector<8x128xf32>
    %192 = vector.extract_strided_slice %185 {offsets = [0, 128], sizes = [8, 128], strides = [1, 1]} : vector<8x512xf32> to vector<8x128xf32>
    %193 = arith.negf %192 : vector<8x128xf32>
    %194 = math.exp %193 : vector<8x128xf32>
    %cst_61 = arith.constant 1.000000e+00 : f32
    %195 = vector.broadcast %cst_61 : f32 to vector<8x128xf32>
    %196 = arith.addf %195, %194 : vector<8x128xf32>
    %197 = arith.divf %195, %196 : vector<8x128xf32>
    %198 = vector.extract_strided_slice %185 {offsets = [0, 256], sizes = [8, 128], strides = [1, 1]} : vector<8x512xf32> to vector<8x128xf32>
    %199 = math.tanh %198 : vector<8x128xf32>
    %200 = vector.extract_strided_slice %185 {offsets = [0, 384], sizes = [8, 128], strides = [1, 1]} : vector<8x512xf32> to vector<8x128xf32>
    %201 = arith.negf %200 : vector<8x128xf32>
    %202 = math.exp %201 : vector<8x128xf32>
    %cst_62 = arith.constant 1.000000e+00 : f32
    %203 = vector.broadcast %cst_62 : f32 to vector<8x128xf32>
    %204 = arith.addf %203, %202 : vector<8x128xf32>
    %205 = arith.divf %203, %204 : vector<8x128xf32>
    %206 = arith.mulf %197, %174 : vector<8x128xf32>
    %207 = arith.mulf %191, %199 : vector<8x128xf32>
    %208 = arith.addf %206, %207 : vector<8x128xf32>
    %209 = math.tanh %208 : vector<8x128xf32>
    %210 = arith.mulf %205, %209 : vector<8x128xf32>
    %211 = arith.index_cast %180 : i32 to index
    %c0_63 = arith.constant 0 : index
    %212 = vector.load %arg12[%211, %c0_63] : memref<64x128xf32, #tpu.memory_space<vmem>>, vector<8x128xf32>
    tpu.vector_store %arg12[%211, %c0_63], %210 {strides = array<i32>} : memref<64x128xf32, #tpu.memory_space<vmem>>, vector<8x128xf32>,
    %c6_i32 = arith.constant 6 : i32
    %c8_i32_64 = arith.constant 8 : i32
    %213 = arith.muli %c6_i32, %c8_i32_64 : i32
    %214 = tpu.assume_multiple %213, 8 : i32
    %215 = arith.index_cast %214 : i32 to index
    %c0_65 = arith.constant 0 : index
    %216 = vector.load %arg11[%215, %c0_65] : memref<64x512xf32, #tpu.memory_space<vmem>>, vector<8x512xf32>
    %c0_66 = arith.constant 0 : index
    %c0_67 = arith.constant 0 : index
    %217 = vector.load %arg4[%c0_66, %c0_67] : memref<128x512xf32, #tpu.memory_space<vmem>>, vector<128x512xf32>
    %cst_68 = arith.constant dense<0.000000e+00> : vector<8x512xf32>
    %218 = tpu.matmul %210, %217, %cst_68 {dimension_numbers = #tpu.dot_dimension_numbers<[1], [0], [0], [1], [0, 0, 1, 1], [], []>} : vector<8x128xf32>, vector<128x512xf32>, vector<8x512xf32> -> vector<8x512xf32>
    %219 = arith.addf %216, %218 : vector<8x512xf32>
    %220 = vector.extract_strided_slice %219 {offsets = [0, 0], sizes = [8, 128], strides = [1, 1]} : vector<8x512xf32> to vector<8x128xf32>
    %221 = arith.negf %220 : vector<8x128xf32>
    %222 = math.exp %221 : vector<8x128xf32>
    %cst_69 = arith.constant 1.000000e+00 : f32
    %223 = vector.broadcast %cst_69 : f32 to vector<8x128xf32>
    %224 = arith.addf %223, %222 : vector<8x128xf32>
    %225 = arith.divf %223, %224 : vector<8x128xf32>
    %226 = vector.extract_strided_slice %219 {offsets = [0, 128], sizes = [8, 128], strides = [1, 1]} : vector<8x512xf32> to vector<8x128xf32>
    %227 = arith.negf %226 : vector<8x128xf32>
    %228 = math.exp %227 : vector<8x128xf32>
    %cst_70 = arith.constant 1.000000e+00 : f32
    %229 = vector.broadcast %cst_70 : f32 to vector<8x128xf32>
    %230 = arith.addf %229, %228 : vector<8x128xf32>
    %231 = arith.divf %229, %230 : vector<8x128xf32>
    %232 = vector.extract_strided_slice %219 {offsets = [0, 256], sizes = [8, 128], strides = [1, 1]} : vector<8x512xf32> to vector<8x128xf32>
    %233 = math.tanh %232 : vector<8x128xf32>
    %234 = vector.extract_strided_slice %219 {offsets = [0, 384], sizes = [8, 128], strides = [1, 1]} : vector<8x512xf32> to vector<8x128xf32>
    %235 = arith.negf %234 : vector<8x128xf32>
    %236 = math.exp %235 : vector<8x128xf32>
    %cst_71 = arith.constant 1.000000e+00 : f32
    %237 = vector.broadcast %cst_71 : f32 to vector<8x128xf32>
    %238 = arith.addf %237, %236 : vector<8x128xf32>
    %239 = arith.divf %237, %238 : vector<8x128xf32>
    %240 = arith.mulf %231, %208 : vector<8x128xf32>
    %241 = arith.mulf %225, %233 : vector<8x128xf32>
    %242 = arith.addf %240, %241 : vector<8x128xf32>
    %243 = math.tanh %242 : vector<8x128xf32>
    %244 = arith.mulf %239, %243 : vector<8x128xf32>
    %245 = arith.index_cast %214 : i32 to index
    %c0_72 = arith.constant 0 : index
    %246 = vector.load %arg12[%245, %c0_72] : memref<64x128xf32, #tpu.memory_space<vmem>>, vector<8x128xf32>
    tpu.vector_store %arg12[%245, %c0_72], %244 {strides = array<i32>} : memref<64x128xf32, #tpu.memory_space<vmem>>, vector<8x128xf32>,
    %c7_i32 = arith.constant 7 : i32
    %c8_i32_73 = arith.constant 8 : i32
    %247 = arith.muli %c7_i32, %c8_i32_73 : i32
    %248 = tpu.assume_multiple %247, 8 : i32
    %249 = arith.index_cast %248 : i32 to index
    %c0_74 = arith.constant 0 : index
    %250 = vector.load %arg11[%249, %c0_74] : memref<64x512xf32, #tpu.memory_space<vmem>>, vector<8x512xf32>
    %c0_75 = arith.constant 0 : index
    %c0_76 = arith.constant 0 : index
    %251 = vector.load %arg4[%c0_75, %c0_76] : memref<128x512xf32, #tpu.memory_space<vmem>>, vector<128x512xf32>
    %cst_77 = arith.constant dense<0.000000e+00> : vector<8x512xf32>
    %252 = tpu.matmul %244, %251, %cst_77 {dimension_numbers = #tpu.dot_dimension_numbers<[1], [0], [0], [1], [0, 0, 1, 1], [], []>} : vector<8x128xf32>, vector<128x512xf32>, vector<8x512xf32> -> vector<8x512xf32>
    %253 = arith.addf %250, %252 : vector<8x512xf32>
    %254 = vector.extract_strided_slice %253 {offsets = [0, 0], sizes = [8, 128], strides = [1, 1]} : vector<8x512xf32> to vector<8x128xf32>
    %255 = arith.negf %254 : vector<8x128xf32>
    %256 = math.exp %255 : vector<8x128xf32>
    %cst_78 = arith.constant 1.000000e+00 : f32
    %257 = vector.broadcast %cst_78 : f32 to vector<8x128xf32>
    %258 = arith.addf %257, %256 : vector<8x128xf32>
    %259 = arith.divf %257, %258 : vector<8x128xf32>
    %260 = vector.extract_strided_slice %253 {offsets = [0, 128], sizes = [8, 128], strides = [1, 1]} : vector<8x512xf32> to vector<8x128xf32>
    %261 = arith.negf %260 : vector<8x128xf32>
    %262 = math.exp %261 : vector<8x128xf32>
    %cst_79 = arith.constant 1.000000e+00 : f32
    %263 = vector.broadcast %cst_79 : f32 to vector<8x128xf32>
    %264 = arith.addf %263, %262 : vector<8x128xf32>
    %265 = arith.divf %263, %264 : vector<8x128xf32>
    %266 = vector.extract_strided_slice %253 {offsets = [0, 256], sizes = [8, 128], strides = [1, 1]} : vector<8x512xf32> to vector<8x128xf32>
    %267 = math.tanh %266 : vector<8x128xf32>
    %268 = vector.extract_strided_slice %253 {offsets = [0, 384], sizes = [8, 128], strides = [1, 1]} : vector<8x512xf32> to vector<8x128xf32>
    %269 = arith.negf %268 : vector<8x128xf32>
    %270 = math.exp %269 : vector<8x128xf32>
    %cst_80 = arith.constant 1.000000e+00 : f32
    %271 = vector.broadcast %cst_80 : f32 to vector<8x128xf32>
    %272 = arith.addf %271, %270 : vector<8x128xf32>
    %273 = arith.divf %271, %272 : vector<8x128xf32>
    %274 = arith.mulf %265, %242 : vector<8x128xf32>
    %275 = arith.mulf %259, %267 : vector<8x128xf32>
    %276 = arith.addf %274, %275 : vector<8x128xf32>
    %277 = math.tanh %276 : vector<8x128xf32>
    %278 = arith.mulf %273, %277 : vector<8x128xf32>
    %279 = arith.index_cast %248 : i32 to index
    %c0_81 = arith.constant 0 : index
    %280 = vector.load %arg12[%279, %c0_81] : memref<64x128xf32, #tpu.memory_space<vmem>>, vector<8x128xf32>
    tpu.vector_store %arg12[%279, %c0_81], %278 {strides = array<i32>} : memref<64x128xf32, #tpu.memory_space<vmem>>, vector<8x128xf32>,
    %c8_i32_82 = arith.constant 8 : i32
    %c0_83 = arith.constant 0 : index
    %c0_84 = arith.constant 0 : index
    %281 = vector.load %arg9[%c0_83, %c0_84] : memref<8x128xf32, #tpu.memory_space<vmem>>, vector<8x128xf32>
    tpu.vector_store %arg9[%c0_83, %c0_84], %278 {strides = array<i32>} : memref<8x128xf32, #tpu.memory_space<vmem>>, vector<8x128xf32>,
    %c0_85 = arith.constant 0 : index
    %c0_86 = arith.constant 0 : index
    %282 = vector.load %arg10[%c0_85, %c0_86] : memref<8x128xf32, #tpu.memory_space<vmem>>, vector<8x128xf32>
    tpu.vector_store %arg10[%c0_85, %c0_86], %276 {strides = array<i32>} : memref<8x128xf32, #tpu.memory_space<vmem>>, vector<8x128xf32>,
    %c0_87 = arith.constant 0 : index
    %c0_88 = arith.constant 0 : index
    %283 = vector.load %arg12[%c0_87, %c0_88] : memref<64x128xf32, #tpu.memory_space<vmem>>, vector<64x128xf32>
    %c0_89 = arith.constant 0 : index
    %c0_90 = arith.constant 0 : index
    %284 = vector.load %arg6[%c0_89, %c0_90] : memref<128x128xf32, #tpu.memory_space<vmem>>, vector<128x128xf32>
    %cst_91 = arith.constant dense<0.000000e+00> : vector<64x128xf32>
    %285 = tpu.matmul %283, %284, %cst_91 {dimension_numbers = #tpu.dot_dimension_numbers<[1], [0], [0], [1], [0, 0, 1, 1], [], []>} : vector<64x128xf32>, vector<128x128xf32>, vector<64x128xf32> -> vector<64x128xf32>
    %c0_92 = arith.constant 0 : index
    %c0_93 = arith.constant 0 : index
    %286 = vector.load %arg7[%c0_92, %c0_93] : memref<1x128xf32, #tpu.memory_space<vmem>>, vector<1x128xf32>
    %287 = vector.broadcast %286 : vector<1x128xf32> to vector<64x128xf32>
    %288 = arith.addf %285, %287 : vector<64x128xf32>
    %c0_94 = arith.constant 0 : index
    %c0_95 = arith.constant 0 : index
    %289 = vector.load %arg8[%c0_94, %c0_95] : memref<64x128xf32, #tpu.memory_space<vmem>>, vector<64x128xf32>
    tpu.vector_store %arg8[%c0_94, %c0_95], %288 {strides = array<i32>} : memref<64x128xf32, #tpu.memory_space<vmem>>, vector<64x128xf32>,
    return
  }
}

</mosaic_0001>

<llo_original>
// kernel: tpu_custom_call.1
$region0: #{tpu_custom_call.1}
  #allocation0 [shape = 'u32[]', space=smem, size = 0x4, offset = 0x4, fixed_abs, tag = 'smem constant byte address 0x4 - core index']
  #allocation1 [shape = 'u32[144,128]{1,0:T(1,128)}', space=vmem, size = 0x12000, scoped, tag = 'internal scratch']
  #allocation2 [shape = 'f32[64,512]{1,0:T(8,128)}', space=vmem, size = 0x20000, scoped, tag = 'scratch operand']
  #allocation3 [shape = 'f32[64,128]{1,0:T(8,128)}', space=vmem, size = 0x8000, scoped, tag = 'scratch operand']
  %s0 = inlined_call_operand.vmem [shape: f32[64,32], index: 0, kind: input, shape index: {}]
  %s1 = inlined_call_operand.vmem [shape: f32[8,128], index: 1, kind: input, shape index: {}]
  %s2 = inlined_call_operand.vmem [shape: f32[8,128], index: 2, kind: input, shape index: {}]
  %s3 = inlined_call_operand.hbm [shape: f32[32,512], index: 3, kind: input, shape index: {}]
  %s4 = inlined_call_operand.hbm [shape: f32[128,512], index: 4, kind: input, shape index: {}]
  %s5 = inlined_call_operand.vmem [shape: f32[1,512], index: 5, kind: input, shape index: {}]
  %s6 = inlined_call_operand.hbm [shape: f32[128,128], index: 6, kind: input, shape index: {}]
  %s7 = inlined_call_operand.vmem [shape: f32[1,128], index: 7, kind: input, shape index: {}]
  %s8 = inlined_call_operand.hbm [shape: f32[64,128], index: 8, kind: output, shape index: {0}]
  %s9 = inlined_call_operand.hbm [shape: f32[8,128], index: 9, kind: output, shape index: {1}]
  %s10 = inlined_call_operand.hbm [shape: f32[8,128], index: 10, kind: output, shape index: {2}]
  %11 = xla_tuple %s8, %s9, %s10
  %s12 = sld [smem:[#allocation0]]
  $region70: #{tpu_custom_call.1} parent=0
    _
  %s14 = ssub.s32 1, %s12
  %s15 = scalar_select 0, %s14, %s12
  $region1: #{tpu_custom_call.1} parent=0
    #allocation4 [shape = 'u8[65536]{0}', space=vmem, size = 0x10000, scoped, tag = 'input window, operand 3, single buffered']
    #allocation5 [shape = 's32[1]{0}', space=sflag, size = 0x4, scoped, tag = 'scoped memory for tpu_custom_call.1']
    #allocation6 [shape = 's32[1]{0}', space=sflag, size = 0x4, scoped, tag = 'scoped memory for tpu_custom_call.1']
    #allocation7 [shape = 'u8[262144]{0}', space=vmem, size = 0x40000, scoped, tag = 'input window, operand 4, single buffered']
    #allocation8 [shape = 's32[1]{0}', space=sflag, size = 0x4, scoped, tag = 'scoped memory for tpu_custom_call.1']
    #allocation9 [shape = 'u8[65536]{0}', space=vmem, size = 0x10000, scoped, tag = 'input window, operand 6, single buffered']
    #allocation10 [shape = 'u8[32768]{0}', space=vmem, size = 0x8000, scoped, tag = 'output window, operand 0, single buffered']
    #allocation11 [shape = 'u8[4096]{0}', space=vmem, size = 0x1000, scoped, tag = 'output window, operand 1, single buffered']
    #allocation12 [shape = 's32[1]{0}', space=sflag, size = 0x4, scoped, tag = 'scoped memory for tpu_custom_call.1']
    #allocation13 [shape = 'u8[4096]{0}', space=vmem, size = 0x1000, scoped, tag = 'output window, operand 2, single buffered']
    %16 = vsyncpa [#allocation5], 0
    %17 = vsyncpa [#allocation8], 0
    %18 = vsyncpa [#allocation6], 0
    %19 = vsyncpa [#allocation12], 0
    // Predicated region
    $region2: #{tpu_custom_call.1} parent=1 // pred_check
      _
    $region3: #{tpu_custom_call.1} parent=1 // pred_check_branch
      %21 = sbr.rel (0) target = $region5
    $region4: #{tpu_custom_call.1} parent=1 // pred_region
      _
    $region5: #{tpu_custom_call.1} parent=1 // pred_fallthru
      _
    // Predicated region
    $region6: #{tpu_custom_call.1} parent=1 // pred_check
      _
    $region7: #{tpu_custom_call.1} parent=1 // pred_check_branch
      %23 = sbr.rel (0) target = $region9
    $region8: #{tpu_custom_call.1} parent=1 // pred_region
      _
    $region9: #{tpu_custom_call.1} parent=1 // pred_fallthru
      _
    // Predicated region
    $region10: #{tpu_custom_call.1} parent=1 // pred_check
      _
    $region11: #{tpu_custom_call.1} parent=1 // pred_check_branch
      %25 = sbr.rel (0) target = $region13
    $region12: #{tpu_custom_call.1} parent=1 // pred_region
      _
    $region13: #{tpu_custom_call.1} parent=1 // pred_fallthru
      _
    // Predicated region
    $region14: #{tpu_custom_call.1} parent=1 // pred_check
      _
    $region15: #{tpu_custom_call.1} parent=1 // pred_check_branch
      %27 = sbr.rel (0) target = $region17
    $region16: #{tpu_custom_call.1} parent=1 // pred_region
      %s29 = ssub.s32 2048, 2048
      %30 = vsyncadd [#allocation5], %s29
      %s31 = sshll.u32 [#allocation4], 4
      %s32 = int_to_ptr.vmem [resolvable:$true] %s31
      %37 = dma.hbm_to_vmem [thread:$0]  %s3, 2048, %s32, [#allocation5], 512, 512, 32
    $region17: #{tpu_custom_call.1} parent=1 // pred_fallthru
      _
    // Predicated region
    $region18: #{tpu_custom_call.1} parent=1 // pred_check
      _
    $region19: #{tpu_custom_call.1} parent=1 // pred_check_branch
      %39 = sbr.rel (0) target = $region21
    $region20: #{tpu_custom_call.1} parent=1 // pred_region
      %s41 = ssub.s32 8192, 8192
      %42 = vsyncadd [#allocation8], %s41
      %s43 = sshll.u32 [#allocation7], 4
      %s44 = int_to_ptr.vmem [resolvable:$true] %s43
      %49 = dma.hbm_to_vmem [thread:$0]  %s4, 8192, %s44, [#allocation8], 512, 512, 32
    $region21: #{tpu_custom_call.1} parent=1 // pred_fallthru
      _
    // Predicated region
    $region22: #{tpu_custom_call.1} parent=1 // pred_check
      _
    $region23: #{tpu_custom_call.1} parent=1 // pred_check_branch
      %51 = sbr.rel (0) target = $region25
    $region24: #{tpu_custom_call.1} parent=1 // pred_region
      _
    $region25: #{tpu_custom_call.1} parent=1 // pred_fallthru
      _
    // Predicated region
    $region26: #{tpu_custom_call.1} parent=1 // pred_check
      _
    $region27: #{tpu_custom_call.1} parent=1 // pred_check_branch
      %53 = sbr.rel (0) target = $region29
    $region28: #{tpu_custom_call.1} parent=1 // pred_region
      %s55 = ssub.s32 2048, 2048
      %56 = vsyncadd [#allocation8], %s55
      %s57 = sshll.u32 [#allocation9], 4
      %s58 = int_to_ptr.vmem [resolvable:$true] %s57
      %63 = dma.hbm_to_vmem [thread:$0]  %s6, 2048, %s58, [#allocation8], 128, 128, 8
    $region29: #{tpu_custom_call.1} parent=1 // pred_fallthru
      _
    // Predicated region
    $region30: #{tpu_custom_call.1} parent=1 // pred_check
      _
    $region31: #{tpu_custom_call.1} parent=1 // pred_check_branch
      %65 = sbr.rel (0) target = $region33
    $region32: #{tpu_custom_call.1} parent=1 // pred_region
      _
    $region33: #{tpu_custom_call.1} parent=1 // pred_fallthru
      _
    // Predicated region
    $region34: #{tpu_custom_call.1} parent=1 // pred_check
      _
    $region35: #{tpu_custom_call.1} parent=1 // pred_check_branch
      %67 = sbr.rel (0) target = $region37
    $region36: #{tpu_custom_call.1} parent=1 // pred_region
      %68 = dma.done [#allocation5], 2048
    $region37: #{tpu_custom_call.1} parent=1 // pred_fallthru
      _
    // Predicated region
    $region38: #{tpu_custom_call.1} parent=1 // pred_check
      _
    $region39: #{tpu_custom_call.1} parent=1 // pred_check_branch
      %70 = sbr.rel (0) target = $region41
    $region40: #{tpu_custom_call.1} parent=1 // pred_region
      %71 = dma.done [#allocation8], 8192
    $region41: #{tpu_custom_call.1} parent=1 // pred_fallthru
      _
    // Predicated region
    $region42: #{tpu_custom_call.1} parent=1 // pred_check
      _
    $region43: #{tpu_custom_call.1} parent=1 // pred_check_branch
      %73 = sbr.rel (0) target = $region45
    $region44: #{tpu_custom_call.1} parent=1 // pred_region
      %74 = dma.done [#allocation8], 2048
    $region45: #{tpu_custom_call.1} parent=1 // pred_fallthru
      _
    %v75 = vld [vmem:[%s0] sm:$0xff]
    %v76 = vld [vmem:[%s0 + $0x8] sm:$0xff]
    %v77 = vld [vmem:[%s0 + $0x10] sm:$0xff]
    %v78 = vld [vmem:[%s0 + $0x18] sm:$0xff]
    %v79 = vld [vmem:[%s0 + $0x20] sm:$0xff]
    %v80 = vld [vmem:[%s0 + $0x28] sm:$0xff]
    %v81 = vld [vmem:[%s0 + $0x30] sm:$0xff]
    %v82 = vld [vmem:[%s0 + $0x38] sm:$0xff]
    %v83 = vld [vmem:[#allocation4] sm:$0xff]
    %v84 = vld [vmem:[#allocation4 + $0x8] sm:$0xff]
    %v85 = vld [vmem:[#allocation4 + $0x10] sm:$0xff]
    %v86 = vld [vmem:[#allocation4 + $0x18] sm:$0xff]
    %v87 = vld [vmem:[#allocation4 + $0x20] sm:$0xff]
    %v88 = vld [vmem:[#allocation4 + $0x28] sm:$0xff]
    %v89 = vld [vmem:[#allocation4 + $0x30] sm:$0xff]
    %v90 = vld [vmem:[#allocation4 + $0x38] sm:$0xff]
    %v91 = vld [vmem:[#allocation4 + $0x40] sm:$0xff]
    %v92 = vld [vmem:[#allocation4 + $0x48] sm:$0xff]
    %v93 = vld [vmem:[#allocation4 + $0x50] sm:$0xff]
    %v94 = vld [vmem:[#allocation4 + $0x58] sm:$0xff]
    %v95 = vld [vmem:[#allocation4 + $0x60] sm:$0xff]
    %v96 = vld [vmem:[#allocation4 + $0x68] sm:$0xff]
    %v97 = vld [vmem:[#allocation4 + $0x70] sm:$0xff]
    %v98 = vld [vmem:[#allocation4 + $0x78] sm:$0xff]
    %v99 = vld [vmem:[%s5] sm:$0xf]
    %v101 = vlaneseq
    %v102 = vshrl.u32 %v101, 7
    %v103 = vsub.s32 0, %v102
    %v104 = vrot.slane %v99, %v103
    %v105 = vlaneseq
    %v106 = vshrl.u32 %v105, 7
    %v107 = vsub.s32 1, %v106
    %v108 = vrot.slane %v99, %v107
    %v109 = vlaneseq
    %v110 = vshrl.u32 %v109, 7
    %v111 = vsub.s32 2, %v110
    %v112 = vrot.slane %v99, %v111
    %v113 = vlaneseq
    %v114 = vshrl.u32 %v113, 7
    %v115 = vsub.s32 3, %v114
    %v116 = vrot.slane %v99, %v115
    %vm121 = vcmask 261120
    %v123 = vsel %vm121, %v75, 0
    %v126 = vsel %vm121, %v76, 0
    %v129 = vsel %vm121, %v77, 0
    %v132 = vsel %vm121, %v78, 0
    %v135 = vsel %vm121, %v79, 0
    %v138 = vsel %vm121, %v80, 0
    %v141 = vsel %vm121, %v81, 0
    %v144 = vsel %vm121, %v82, 0
    %146 = vmatprep.subr.mxu0 0.0
    %147 = vmatpush1.msra.mxu0 0.0
    %148 = vmatprep.subr.mxu0 0.0
    %149 = vmatpush1.msra.mxu0 0.0
    %150 = vmatprep.subr.mxu0 0.0
    %151 = vmatpush1.msra.mxu0 0.0
    %152 = vmatprep.subr.mxu0 0.0
    %153 = vmatpush1.msra.mxu0 0.0
    %154 = vmatprep.subr.mxu0 0.0
    %155 = vmatpush1.msra.mxu0 0.0
    %156 = vmatprep.subr.mxu0 0.0
    %157 = vmatpush1.msra.mxu0 0.0
    %158 = vmatprep.subr.mxu0 0.0
    %159 = vmatpush1.msra.mxu0 0.0
    %160 = vmatprep.subr.mxu0 0.0
    %161 = vmatpush1.msra.mxu0 0.0
    %162 = vmatprep.subr.mxu0 0.0
    %163 = vmatpush1.msra.mxu0 0.0
    %164 = vmatprep.subr.mxu0 0.0
    %165 = vmatpush1.msra.mxu0 0.0
    %166 = vmatprep.subr.mxu0 0.0
    %167 = vmatpush1.msra.mxu0 0.0
    %168 = vmatprep.subr.mxu0 0.0
    %169 = vmatpush1.msra.mxu0 0.0
    %170 = vmatprep.subr.mxu0 %v96
    %171 = vmatpush1.msra.mxu0 %v95
    %172 = vmatprep.subr.mxu0 %v92
    %173 = vmatpush1.msra.mxu0 %v91
    %174 = vmatprep.subr.mxu0 %v88
    %175 = vmatpush1.msra.mxu0 %v87
    %176 = vmatprep.subr.mxu0 %v84
    %177 = vmatpush1.msra.mxu0 %v83
    %178 = vmatprep.subr.mxu0 0.0
    %179 = vmatpush2.msra.mxu0 0.0
    %180 = vmatprep.subr.mxu0 0.0
    %181 = vmatpush2.msra.mxu0 0.0
    %182 = vmatprep.subr.mxu0 0.0
    %183 = vmatpush2.msra.mxu0 0.0
    %184 = vmatprep.subr.mxu0 0.0
    %185 = vmatpush2.msra.mxu0 0.0
    %186 = vmatprep.subr.mxu0 0.0
    %187 = vmatpush2.msra.mxu0 0.0
    %188 = vmatprep.subr.mxu0 0.0
    %189 = vmatpush2.msra.mxu0 0.0
    %190 = vmatprep.subr.mxu0 0.0
    %191 = vmatpush2.msra.mxu0 0.0
    %192 = vmatprep.subr.mxu0 0.0
    %193 = vmatpush2.msra.mxu0 0.0
    %194 = vmatprep.subr.mxu0 0.0
    %195 = vmatpush2.msra.mxu0 0.0
    %196 = vmatprep.subr.mxu0 0.0
    %197 = vmatpush2.msra.mxu0 0.0
    %198 = vmatprep.subr.mxu0 0.0
    %199 = vmatpush2.msra.mxu0 0.0
    %200 = vmatprep.subr.mxu0 0.0
    %201 = vmatpush2.msra.mxu0 0.0
    %202 = vmatprep.subr.mxu0 0.0
    %203 = vmatpush2.msra.mxu0 0.0
    %204 = vmatprep.subr.mxu0 0.0
    %205 = vmatpush2.msra.mxu0 0.0
    %206 = vmatprep.subr.mxu0 0.0
    %207 = vmatpush2.msra.mxu0 0.0
    %208 = vmatprep.subr.mxu0 0.0
    %209 = vmatpush2.msra.mxu0 0.0
    %210 = vmatprep.mubr.f32.mxu0 0.0
    %211 = vmatmul.mubr.f32.gmra.mxu0 %v123
    %v212 = vpop.f32.mrf.mxu0
    %v213 = vadd.f32 %v104, %v212
    %v214 = vpop.f32.mrf.mxu0
    %v215 = vadd.f32 %v108, %v214
    %216 = vmatprep.mubr.f32.mxu0 0.0
    %217 = vmatmul.mubr.f32.gmra.mxu0 %v126
    %v218 = vpop.f32.mrf.mxu0
    %v219 = vadd.f32 %v104, %v218
    %v220 = vpop.f32.mrf.mxu0
    %v221 = vadd.f32 %v108, %v220
    %222 = vmatprep.mubr.f32.mxu0 0.0
    %223 = vmatmul.mubr.f32.gmra.mxu0 %v129
    %v224 = vpop.f32.mrf.mxu0
    %v225 = vadd.f32 %v104, %v224
    %v226 = vpop.f32.mrf.mxu0
    %v227 = vadd.f32 %v108, %v226
    %228 = vmatprep.mubr.f32.mxu0 0.0
    %229 = vmatmul.mubr.f32.gmra.mxu0 %v132
    %v230 = vpop.f32.mrf.mxu0
    %v231 = vadd.f32 %v104, %v230
    %v232 = vpop.f32.mrf.mxu0
    %v233 = vadd.f32 %v108, %v232
    %234 = vmatprep.mubr.f32.mxu0 0.0
    %235 = vmatmul.mubr.f32.gmra.mxu0 %v135
    %v236 = vpop.f32.mrf.mxu0
    %v237 = vadd.f32 %v104, %v236
    %v238 = vpop.f32.mrf.mxu0
    %v239 = vadd.f32 %v108, %v238
    %240 = vmatprep.mubr.f32.mxu0 0.0
    %241 = vmatmul.mubr.f32.gmra.mxu0 %v138
    %v242 = vpop.f32.mrf.mxu0
    %v243 = vadd.f32 %v104, %v242
    %v244 = vpop.f32.mrf.mxu0
    %v245 = vadd.f32 %v108, %v244
    %246 = vmatprep.mubr.f32.mxu0 0.0
    %247 = vmatmul.mubr.f32.gmra.mxu0 %v141
    %v248 = vpop.f32.mrf.mxu0
    %v249 = vadd.f32 %v104, %v248
    %v250 = vpop.f32.mrf.mxu0
    %v251 = vadd.f32 %v108, %v250
    %252 = vmatprep.mubr.f32.mxu0 0.0
    %253 = vmatmul.mubr.f32.gmra.mxu0 %v144
    %v254 = vpop.f32.mrf.mxu0
    %v255 = vadd.f32 %v104, %v254
    %v256 = vpop.f32.mrf.mxu0
    %v257 = vadd.f32 %v108, %v256
    %258 = vdwg.mxu0
    %259 = vmatprep.subr.mxu0 0.0
    %260 = vmatpush1.msra.mxu0 0.0
    %261 = vmatprep.subr.mxu0 0.0
    %262 = vmatpush1.msra.mxu0 0.0
    %263 = vmatprep.subr.mxu0 0.0
    %264 = vmatpush1.msra.mxu0 0.0
    %265 = vmatprep.subr.mxu0 0.0
    %266 = vmatpush1.msra.mxu0 0.0
    %267 = vmatprep.subr.mxu0 0.0
    %268 = vmatpush1.msra.mxu0 0.0
    %269 = vmatprep.subr.mxu0 0.0
    %270 = vmatpush1.msra.mxu0 0.0
    %271 = vmatprep.subr.mxu0 0.0
    %272 = vmatpush1.msra.mxu0 0.0
    %273 = vmatprep.subr.mxu0 0.0
    %274 = vmatpush1.msra.mxu0 0.0
    %275 = vmatprep.subr.mxu0 0.0
    %276 = vmatpush1.msra.mxu0 0.0
    %277 = vmatprep.subr.mxu0 0.0
    %278 = vmatpush1.msra.mxu0 0.0
    %279 = vmatprep.subr.mxu0 0.0
    %280 = vmatpush1.msra.mxu0 0.0
    %281 = vmatprep.subr.mxu0 0.0
    %282 = vmatpush1.msra.mxu0 0.0
    %283 = vmatprep.subr.mxu0 %v98
    %284 = vmatpush1.msra.mxu0 %v97
    %285 = vmatprep.subr.mxu0 %v94
    %286 = vmatpush1.msra.mxu0 %v93
    %287 = vmatprep.subr.mxu0 %v90
    %288 = vmatpush1.msra.mxu0 %v89
    %289 = vmatprep.subr.mxu0 %v86
    %290 = vmatpush1.msra.mxu0 %v85
    %291 = vmatprep.subr.mxu0 0.0
    %292 = vmatpush2.msra.mxu0 0.0
    %293 = vmatprep.subr.mxu0 0.0
    %294 = vmatpush2.msra.mxu0 0.0
    %295 = vmatprep.subr.mxu0 0.0
    %296 = vmatpush2.msra.mxu0 0.0
    %297 = vmatprep.subr.mxu0 0.0
    %298 = vmatpush2.msra.mxu0 0.0
    %299 = vmatprep.subr.mxu0 0.0
    %300 = vmatpush2.msra.mxu0 0.0
    %301 = vmatprep.subr.mxu0 0.0
    %302 = vmatpush2.msra.mxu0 0.0
    %303 = vmatprep.subr.mxu0 0.0
    %304 = vmatpush2.msra.mxu0 0.0
    %305 = vmatprep.subr.mxu0 0.0
    %306 = vmatpush2.msra.mxu0 0.0
    %307 = vmatprep.subr.mxu0 0.0
    %308 = vmatpush2.msra.mxu0 0.0
    %309 = vmatprep.subr.mxu0 0.0
    %310 = vmatpush2.msra.mxu0 0.0
    %311 = vmatprep.subr.mxu0 0.0
    %312 = vmatpush2.msra.mxu0 0.0
    %313 = vmatprep.subr.mxu0 0.0
    %314 = vmatpush2.msra.mxu0 0.0
    %315 = vmatprep.subr.mxu0 0.0
    %316 = vmatpush2.msra.mxu0 0.0
    %317 = vmatprep.subr.mxu0 0.0
    %318 = vmatpush2.msra.mxu0 0.0
    %319 = vmatprep.subr.mxu0 0.0
    %320 = vmatpush2.msra.mxu0 0.0
    %321 = vmatprep.subr.mxu0 0.0
    %322 = vmatpush2.msra.mxu0 0.0
    %323 = vmatprep.mubr.f32.mxu0 0.0
    %324 = vmatmul.mubr.f32.gmra.mxu0 %v123
    %v325 = vpop.f32.mrf.mxu0
    %v326 = vadd.f32 %v112, %v325
    %v327 = vpop.f32.mrf.mxu0
    %v328 = vadd.f32 %v116, %v327
    %329 = vmatprep.mubr.f32.mxu0 0.0
    %330 = vmatmul.mubr.f32.gmra.mxu0 %v126
    %v331 = vpop.f32.mrf.mxu0
    %v332 = vadd.f32 %v112, %v331
    %v333 = vpop.f32.mrf.mxu0
    %v334 = vadd.f32 %v116, %v333
    %335 = vmatprep.mubr.f32.mxu0 0.0
    %336 = vmatmul.mubr.f32.gmra.mxu0 %v129
    %v337 = vpop.f32.mrf.mxu0
    %v338 = vadd.f32 %v112, %v337
    %v339 = vpop.f32.mrf.mxu0
    %v340 = vadd.f32 %v116, %v339
    %341 = vmatprep.mubr.f32.mxu0 0.0
    %342 = vmatmul.mubr.f32.gmra.mxu0 %v132
    %v343 = vpop.f32.mrf.mxu0
    %v344 = vadd.f32 %v112, %v343
    %v345 = vpop.f32.mrf.mxu0
    %v346 = vadd.f32 %v116, %v345
    %347 = vmatprep.mubr.f32.mxu0 0.0
    %348 = vmatmul.mubr.f32.gmra.mxu0 %v135
    %v349 = vpop.f32.mrf.mxu0
    %v350 = vadd.f32 %v112, %v349
    %v351 = vpop.f32.mrf.mxu0
    %v352 = vadd.f32 %v116, %v351
    %353 = vmatprep.mubr.f32.mxu0 0.0
    %354 = vmatmul.mubr.f32.gmra.mxu0 %v138
    %v355 = vpop.f32.mrf.mxu0
    %v356 = vadd.f32 %v112, %v355
    %v357 = vpop.f32.mrf.mxu0
    %v358 = vadd.f32 %v116, %v357
    %359 = vmatprep.mubr.f32.mxu0 0.0
    %360 = vmatmul.mubr.f32.gmra.mxu0 %v141
    %v361 = vpop.f32.mrf.mxu0
    %v362 = vadd.f32 %v112, %v361
    %v363 = vpop.f32.mrf.mxu0
    %v364 = vadd.f32 %v116, %v363
    %365 = vmatprep.mubr.f32.mxu0 0.0
    %366 = vmatmul.mubr.f32.gmra.mxu0 %v144
    %v367 = vpop.f32.mrf.mxu0
    %v368 = vadd.f32 %v112, %v367
    %v369 = vpop.f32.mrf.mxu0
    %v370 = vadd.f32 %v116, %v369
    %371 = vdwg.mxu0
    %372 = vst [vmem:[#allocation2] sm:$0xff] %v213
    %373 = vst [vmem:[#allocation2 + $0x8] sm:$0xff] %v215
    %374 = vst [vmem:[#allocation2 + $0x10] sm:$0xff] %v326
    %375 = vst [vmem:[#allocation2 + $0x18] sm:$0xff] %v328
    %376 = vst [vmem:[#allocation2 + $0x20] sm:$0xff] %v219
    %377 = vst [vmem:[#allocation2 + $0x28] sm:$0xff] %v221
    %378 = vst [vmem:[#allocation2 + $0x30] sm:$0xff] %v332
    %379 = vst [vmem:[#allocation2 + $0x38] sm:$0xff] %v334
    %380 = vst [vmem:[#allocation2 + $0x40] sm:$0xff] %v225
    %381 = vst [vmem:[#allocation2 + $0x48] sm:$0xff] %v227
    %382 = vst [vmem:[#allocation2 + $0x50] sm:$0xff] %v338
    %383 = vst [vmem:[#allocation2 + $0x58] sm:$0xff] %v340
    %384 = vst [vmem:[#allocation2 + $0x60] sm:$0xff] %v231
    %385 = vst [vmem:[#allocation2 + $0x68] sm:$0xff] %v233
    %386 = vst [vmem:[#allocation2 + $0x70] sm:$0xff] %v344
    %387 = vst [vmem:[#allocation2 + $0x78] sm:$0xff] %v346
    %388 = vst [vmem:[#allocation2 + $0x80] sm:$0xff] %v237
    %389 = vst [vmem:[#allocation2 + $0x88] sm:$0xff] %v239
    %390 = vst [vmem:[#allocation2 + $0x90] sm:$0xff] %v350
    %391 = vst [vmem:[#allocation2 + $0x98] sm:$0xff] %v352
    %392 = vst [vmem:[#allocation2 + $0xa0] sm:$0xff] %v243
    %393 = vst [vmem:[#allocation2 + $0xa8] sm:$0xff] %v245
    %394 = vst [vmem:[#allocation2 + $0xb0] sm:$0xff] %v356
    %395 = vst [vmem:[#allocation2 + $0xb8] sm:$0xff] %v358
    %396 = vst [vmem:[#allocation2 + $0xc0] sm:$0xff] %v249
    %397 = vst [vmem:[#allocation2 + $0xc8] sm:$0xff] %v251
    %398 = vst [vmem:[#allocation2 + $0xd0] sm:$0xff] %v362
    %399 = vst [vmem:[#allocation2 + $0xd8] sm:$0xff] %v364
    %400 = vst [vmem:[#allocation2 + $0xe0] sm:$0xff] %v255
    %401 = vst [vmem:[#allocation2 + $0xe8] sm:$0xff] %v257
    %402 = vst [vmem:[#allocation2 + $0xf0] sm:$0xff] %v368
    %403 = vst [vmem:[#allocation2 + $0xf8] sm:$0xff] %v370
    %v404 = vld [vmem:[%s1] sm:$0xff]
    %v405 = vld [vmem:[%s2] sm:$0xff]
    %s406 = smul.u32 0, 4
    %s407 = smul.addr %s406, 8
    %s408 = scalar_lea.vmem [#allocation2], %s407
    %v409 = vld [vmem:[%s408] sm:$0xff]
    %v410 = vld [vmem:[%s408 + $0x8] sm:$0xff]
    %v411 = vld [vmem:[%s408 + $0x10] sm:$0xff]
    %v412 = vld [vmem:[%s408 + $0x18] sm:$0xff]
    %v413 = vld [vmem:[#allocation7] sm:$0xff]
    %v414 = vld [vmem:[#allocation7 + $0x8] sm:$0xff]
    %v415 = vld [vmem:[#allocation7 + $0x10] sm:$0xff]
    %v416 = vld [vmem:[#allocation7 + $0x18] sm:$0xff]
    %v417 = vld [vmem:[#allocation7 + $0x20] sm:$0xff]
    %v418 = vld [vmem:[#allocation7 + $0x28] sm:$0xff]
    %v419 = vld [vmem:[#allocation7 + $0x30] sm:$0xff]
    %v420 = vld [vmem:[#allocation7 + $0x38] sm:$0xff]
    %v421 = vld [vmem:[#allocation7 + $0x40] sm:$0xff]
    %v422 = vld [vmem:[#allocation7 + $0x48] sm:$0xff]
    %v423 = vld [vmem:[#allocation7 + $0x50] sm:$0xff]
    %v424 = vld [vmem:[#allocation7 + $0x58] sm:$0xff]
    %v425 = vld [vmem:[#allocation7 + $0x60] sm:$0xff]
    %v426 = vld [vmem:[#allocation7 + $0x68] sm:$0xff]
    %v427 = vld [vmem:[#allocation7 + $0x70] sm:$0xff]
    %v428 = vld [vmem:[#allocation7 + $0x78] sm:$0xff]
    %v429 = vld [vmem:[#allocation7 + $0x80] sm:$0xff]
    %v430 = vld [vmem:[#allocation7 + $0x88] sm:$0xff]
    %v431 = vld [vmem:[#allocation7 + $0x90] sm:$0xff]
    %v432 = vld [vmem:[#allocation7 + $0x98] sm:$0xff]
    %v433 = vld [vmem:[#allocation7 + $0xa0] sm:$0xff]
    %v434 = vld [vmem:[#allocation7 + $0xa8] sm:$0xff]
    %v435 = vld [vmem:[#allocation7 + $0xb0] sm:$0xff]
    %v436 = vld [vmem:[#allocation7 + $0xb8] sm:$0xff]
    %v437 = vld [vmem:[#allocation7 + $0xc0] sm:$0xff]
    %v438 = vld [vmem:[#allocation7 + $0xc8] sm:$0xff]
    %v439 = vld [vmem:[#allocation7 + $0xd0] sm:$0xff]
    %v440 = vld [vmem:[#allocation7 + $0xd8] sm:$0xff]
    %v441 = vld [vmem:[#allocation7 + $0xe0] sm:$0xff]
    %v442 = vld [vmem:[#allocation7 + $0xe8] sm:$0xff]
    %v443 = vld [vmem:[#allocation7 + $0xf0] sm:$0xff]
    %v444 = vld [vmem:[#allocation7 + $0xf8] sm:$0xff]
    %v445 = vld [vmem:[#allocation7 + $0x100] sm:$0xff]
    %v446 = vld [vmem:[#allocation7 + $0x108] sm:$0xff]
    %v447 = vld [vmem:[#allocation7 + $0x110] sm:$0xff]
    %v448 = vld [vmem:[#allocation7 + $0x118] sm:$0xff]
    %v449 = vld [vmem:[#allocation7 + $0x120] sm:$0xff]
    %v450 = vld [vmem:[#allocation7 + $0x128] sm:$0xff]
    %v451 = vld [vmem:[#allocation7 + $0x130] sm:$0xff]
    %v452 = vld [vmem:[#allocation7 + $0x138] sm:$0xff]
    %v453 = vld [vmem:[#allocation7 + $0x140] sm:$0xff]
    %v454 = vld [vmem:[#allocation7 + $0x148] sm:$0xff]
    %v455 = vld [vmem:[#allocation7 + $0x150] sm:$0xff]
    %v456 = vld [vmem:[#allocation7 + $0x158] sm:$0xff]
    %v457 = vld [vmem:[#allocation7 + $0x160] sm:$0xff]
    %v458 = vld [vmem:[#allocation7 + $0x168] sm:$0xff]
    %v459 = vld [vmem:[#allocation7 + $0x170] sm:$0xff]
    %v460 = vld [vmem:[#allocation7 + $0x178] sm:$0xff]
    %v461 = vld [vmem:[#allocation7 + $0x180] sm:$0xff]
    %v462 = vld [vmem:[#allocation7 + $0x188] sm:$0xff]
    %v463 = vld [vmem:[#allocation7 + $0x190] sm:$0xff]
    %v464 = vld [vmem:[#allocation7 + $0x198] sm:$0xff]
    %v465 = vld [vmem:[#allocation7 + $0x1a0] sm:$0xff]
    %v466 = vld [vmem:[#allocation7 + $0x1a8] sm:$0xff]
    %v467 = vld [vmem:[#allocation7 + $0x1b0] sm:$0xff]
    %v468 = vld [vmem:[#allocation7 + $0x1b8] sm:$0xff]
    %v469 = vld [vmem:[#allocation7 + $0x1c0] sm:$0xff]
    %v470 = vld [vmem:[#allocation7 + $0x1c8] sm:$0xff]
    %v471 = vld [vmem:[#allocation7 + $0x1d0] sm:$0xff]
    %v472 = vld [vmem:[#allocation7 + $0x1d8] sm:$0xff]
    %v473 = vld [vmem:[#allocation7 + $0x1e0] sm:$0xff]
    %v474 = vld [vmem:[#allocation7 + $0x1e8] sm:$0xff]
    %v475 = vld [vmem:[#allocation7 + $0x1f0] sm:$0xff]
    %v476 = vld [vmem:[#allocation7 + $0x1f8] sm:$0xff]
    %477 = vmatprep.subr.mxu0 %v474
    %478 = vmatpush1.msra.mxu0 %v473
    %479 = vmatprep.subr.mxu0 %v470
    %480 = vmatpush1.msra.mxu0 %v469
    %481 = vmatprep.subr.mxu0 %v466
    %482 = vmatpush1.msra.mxu0 %v465
    %483 = vmatprep.subr.mxu0 %v462
    %484 = vmatpush1.msra.mxu0 %v461
    %485 = vmatprep.subr.mxu0 %v458
    %486 = vmatpush1.msra.mxu0 %v457
    %487 = vmatprep.subr.mxu0 %v454
    %488 = vmatpush1.msra.mxu0 %v453
    %489 = vmatprep.subr.mxu0 %v450
    %490 = vmatpush1.msra.mxu0 %v449
    %491 = vmatprep.subr.mxu0 %v446
    %492 = vmatpush1.msra.mxu0 %v445
    %493 = vmatprep.subr.mxu0 %v442
    %494 = vmatpush1.msra.mxu0 %v441
    %495 = vmatprep.subr.mxu0 %v438
    %496 = vmatpush1.msra.mxu0 %v437
    %497 = vmatprep.subr.mxu0 %v434
    %498 = vmatpush1.msra.mxu0 %v433
    %499 = vmatprep.subr.mxu0 %v430
    %500 = vmatpush1.msra.mxu0 %v429
    %501 = vmatprep.subr.mxu0 %v426
    %502 = vmatpush1.msra.mxu0 %v425
    %503 = vmatprep.subr.mxu0 %v422
    %504 = vmatpush1.msra.mxu0 %v421
    %505 = vmatprep.subr.mxu0 %v418
    %506 = vmatpush1.msra.mxu0 %v417
    %507 = vmatprep.subr.mxu0 %v414
    %508 = vmatpush1.msra.mxu0 %v413
    %509 = vmatprep.subr.mxu0 0.0
    %510 = vmatpush2.msra.mxu0 0.0
    %511 = vmatprep.subr.mxu0 0.0
    %512 = vmatpush2.msra.mxu0 0.0
    %513 = vmatprep.subr.mxu0 0.0
    %514 = vmatpush2.msra.mxu0 0.0
    %515 = vmatprep.subr.mxu0 0.0
    %516 = vmatpush2.msra.mxu0 0.0
    %517 = vmatprep.subr.mxu0 0.0
    %518 = vmatpush2.msra.mxu0 0.0
    %519 = vmatprep.subr.mxu0 0.0
    %520 = vmatpush2.msra.mxu0 0.0
    %521 = vmatprep.subr.mxu0 0.0
    %522 = vmatpush2.msra.mxu0 0.0
    %523 = vmatprep.subr.mxu0 0.0
    %524 = vmatpush2.msra.mxu0 0.0
    %525 = vmatprep.subr.mxu0 0.0
    %526 = vmatpush2.msra.mxu0 0.0
    %527 = vmatprep.subr.mxu0 0.0
    %528 = vmatpush2.msra.mxu0 0.0
    %529 = vmatprep.subr.mxu0 0.0
    %530 = vmatpush2.msra.mxu0 0.0
    %531 = vmatprep.subr.mxu0 0.0
    %532 = vmatpush2.msra.mxu0 0.0
    %533 = vmatprep.subr.mxu0 0.0
    %534 = vmatpush2.msra.mxu0 0.0
    %535 = vmatprep.subr.mxu0 0.0
    %536 = vmatpush2.msra.mxu0 0.0
    %537 = vmatprep.subr.mxu0 0.0
    %538 = vmatpush2.msra.mxu0 0.0
    %539 = vmatprep.subr.mxu0 0.0
    %540 = vmatpush2.msra.mxu0 0.0
    %541 = vmatprep.mubr.f32.mxu0 0.0
    %542 = vmatmul.mubr.f32.gmra.mxu0 %v404
    %v543 = vpop.f32.mrf.mxu0
    %v544 = vadd.f32 0.0, %v543
    %v545 = vpop.f32.mrf.mxu0
    %v546 = vadd.f32 0.0, %v545
    %547 = vdwg.mxu0
    %548 = vmatprep.subr.mxu0 %v476
    %549 = vmatpush1.msra.mxu0 %v475
    %550 = vmatprep.subr.mxu0 %v472
    %551 = vmatpush1.msra.mxu0 %v471
    %552 = vmatprep.subr.mxu0 %v468
    %553 = vmatpush1.msra.mxu0 %v467
    %554 = vmatprep.subr.mxu0 %v464
    %555 = vmatpush1.msra.mxu0 %v463
    %556 = vmatprep.subr.mxu0 %v460
    %557 = vmatpush1.msra.mxu0 %v459
    %558 = vmatprep.subr.mxu0 %v456
    %559 = vmatpush1.msra.mxu0 %v455
    %560 = vmatprep.subr.mxu0 %v452
    %561 = vmatpush1.msra.mxu0 %v451
    %562 = vmatprep.subr.mxu0 %v448
    %563 = vmatpush1.msra.mxu0 %v447
    %564 = vmatprep.subr.mxu0 %v444
    %565 = vmatpush1.msra.mxu0 %v443
    %566 = vmatprep.subr.mxu0 %v440
    %567 = vmatpush1.msra.mxu0 %v439
    %568 = vmatprep.subr.mxu0 %v436
    %569 = vmatpush1.msra.mxu0 %v435
    %570 = vmatprep.subr.mxu0 %v432
    %571 = vmatpush1.msra.mxu0 %v431
    %572 = vmatprep.subr.mxu0 %v428
    %573 = vmatpush1.msra.mxu0 %v427
    %574 = vmatprep.subr.mxu0 %v424
    %575 = vmatpush1.msra.mxu0 %v423
    %576 = vmatprep.subr.mxu0 %v420
    %577 = vmatpush1.msra.mxu0 %v419
    %578 = vmatprep.subr.mxu0 %v416
    %579 = vmatpush1.msra.mxu0 %v415
    %580 = vmatprep.subr.mxu0 0.0
    %581 = vmatpush2.msra.mxu0 0.0
    %582 = vmatprep.subr.mxu0 0.0
    %583 = vmatpush2.msra.mxu0 0.0
    %584 = vmatprep.subr.mxu0 0.0
    %585 = vmatpush2.msra.mxu0 0.0
    %586 = vmatprep.subr.mxu0 0.0
    %587 = vmatpush2.msra.mxu0 0.0
    %588 = vmatprep.subr.mxu0 0.0
    %589 = vmatpush2.msra.mxu0 0.0
    %590 = vmatprep.subr.mxu0 0.0
    %591 = vmatpush2.msra.mxu0 0.0
    %592 = vmatprep.subr.mxu0 0.0
    %593 = vmatpush2.msra.mxu0 0.0
    %594 = vmatprep.subr.mxu0 0.0
    %595 = vmatpush2.msra.mxu0 0.0
    %596 = vmatprep.subr.mxu0 0.0
    %597 = vmatpush2.msra.mxu0 0.0
    %598 = vmatprep.subr.mxu0 0.0
    %599 = vmatpush2.msra.mxu0 0.0
    %600 = vmatprep.subr.mxu0 0.0
    %601 = vmatpush2.msra.mxu0 0.0
    %602 = vmatprep.subr.mxu0 0.0
    %603 = vmatpush2.msra.mxu0 0.0
    %604 = vmatprep.subr.mxu0 0.0
    %605 = vmatpush2.msra.mxu0 0.0
    %606 = vmatprep.subr.mxu0 0.0
    %607 = vmatpush2.msra.mxu0 0.0
    %608 = vmatprep.subr.mxu0 0.0
    %609 = vmatpush2.msra.mxu0 0.0
    %610 = vmatprep.subr.mxu0 0.0
    %611 = vmatpush2.msra.mxu0 0.0
    %612 = vmatprep.mubr.f32.mxu0 0.0
    %613 = vmatmul.mubr.f32.gmra.mxu0 %v404
    %v614 = vpop.f32.mrf.mxu0
    %v615 = vadd.f32 0.0, %v614
    %v616 = vpop.f32.mrf.mxu0
    %v617 = vadd.f32 0.0, %v616
    %618 = vdwg.mxu0
    %v619 = vadd.f32 %v409, %v544
    %v620 = vadd.f32 %v410, %v546
    %v621 = vadd.f32 %v411, %v615
    %v622 = vadd.f32 %v412, %v617
    %v623 = vxor.u32 %v619, 2147483648
    %v624 = vmul.f32 %v623, 1.442695
    %v625 = vpow.pop %v624
    %v626 = vadd.f32 %v625, 1.0
    %v627 = vrcp.pop %v626
    %v628 = vmul.f32 1.0, %v627
    %v629 = vxor.u32 %v620, 2147483648
    %v630 = vmul.f32 %v629, 1.442695
    %v631 = vpow.pop %v630
    %v632 = vadd.f32 %v631, 1.0
    %v633 = vrcp.pop %v632
    %v634 = vmul.f32 1.0, %v633
    %v635 = vtanh.pop %v621
    %v636 = vxor.u32 %v622, 2147483648
    %v637 = vmul.f32 %v636, 1.442695
    %v638 = vpow.pop %v637
    %v639 = vadd.f32 %v638, 1.0
    %v640 = vrcp.pop %v639
    %v641 = vmul.f32 1.0, %v640
    %v642 = vmul.f32 %v634, %v405
    %v643 = vmul.f32 %v628, %v635
    %v644 = vadd.f32 %v642, %v643
    %v645 = vtanh.pop %v644
    %v646 = vmul.f32 %v641, %v645
    %647 = vst [vmem:[#allocation3] sm:$0xff] %v646
    %s648 = smul.u32 1, 4
    %s649 = smul.addr %s648, 8
    %s650 = scalar_lea.vmem [#allocation2], %s649
    %v651 = vld [vmem:[%s650] sm:$0xff]
    %v652 = vld [vmem:[%s650 + $0x8] sm:$0xff]
    %v653 = vld [vmem:[%s650 + $0x10] sm:$0xff]
    %v654 = vld [vmem:[%s650 + $0x18] sm:$0xff]
    %v655 = vld [vmem:[#allocation7] sm:$0xff]
    %v656 = vld [vmem:[#allocation7 + $0x8] sm:$0xff]
    %v657 = vld [vmem:[#allocation7 + $0x10] sm:$0xff]
    %v658 = vld [vmem:[#allocation7 + $0x18] sm:$0xff]
    %v659 = vld [vmem:[#allocation7 + $0x20] sm:$0xff]
    %v660 = vld [vmem:[#allocation7 + $0x28] sm:$0xff]
    %v661 = vld [vmem:[#allocation7 + $0x30] sm:$0xff]
    %v662 = vld [vmem:[#allocation7 + $0x38] sm:$0xff]
    %v663 = vld [vmem:[#allocation7 + $0x40] sm:$0xff]
    %v664 = vld [vmem:[#allocation7 + $0x48] sm:$0xff]
    %v665 = vld [vmem:[#allocation7 + $0x50] sm:$0xff]
    %v666 = vld [vmem:[#allocation7 + $0x58] sm:$0xff]
    %v667 = vld [vmem:[#allocation7 + $0x60] sm:$0xff]
    %v668 = vld [vmem:[#allocation7 + $0x68] sm:$0xff]
    %v669 = vld [vmem:[#allocation7 + $0x70] sm:$0xff]
    %v670 = vld [vmem:[#allocation7 + $0x78] sm:$0xff]
    %v671 = vld [vmem:[#allocation7 + $0x80] sm:$0xff]
    %v672 = vld [vmem:[#allocation7 + $0x88] sm:$0xff]
    %v673 = vld [vmem:[#allocation7 + $0x90] sm:$0xff]
    %v674 = vld [vmem:[#allocation7 + $0x98] sm:$0xff]
    %v675 = vld [vmem:[#allocation7 + $0xa0] sm:$0xff]
    %v676 = vld [vmem:[#allocation7 + $0xa8] sm:$0xff]
    %v677 = vld [vmem:[#allocation7 + $0xb0] sm:$0xff]
    %v678 = vld [vmem:[#allocation7 + $0xb8] sm:$0xff]
    %v679 = vld [vmem:[#allocation7 + $0xc0] sm:$0xff]
    %v680 = vld [vmem:[#allocation7 + $0xc8] sm:$0xff]
    %v681 = vld [vmem:[#allocation7 + $0xd0] sm:$0xff]
    %v682 = vld [vmem:[#allocation7 + $0xd8] sm:$0xff]
    %v683 = vld [vmem:[#allocation7 + $0xe0] sm:$0xff]
    %v684 = vld [vmem:[#allocation7 + $0xe8] sm:$0xff]
    %v685 = vld [vmem:[#allocation7 + $0xf0] sm:$0xff]
    %v686 = vld [vmem:[#allocation7 + $0xf8] sm:$0xff]
    %v687 = vld [vmem:[#allocation7 + $0x100] sm:$0xff]
    %v688 = vld [vmem:[#allocation7 + $0x108] sm:$0xff]
    %v689 = vld [vmem:[#allocation7 + $0x110] sm:$0xff]
    %v690 = vld [vmem:[#allocation7 + $0x118] sm:$0xff]
    %v691 = vld [vmem:[#allocation7 + $0x120] sm:$0xff]
    %v692 = vld [vmem:[#allocation7 + $0x128] sm:$0xff]
    %v693 = vld [vmem:[#allocation7 + $0x130] sm:$0xff]
    %v694 = vld [vmem:[#allocation7 + $0x138] sm:$0xff]
    %v695 = vld [vmem:[#allocation7 + $0x140] sm:$0xff]
    %v696 = vld [vmem:[#allocation7 + $0x148] sm:$0xff]
    %v697 = vld [vmem:[#allocation7 + $0x150] sm:$0xff]
    %v698 = vld [vmem:[#allocation7 + $0x158] sm:$0xff]
    %v699 = vld [vmem:[#allocation7 + $0x160] sm:$0xff]
    %v700 = vld [vmem:[#allocation7 + $0x168] sm:$0xff]
    %v701 = vld [vmem:[#allocation7 + $0x170] sm:$0xff]
    %v702 = vld [vmem:[#allocation7 + $0x178] sm:$0xff]
    %v703 = vld [vmem:[#allocation7 + $0x180] sm:$0xff]
    %v704 = vld [vmem:[#allocation7 + $0x188] sm:$0xff]
    %v705 = vld [vmem:[#allocation7 + $0x190] sm:$0xff]
    %v706 = vld [vmem:[#allocation7 + $0x198] sm:$0xff]
    %v707 = vld [vmem:[#allocation7 + $0x1a0] sm:$0xff]
    %v708 = vld [vmem:[#allocation7 + $0x1a8] sm:$0xff]
    %v709 = vld [vmem:[#allocation7 + $0x1b0] sm:$0xff]
    %v710 = vld [vmem:[#allocation7 + $0x1b8] sm:$0xff]
    %v711 = vld [vmem:[#allocation7 + $0x1c0] sm:$0xff]
    %v712 = vld [vmem:[#allocation7 + $0x1c8] sm:$0xff]
    %v713 = vld [vmem:[#allocation7 + $0x1d0] sm:$0xff]
    %v714 = vld [vmem:[#allocation7 + $0x1d8] sm:$0xff]
    %v715 = vld [vmem:[#allocation7 + $0x1e0] sm:$0xff]
    %v716 = vld [vmem:[#allocation7 + $0x1e8] sm:$0xff]
    %v717 = vld [vmem:[#allocation7 + $0x1f0] sm:$0xff]
    %v718 = vld [vmem:[#allocation7 + $0x1f8] sm:$0xff]
    %719 = vmatprep.subr.mxu0 %v716
    %720 = vmatpush1.msra.mxu0 %v715
    %721 = vmatprep.subr.mxu0 %v712
    %722 = vmatpush1.msra.mxu0 %v711
    %723 = vmatprep.subr.mxu0 %v708
    %724 = vmatpush1.msra.mxu0 %v707
    %725 = vmatprep.subr.mxu0 %v704
    %726 = vmatpush1.msra.mxu0 %v703
    %727 = vmatprep.subr.mxu0 %v700
    %728 = vmatpush1.msra.mxu0 %v699
    %729 = vmatprep.subr.mxu0 %v696
    %730 = vmatpush1.msra.mxu0 %v695
    %731 = vmatprep.subr.mxu0 %v692
    %732 = vmatpush1.msra.mxu0 %v691
    %733 = vmatprep.subr.mxu0 %v688
    %734 = vmatpush1.msra.mxu0 %v687
    %735 = vmatprep.subr.mxu0 %v684
    %736 = vmatpush1.msra.mxu0 %v683
    %737 = vmatprep.subr.mxu0 %v680
    %738 = vmatpush1.msra.mxu0 %v679
    %739 = vmatprep.subr.mxu0 %v676
    %740 = vmatpush1.msra.mxu0 %v675
    %741 = vmatprep.subr.mxu0 %v672
    %742 = vmatpush1.msra.mxu0 %v671
    %743 = vmatprep.subr.mxu0 %v668
    %744 = vmatpush1.msra.mxu0 %v667
    %745 = vmatprep.subr.mxu0 %v664
    %746 = vmatpush1.msra.mxu0 %v663
    %747 = vmatprep.subr.mxu0 %v660
    %748 = vmatpush1.msra.mxu0 %v659
    %749 = vmatprep.subr.mxu0 %v656
    %750 = vmatpush1.msra.mxu0 %v655
    %751 = vmatprep.subr.mxu0 0.0
    %752 = vmatpush2.msra.mxu0 0.0
    %753 = vmatprep.subr.mxu0 0.0
    %754 = vmatpush2.msra.mxu0 0.0
    %755 = vmatprep.subr.mxu0 0.0
    %756 = vmatpush2.msra.mxu0 0.0
    %757 = vmatprep.subr.mxu0 0.0
    %758 = vmatpush2.msra.mxu0 0.0
    %759 = vmatprep.subr.mxu0 0.0
    %760 = vmatpush2.msra.mxu0 0.0
    %761 = vmatprep.subr.mxu0 0.0
    %762 = vmatpush2.msra.mxu0 0.0
    %763 = vmatprep.subr.mxu0 0.0
    %764 = vmatpush2.msra.mxu0 0.0
    %765 = vmatprep.subr.mxu0 0.0
    %766 = vmatpush2.msra.mxu0 0.0
    %767 = vmatprep.subr.mxu0 0.0
    %768 = vmatpush2.msra.mxu0 0.0
    %769 = vmatprep.subr.mxu0 0.0
    %770 = vmatpush2.msra.mxu0 0.0
    %771 = vmatprep.subr.mxu0 0.0
    %772 = vmatpush2.msra.mxu0 0.0
    %773 = vmatprep.subr.mxu0 0.0
    %774 = vmatpush2.msra.mxu0 0.0
    %775 = vmatprep.subr.mxu0 0.0
    %776 = vmatpush2.msra.mxu0 0.0
    %777 = vmatprep.subr.mxu0 0.0
    %778 = vmatpush2.msra.mxu0 0.0
    %779 = vmatprep.subr.mxu0 0.0
    %780 = vmatpush2.msra.mxu0 0.0
    %781 = vmatprep.subr.mxu0 0.0
    %782 = vmatpush2.msra.mxu0 0.0
    %783 = vmatprep.mubr.f32.mxu0 0.0
    %784 = vmatmul.mubr.f32.gmra.mxu0 %v646
    %v785 = vpop.f32.mrf.mxu0
    %v786 = vadd.f32 0.0, %v785
    %v787 = vpop.f32.mrf.mxu0
    %v788 = vadd.f32 0.0, %v787
    %789 = vdwg.mxu0
    %790 = vmatprep.subr.mxu0 %v718
    %791 = vmatpush1.msra.mxu0 %v717
    %792 = vmatprep.subr.mxu0 %v714
    %793 = vmatpush1.msra.mxu0 %v713
    %794 = vmatprep.subr.mxu0 %v710
    %795 = vmatpush1.msra.mxu0 %v709
    %796 = vmatprep.subr.mxu0 %v706
    %797 = vmatpush1.msra.mxu0 %v705
    %798 = vmatprep.subr.mxu0 %v702
    %799 = vmatpush1.msra.mxu0 %v701
    %800 = vmatprep.subr.mxu0 %v698
    %801 = vmatpush1.msra.mxu0 %v697
    %802 = vmatprep.subr.mxu0 %v694
    %803 = vmatpush1.msra.mxu0 %v693
    %804 = vmatprep.subr.mxu0 %v690
    %805 = vmatpush1.msra.mxu0 %v689
    %806 = vmatprep.subr.mxu0 %v686
    %807 = vmatpush1.msra.mxu0 %v685
    %808 = vmatprep.subr.mxu0 %v682
    %809 = vmatpush1.msra.mxu0 %v681
    %810 = vmatprep.subr.mxu0 %v678
    %811 = vmatpush1.msra.mxu0 %v677
    %812 = vmatprep.subr.mxu0 %v674
    %813 = vmatpush1.msra.mxu0 %v673
    %814 = vmatprep.subr.mxu0 %v670
    %815 = vmatpush1.msra.mxu0 %v669
    %816 = vmatprep.subr.mxu0 %v666
    %817 = vmatpush1.msra.mxu0 %v665
    %818 = vmatprep.subr.mxu0 %v662
    %819 = vmatpush1.msra.mxu0 %v661
    %820 = vmatprep.subr.mxu0 %v658
    %821 = vmatpush1.msra.mxu0 %v657
    %822 = vmatprep.subr.mxu0 0.0
    %823 = vmatpush2.msra.mxu0 0.0
    %824 = vmatprep.subr.mxu0 0.0
    %825 = vmatpush2.msra.mxu0 0.0
    %826 = vmatprep.subr.mxu0 0.0
    %827 = vmatpush2.msra.mxu0 0.0
    %828 = vmatprep.subr.mxu0 0.0
    %829 = vmatpush2.msra.mxu0 0.0
    %830 = vmatprep.subr.mxu0 0.0
    %831 = vmatpush2.msra.mxu0 0.0
    %832 = vmatprep.subr.mxu0 0.0
    %833 = vmatpush2.msra.mxu0 0.0
    %834 = vmatprep.subr.mxu0 0.0
    %835 = vmatpush2.msra.mxu0 0.0
    %836 = vmatprep.subr.mxu0 0.0
    %837 = vmatpush2.msra.mxu0 0.0
    %838 = vmatprep.subr.mxu0 0.0
    %839 = vmatpush2.msra.mxu0 0.0
    %840 = vmatprep.subr.mxu0 0.0
    %841 = vmatpush2.msra.mxu0 0.0
    %842 = vmatprep.subr.mxu0 0.0
    %843 = vmatpush2.msra.mxu0 0.0
    %844 = vmatprep.subr.mxu0 0.0
    %845 = vmatpush2.msra.mxu0 0.0
    %846 = vmatprep.subr.mxu0 0.0
    %847 = vmatpush2.msra.mxu0 0.0
    %848 = vmatprep.subr.mxu0 0.0
    %849 = vmatpush2.msra.mxu0 0.0
    %850 = vmatprep.subr.mxu0 0.0
    %851 = vmatpush2.msra.mxu0 0.0
    %852 = vmatprep.subr.mxu0 0.0
    %853 = vmatpush2.msra.mxu0 0.0
    %854 = vmatprep.mubr.f32.mxu0 0.0
    %855 = vmatmul.mubr.f32.gmra.mxu0 %v646
    %v856 = vpop.f32.mrf.mxu0
    %v857 = vadd.f32 0.0, %v856
    %v858 = vpop.f32.mrf.mxu0
    %v859 = vadd.f32 0.0, %v858
    %860 = vdwg.mxu0
    %v861 = vadd.f32 %v651, %v786
    %v862 = vadd.f32 %v652, %v788
    %v863 = vadd.f32 %v653, %v857
    %v864 = vadd.f32 %v654, %v859
    %v865 = vxor.u32 %v861, 2147483648
    %v866 = vmul.f32 %v865, 1.442695
    %v867 = vpow.pop %v866
    %v868 = vadd.f32 %v867, 1.0
    %v869 = vrcp.pop %v868
    %v870 = vmul.f32 1.0, %v869
    %v871 = vxor.u32 %v862, 2147483648
    %v872 = vmul.f32 %v871, 1.442695
    %v873 = vpow.pop %v872
    %v874 = vadd.f32 %v873, 1.0
    %v875 = vrcp.pop %v874
    %v876 = vmul.f32 1.0, %v875
    %v877 = vtanh.pop %v863
    %v878 = vxor.u32 %v864, 2147483648
    %v879 = vmul.f32 %v878, 1.442695
    %v880 = vpow.pop %v879
    %v881 = vadd.f32 %v880, 1.0
    %v882 = vrcp.pop %v881
    %v883 = vmul.f32 1.0, %v882
    %v884 = vmul.f32 %v876, %v644
    %v885 = vmul.f32 %v870, %v877
    %v886 = vadd.f32 %v884, %v885
    %v887 = vtanh.pop %v886
    %v888 = vmul.f32 %v883, %v887
    %s889 = scalar_lea.vmem [#allocation3], 8
    %890 = vst [vmem:[%s889] sm:$0xff] %v888
    %s891 = smul.u32 2, 4
    %s892 = smul.addr %s891, 8
    %s893 = scalar_lea.vmem [#allocation2], %s892
    %v894 = vld [vmem:[%s893] sm:$0xff]
    %v895 = vld [vmem:[%s893 + $0x8] sm:$0xff]
    %v896 = vld [vmem:[%s893 + $0x10] sm:$0xff]
    %v897 = vld [vmem:[%s893 + $0x18] sm:$0xff]
    %v898 = vld [vmem:[#allocation7] sm:$0xff]
    %v899 = vld [vmem:[#allocation7 + $0x8] sm:$0xff]
    %v900 = vld [vmem:[#allocation7 + $0x10] sm:$0xff]
    %v901 = vld [vmem:[#allocation7 + $0x18] sm:$0xff]
    %v902 = vld [vmem:[#allocation7 + $0x20] sm:$0xff]
    %v903 = vld [vmem:[#allocation7 + $0x28] sm:$0xff]
    %v904 = vld [vmem:[#allocation7 + $0x30] sm:$0xff]
    %v905 = vld [vmem:[#allocation7 + $0x38] sm:$0xff]
    %v906 = vld [vmem:[#allocation7 + $0x40] sm:$0xff]
    %v907 = vld [vmem:[#allocation7 + $0x48] sm:$0xff]
    %v908 = vld [vmem:[#allocation7 + $0x50] sm:$0xff]
    %v909 = vld [vmem:[#allocation7 + $0x58] sm:$0xff]
    %v910 = vld [vmem:[#allocation7 + $0x60] sm:$0xff]
    %v911 = vld [vmem:[#allocation7 + $0x68] sm:$0xff]
    %v912 = vld [vmem:[#allocation7 + $0x70] sm:$0xff]
    %v913 = vld [vmem:[#allocation7 + $0x78] sm:$0xff]
    %v914 = vld [vmem:[#allocation7 + $0x80] sm:$0xff]
    %v915 = vld [vmem:[#allocation7 + $0x88] sm:$0xff]
    %v916 = vld [vmem:[#allocation7 + $0x90] sm:$0xff]
    %v917 = vld [vmem:[#allocation7 + $0x98] sm:$0xff]
    %v918 = vld [vmem:[#allocation7 + $0xa0] sm:$0xff]
    %v919 = vld [vmem:[#allocation7 + $0xa8] sm:$0xff]
    %v920 = vld [vmem:[#allocation7 + $0xb0] sm:$0xff]
    %v921 = vld [vmem:[#allocation7 + $0xb8] sm:$0xff]
    %v922 = vld [vmem:[#allocation7 + $0xc0] sm:$0xff]
    %v923 = vld [vmem:[#allocation7 + $0xc8] sm:$0xff]
    %v924 = vld [vmem:[#allocation7 + $0xd0] sm:$0xff]
    %v925 = vld [vmem:[#allocation7 + $0xd8] sm:$0xff]
    %v926 = vld [vmem:[#allocation7 + $0xe0] sm:$0xff]
    %v927 = vld [vmem:[#allocation7 + $0xe8] sm:$0xff]
    %v928 = vld [vmem:[#allocation7 + $0xf0] sm:$0xff]
    %v929 = vld [vmem:[#allocation7 + $0xf8] sm:$0xff]
    %v930 = vld [vmem:[#allocation7 + $0x100] sm:$0xff]
    %v931 = vld [vmem:[#allocation7 + $0x108] sm:$0xff]
    %v932 = vld [vmem:[#allocation7 + $0x110] sm:$0xff]
    %v933 = vld [vmem:[#allocation7 + $0x118] sm:$0xff]
    %v934 = vld [vmem:[#allocation7 + $0x120] sm:$0xff]
    %v935 = vld [vmem:[#allocation7 + $0x128] sm:$0xff]
    %v936 = vld [vmem:[#allocation7 + $0x130] sm:$0xff]
    %v937 = vld [vmem:[#allocation7 + $0x138] sm:$0xff]
    %v938 = vld [vmem:[#allocation7 + $0x140] sm:$0xff]
    %v939 = vld [vmem:[#allocation7 + $0x148] sm:$0xff]
    %v940 = vld [vmem:[#allocation7 + $0x150] sm:$0xff]
    %v941 = vld [vmem:[#allocation7 + $0x158] sm:$0xff]
    %v942 = vld [vmem:[#allocation7 + $0x160] sm:$0xff]
    %v943 = vld [vmem:[#allocation7 + $0x168] sm:$0xff]
    %v944 = vld [vmem:[#allocation7 + $0x170] sm:$0xff]
    %v945 = vld [vmem:[#allocation7 + $0x178] sm:$0xff]
    %v946 = vld [vmem:[#allocation7 + $0x180] sm:$0xff]
    %v947 = vld [vmem:[#allocation7 + $0x188] sm:$0xff]
    %v948 = vld [vmem:[#allocation7 + $0x190] sm:$0xff]
    %v949 = vld [vmem:[#allocation7 + $0x198] sm:$0xff]
    %v950 = vld [vmem:[#allocation7 + $0x1a0] sm:$0xff]
    %v951 = vld [vmem:[#allocation7 + $0x1a8] sm:$0xff]
    %v952 = vld [vmem:[#allocation7 + $0x1b0] sm:$0xff]
    %v953 = vld [vmem:[#allocation7 + $0x1b8] sm:$0xff]
    %v954 = vld [vmem:[#allocation7 + $0x1c0] sm:$0xff]
    %v955 = vld [vmem:[#allocation7 + $0x1c8] sm:$0xff]
    %v956 = vld [vmem:[#allocation7 + $0x1d0] sm:$0xff]
    %v957 = vld [vmem:[#allocation7 + $0x1d8] sm:$0xff]
    %v958 = vld [vmem:[#allocation7 + $0x1e0] sm:$0xff]
    %v959 = vld [vmem:[#allocation7 + $0x1e8] sm:$0xff]
    %v960 = vld [vmem:[#allocation7 + $0x1f0] sm:$0xff]
    %v961 = vld [vmem:[#allocation7 + $0x1f8] sm:$0xff]
    %962 = vmatprep.subr.mxu0 %v959
    %963 = vmatpush1.msra.mxu0 %v958
    %964 = vmatprep.subr.mxu0 %v955
    %965 = vmatpush1.msra.mxu0 %v954
    %966 = vmatprep.subr.mxu0 %v951
    %967 = vmatpush1.msra.mxu0 %v950
    %968 = vmatprep.subr.mxu0 %v947
    %969 = vmatpush1.msra.mxu0 %v946
    %970 = vmatprep.subr.mxu0 %v943
    %971 = vmatpush1.msra.mxu0 %v942
    %972 = vmatprep.subr.mxu0 %v939
    %973 = vmatpush1.msra.mxu0 %v938
    %974 = vmatprep.subr.mxu0 %v935
    %975 = vmatpush1.msra.mxu0 %v934
    %976 = vmatprep.subr.mxu0 %v931
    %977 = vmatpush1.msra.mxu0 %v930
    %978 = vmatprep.subr.mxu0 %v927
    %979 = vmatpush1.msra.mxu0 %v926
    %980 = vmatprep.subr.mxu0 %v923
    %981 = vmatpush1.msra.mxu0 %v922
    %982 = vmatprep.subr.mxu0 %v919
    %983 = vmatpush1.msra.mxu0 %v918
    %984 = vmatprep.subr.mxu0 %v915
    %985 = vmatpush1.msra.mxu0 %v914
    %986 = vmatprep.subr.mxu0 %v911
    %987 = vmatpush1.msra.mxu0 %v910
    %988 = vmatprep.subr.mxu0 %v907
    %989 = vmatpush1.msra.mxu0 %v906
    %990 = vmatprep.subr.mxu0 %v903
    %991 = vmatpush1.msra.mxu0 %v902
    %992 = vmatprep.subr.mxu0 %v899
    %993 = vmatpush1.msra.mxu0 %v898
    %994 = vmatprep.subr.mxu0 0.0
    %995 = vmatpush2.msra.mxu0 0.0
    %996 = vmatprep.subr.mxu0 0.0
    %997 = vmatpush2.msra.mxu0 0.0
    %998 = vmatprep.subr.mxu0 0.0
    %999 = vmatpush2.msra.mxu0 0.0
    %1000 = vmatprep.subr.mxu0 0.0
    %1001 = vmatpush2.msra.mxu0 0.0
    %1002 = vmatprep.subr.mxu0 0.0
    %1003 = vmatpush2.msra.mxu0 0.0
    %1004 = vmatprep.subr.mxu0 0.0
    %1005 = vmatpush2.msra.mxu0 0.0
    %1006 = vmatprep.subr.mxu0 0.0
    %1007 = vmatpush2.msra.mxu0 0.0
    %1008 = vmatprep.subr.mxu0 0.0
    %1009 = vmatpush2.msra.mxu0 0.0
    %1010 = vmatprep.subr.mxu0 0.0
    %1011 = vmatpush2.msra.mxu0 0.0
    %1012 = vmatprep.subr.mxu0 0.0
    %1013 = vmatpush2.msra.mxu0 0.0
    %1014 = vmatprep.subr.mxu0 0.0
    %1015 = vmatpush2.msra.mxu0 0.0
    %1016 = vmatprep.subr.mxu0 0.0
    %1017 = vmatpush2.msra.mxu0 0.0
    %1018 = vmatprep.subr.mxu0 0.0
    %1019 = vmatpush2.msra.mxu0 0.0
    %1020 = vmatprep.subr.mxu0 0.0
    %1021 = vmatpush2.msra.mxu0 0.0
    %1022 = vmatprep.subr.mxu0 0.0
    %1023 = vmatpush2.msra.mxu0 0.0
    %1024 = vmatprep.subr.mxu0 0.0
    %1025 = vmatpush2.msra.mxu0 0.0
    %1026 = vmatprep.mubr.f32.mxu0 0.0
    %1027 = vmatmul.mubr.f32.gmra.mxu0 %v888
    %v1028 = vpop.f32.mrf.mxu0
    %v1029 = vadd.f32 0.0, %v1028
    %v1030 = vpop.f32.mrf.mxu0
    %v1031 = vadd.f32 0.0, %v1030
    %1032 = vdwg.mxu0
    %1033 = vmatprep.subr.mxu0 %v961
    %1034 = vmatpush1.msra.mxu0 %v960
    %1035 = vmatprep.subr.mxu0 %v957
    %1036 = vmatpush1.msra.mxu0 %v956
    %1037 = vmatprep.subr.mxu0 %v953
    %1038 = vmatpush1.msra.mxu0 %v952
    %1039 = vmatprep.subr.mxu0 %v949
    %1040 = vmatpush1.msra.mxu0 %v948
    %1041 = vmatprep.subr.mxu0 %v945
    %1042 = vmatpush1.msra.mxu0 %v944
    %1043 = vmatprep.subr.mxu0 %v941
    %1044 = vmatpush1.msra.mxu0 %v940
    %1045 = vmatprep.subr.mxu0 %v937
    %1046 = vmatpush1.msra.mxu0 %v936
    %1047 = vmatprep.subr.mxu0 %v933
    %1048 = vmatpush1.msra.mxu0 %v932
    %1049 = vmatprep.subr.mxu0 %v929
    %1050 = vmatpush1.msra.mxu0 %v928
    %1051 = vmatprep.subr.mxu0 %v925
    %1052 = vmatpush1.msra.mxu0 %v924
    %1053 = vmatprep.subr.mxu0 %v921
    %1054 = vmatpush1.msra.mxu0 %v920
    %1055 = vmatprep.subr.mxu0 %v917
    %1056 = vmatpush1.msra.mxu0 %v916
    %1057 = vmatprep.subr.mxu0 %v913
    %1058 = vmatpush1.msra.mxu0 %v912
    %1059 = vmatprep.subr.mxu0 %v909
    %1060 = vmatpush1.msra.mxu0 %v908
    %1061 = vmatprep.subr.mxu0 %v905
    %1062 = vmatpush1.msra.mxu0 %v904
    %1063 = vmatprep.subr.mxu0 %v901
    %1064 = vmatpush1.msra.mxu0 %v900
    %1065 = vmatprep.subr.mxu0 0.0
    %1066 = vmatpush2.msra.mxu0 0.0
    %1067 = vmatprep.subr.mxu0 0.0
    %1068 = vmatpush2.msra.mxu0 0.0
    %1069 = vmatprep.subr.mxu0 0.0
    %1070 = vmatpush2.msra.mxu0 0.0
    %1071 = vmatprep.subr.mxu0 0.0
    %1072 = vmatpush2.msra.mxu0 0.0
    %1073 = vmatprep.subr.mxu0 0.0
    %1074 = vmatpush2.msra.mxu0 0.0
    %1075 = vmatprep.subr.mxu0 0.0
    %1076 = vmatpush2.msra.mxu0 0.0
    %1077 = vmatprep.subr.mxu0 0.0
    %1078 = vmatpush2.msra.mxu0 0.0
    %1079 = vmatprep.subr.mxu0 0.0
    %1080 = vmatpush2.msra.mxu0 0.0
    %1081 = vmatprep.subr.mxu0 0.0
    %1082 = vmatpush2.msra.mxu0 0.0
    %1083 = vmatprep.subr.mxu0 0.0
    %1084 = vmatpush2.msra.mxu0 0.0
    %1085 = vmatprep.subr.mxu0 0.0
    %1086 = vmatpush2.msra.mxu0 0.0
    %1087 = vmatprep.subr.mxu0 0.0
    %1088 = vmatpush2.msra.mxu0 0.0
    %1089 = vmatprep.subr.mxu0 0.0
    %1090 = vmatpush2.msra.mxu0 0.0
    %1091 = vmatprep.subr.mxu0 0.0
    %1092 = vmatpush2.msra.mxu0 0.0
    %1093 = vmatprep.subr.mxu0 0.0
    %1094 = vmatpush2.msra.mxu0 0.0
    %1095 = vmatprep.subr.mxu0 0.0
    %1096 = vmatpush2.msra.mxu0 0.0
    %1097 = vmatprep.mubr.f32.mxu0 0.0
    %1098 = vmatmul.mubr.f32.gmra.mxu0 %v888
    %v1099 = vpop.f32.mrf.mxu0
    %v1100 = vadd.f32 0.0, %v1099
    %v1101 = vpop.f32.mrf.mxu0
    %v1102 = vadd.f32 0.0, %v1101
    %1103 = vdwg.mxu0
    %v1104 = vadd.f32 %v894, %v1029
    %v1105 = vadd.f32 %v895, %v1031
    %v1106 = vadd.f32 %v896, %v1100
    %v1107 = vadd.f32 %v897, %v1102
    %v1108 = vxor.u32 %v1104, 2147483648
    %v1109 = vmul.f32 %v1108, 1.442695
    %v1110 = vpow.pop %v1109
    %v1111 = vadd.f32 %v1110, 1.0
    %v1112 = vrcp.pop %v1111
    %v1113 = vmul.f32 1.0, %v1112
    %v1114 = vxor.u32 %v1105, 2147483648
    %v1115 = vmul.f32 %v1114, 1.442695
    %v1116 = vpow.pop %v1115
    %v1117 = vadd.f32 %v1116, 1.0
    %v1118 = vrcp.pop %v1117
    %v1119 = vmul.f32 1.0, %v1118
    %v1120 = vtanh.pop %v1106
    %v1121 = vxor.u32 %v1107, 2147483648
    %v1122 = vmul.f32 %v1121, 1.442695
    %v1123 = vpow.pop %v1122
    %v1124 = vadd.f32 %v1123, 1.0
    %v1125 = vrcp.pop %v1124
    %v1126 = vmul.f32 1.0, %v1125
    %v1127 = vmul.f32 %v1119, %v886
    %v1128 = vmul.f32 %v1113, %v1120
    %v1129 = vadd.f32 %v1127, %v1128
    %v1130 = vtanh.pop %v1129
    %v1131 = vmul.f32 %v1126, %v1130
    %s1132 = scalar_lea.vmem [#allocation3], 16
    %1133 = vst [vmem:[%s1132] sm:$0xff] %v1131
    %s1134 = smul.u32 3, 4
    %s1135 = smul.addr %s1134, 8
    %s1136 = scalar_lea.vmem [#allocation2], %s1135
    %v1137 = vld [vmem:[%s1136] sm:$0xff]
    %v1138 = vld [vmem:[%s1136 + $0x8] sm:$0xff]
    %v1139 = vld [vmem:[%s1136 + $0x10] sm:$0xff]
    %v1140 = vld [vmem:[%s1136 + $0x18] sm:$0xff]
    %v1141 = vld [vmem:[#allocation7] sm:$0xff]
    %v1142 = vld [vmem:[#allocation7 + $0x8] sm:$0xff]
    %v1143 = vld [vmem:[#allocation7 + $0x10] sm:$0xff]
    %v1144 = vld [vmem:[#allocation7 + $0x18] sm:$0xff]
    %v1145 = vld [vmem:[#allocation7 + $0x20] sm:$0xff]
    %v1146 = vld [vmem:[#allocation7 + $0x28] sm:$0xff]
    %v1147 = vld [vmem:[#allocation7 + $0x30] sm:$0xff]
    %v1148 = vld [vmem:[#allocation7 + $0x38] sm:$0xff]
    %v1149 = vld [vmem:[#allocation7 + $0x40] sm:$0xff]
    %v1150 = vld [vmem:[#allocation7 + $0x48] sm:$0xff]
    %v1151 = vld [vmem:[#allocation7 + $0x50] sm:$0xff]
    %v1152 = vld [vmem:[#allocation7 + $0x58] sm:$0xff]
    %v1153 = vld [vmem:[#allocation7 + $0x60] sm:$0xff]
    %v1154 = vld [vmem:[#allocation7 + $0x68] sm:$0xff]
    %v1155 = vld [vmem:[#allocation7 + $0x70] sm:$0xff]
    %v1156 = vld [vmem:[#allocation7 + $0x78] sm:$0xff]
    %v1157 = vld [vmem:[#allocation7 + $0x80] sm:$0xff]
    %v1158 = vld [vmem:[#allocation7 + $0x88] sm:$0xff]
    %v1159 = vld [vmem:[#allocation7 + $0x90] sm:$0xff]
    %v1160 = vld [vmem:[#allocation7 + $0x98] sm:$0xff]
    %v1161 = vld [vmem:[#allocation7 + $0xa0] sm:$0xff]
    %v1162 = vld [vmem:[#allocation7 + $0xa8] sm:$0xff]
    %v1163 = vld [vmem:[#allocation7 + $0xb0] sm:$0xff]
    %v1164 = vld [vmem:[#allocation7 + $0xb8] sm:$0xff]
    %v1165 = vld [vmem:[#allocation7 + $0xc0] sm:$0xff]
    %v1166 = vld [vmem:[#allocation7 + $0xc8] sm:$0xff]
    %v1167 = vld [vmem:[#allocation7 + $0xd0] sm:$0xff]
    %v1168 = vld [vmem:[#allocation7 + $0xd8] sm:$0xff]
    %v1169 = vld [vmem:[#allocation7 + $0xe0] sm:$0xff]
    %v1170 = vld [vmem:[#allocation7 + $0xe8] sm:$0xff]
    %v1171 = vld [vmem:[#allocation7 + $0xf0] sm:$0xff]
    %v1172 = vld [vmem:[#allocation7 + $0xf8] sm:$0xff]
    %v1173 = vld [vmem:[#allocation7 + $0x100] sm:$0xff]
    %v1174 = vld [vmem:[#allocation7 + $0x108] sm:$0xff]
    %v1175 = vld [vmem:[#allocation7 + $0x110] sm:$0xff]
    %v1176 = vld [vmem:[#allocation7 + $0x118] sm:$0xff]
    %v1177 = vld [vmem:[#allocation7 + $0x120] sm:$0xff]
    %v1178 = vld [vmem:[#allocation7 + $0x128] sm:$0xff]
    %v1179 = vld [vmem:[#allocation7 + $0x130] sm:$0xff]
    %v1180 = vld [vmem:[#allocation7 + $0x138] sm:$0xff]
    %v1181 = vld [vmem:[#allocation7 + $0x140] sm:$0xff]
    %v1182 = vld [vmem:[#allocation7 + $0x148] sm:$0xff]
    %v1183 = vld [vmem:[#allocation7 + $0x150] sm:$0xff]
    %v1184 = vld [vmem:[#allocation7 + $0x158] sm:$0xff]
    %v1185 = vld [vmem:[#allocation7 + $0x160] sm:$0xff]
    %v1186 = vld [vmem:[#allocation7 + $0x168] sm:$0xff]
    %v1187 = vld [vmem:[#allocation7 + $0x170] sm:$0xff]
    %v1188 = vld [vmem:[#allocation7 + $0x178] sm:$0xff]
    %v1189 = vld [vmem:[#allocation7 + $0x180] sm:$0xff]
    %v1190 = vld [vmem:[#allocation7 + $0x188] sm:$0xff]
    %v1191 = vld [vmem:[#allocation7 + $0x190] sm:$0xff]
    %v1192 = vld [vmem:[#allocation7 + $0x198] sm:$0xff]
    %v1193 = vld [vmem:[#allocation7 + $0x1a0] sm:$0xff]
    %v1194 = vld [vmem:[#allocation7 + $0x1a8] sm:$0xff]
    %v1195 = vld [vmem:[#allocation7 + $0x1b0] sm:$0xff]
    %v1196 = vld [vmem:[#allocation7 + $0x1b8] sm:$0xff]
    %v1197 = vld [vmem:[#allocation7 + $0x1c0] sm:$0xff]
    %v1198 = vld [vmem:[#allocation7 + $0x1c8] sm:$0xff]
    %v1199 = vld [vmem:[#allocation7 + $0x1d0] sm:$0xff]
    %v1200 = vld [vmem:[#allocation7 + $0x1d8] sm:$0xff]
    %v1201 = vld [vmem:[#allocation7 + $0x1e0] sm:$0xff]
    %v1202 = vld [vmem:[#allocation7 + $0x1e8] sm:$0xff]
    %v1203 = vld [vmem:[#allocation7 + $0x1f0] sm:$0xff]
    %v1204 = vld [vmem:[#allocation7 + $0x1f8] sm:$0xff]
    %1205 = vmatprep.subr.mxu0 %v1202
    %1206 = vmatpush1.msra.mxu0 %v1201
    %1207 = vmatprep.subr.mxu0 %v1198
    %1208 = vmatpush1.msra.mxu0 %v1197
    %1209 = vmatprep.subr.mxu0 %v1194
    %1210 = vmatpush1.msra.mxu0 %v1193
    %1211 = vmatprep.subr.mxu0 %v1190
    %1212 = vmatpush1.msra.mxu0 %v1189
    %1213 = vmatprep.subr.mxu0 %v1186
    %1214 = vmatpush1.msra.mxu0 %v1185
    %1215 = vmatprep.subr.mxu0 %v1182
    %1216 = vmatpush1.msra.mxu0 %v1181
    %1217 = vmatprep.subr.mxu0 %v1178
    %1218 = vmatpush1.msra.mxu0 %v1177
    %1219 = vmatprep.subr.mxu0 %v1174
    %1220 = vmatpush1.msra.mxu0 %v1173
    %1221 = vmatprep.subr.mxu0 %v1170
    %1222 = vmatpush1.msra.mxu0 %v1169
    %1223 = vmatprep.subr.mxu0 %v1166
    %1224 = vmatpush1.msra.mxu0 %v1165
    %1225 = vmatprep.subr.mxu0 %v1162
    %1226 = vmatpush1.msra.mxu0 %v1161
    %1227 = vmatprep.subr.mxu0 %v1158
    %1228 = vmatpush1.msra.mxu0 %v1157
    %1229 = vmatprep.subr.mxu0 %v1154
    %1230 = vmatpush1.msra.mxu0 %v1153
    %1231 = vmatprep.subr.mxu0 %v1150
    %1232 = vmatpush1.msra.mxu0 %v1149
    %1233 = vmatprep.subr.mxu0 %v1146
    %1234 = vmatpush1.msra.mxu0 %v1145
    %1235 = vmatprep.subr.mxu0 %v1142
    %1236 = vmatpush1.msra.mxu0 %v1141
    %1237 = vmatprep.subr.mxu0 0.0
    %1238 = vmatpush2.msra.mxu0 0.0
    %1239 = vmatprep.subr.mxu0 0.0
    %1240 = vmatpush2.msra.mxu0 0.0
    %1241 = vmatprep.subr.mxu0 0.0
    %1242 = vmatpush2.msra.mxu0 0.0
    %1243 = vmatprep.subr.mxu0 0.0
    %1244 = vmatpush2.msra.mxu0 0.0
    %1245 = vmatprep.subr.mxu0 0.0
    %1246 = vmatpush2.msra.mxu0 0.0
    %1247 = vmatprep.subr.mxu0 0.0
    %1248 = vmatpush2.msra.mxu0 0.0
    %1249 = vmatprep.subr.mxu0 0.0
    %1250 = vmatpush2.msra.mxu0 0.0
    %1251 = vmatprep.subr.mxu0 0.0
    %1252 = vmatpush2.msra.mxu0 0.0
    %1253 = vmatprep.subr.mxu0 0.0
    %1254 = vmatpush2.msra.mxu0 0.0
    %1255 = vmatprep.subr.mxu0 0.0
    %1256 = vmatpush2.msra.mxu0 0.0
    %1257 = vmatprep.subr.mxu0 0.0
    %1258 = vmatpush2.msra.mxu0 0.0
    %1259 = vmatprep.subr.mxu0 0.0
    %1260 = vmatpush2.msra.mxu0 0.0
    %1261 = vmatprep.subr.mxu0 0.0
    %1262 = vmatpush2.msra.mxu0 0.0
    %1263 = vmatprep.subr.mxu0 0.0
    %1264 = vmatpush2.msra.mxu0 0.0
    %1265 = vmatprep.subr.mxu0 0.0
    %1266 = vmatpush2.msra.mxu0 0.0
    %1267 = vmatprep.subr.mxu0 0.0
    %1268 = vmatpush2.msra.mxu0 0.0
    %1269 = vmatprep.mubr.f32.mxu0 0.0
    %1270 = vmatmul.mubr.f32.gmra.mxu0 %v1131
    %v1271 = vpop.f32.mrf.mxu0
    %v1272 = vadd.f32 0.0, %v1271
    %v1273 = vpop.f32.mrf.mxu0
    %v1274 = vadd.f32 0.0, %v1273
    %1275 = vdwg.mxu0
    %1276 = vmatprep.subr.mxu0 %v1204
    %1277 = vmatpush1.msra.mxu0 %v1203
    %1278 = vmatprep.subr.mxu0 %v1200
    %1279 = vmatpush1.msra.mxu0 %v1199
    %1280 = vmatprep.subr.mxu0 %v1196
    %1281 = vmatpush1.msra.mxu0 %v1195
    %1282 = vmatprep.subr.mxu0 %v1192
    %1283 = vmatpush1.msra.mxu0 %v1191
    %1284 = vmatprep.subr.mxu0 %v1188
    %1285 = vmatpush1.msra.mxu0 %v1187
    %1286 = vmatprep.subr.mxu0 %v1184
    %1287 = vmatpush1.msra.mxu0 %v1183
    %1288 = vmatprep.subr.mxu0 %v1180
    %1289 = vmatpush1.msra.mxu0 %v1179
    %1290 = vmatprep.subr.mxu0 %v1176
    %1291 = vmatpush1.msra.mxu0 %v1175
    %1292 = vmatprep.subr.mxu0 %v1172
    %1293 = vmatpush1.msra.mxu0 %v1171
    %1294 = vmatprep.subr.mxu0 %v1168
    %1295 = vmatpush1.msra.mxu0 %v1167
    %1296 = vmatprep.subr.mxu0 %v1164
    %1297 = vmatpush1.msra.mxu0 %v1163
    %1298 = vmatprep.subr.mxu0 %v1160
    %1299 = vmatpush1.msra.mxu0 %v1159
    %1300 = vmatprep.subr.mxu0 %v1156
    %1301 = vmatpush1.msra.mxu0 %v1155
    %1302 = vmatprep.subr.mxu0 %v1152
    %1303 = vmatpush1.msra.mxu0 %v1151
    %1304 = vmatprep.subr.mxu0 %v1148
    %1305 = vmatpush1.msra.mxu0 %v1147
    %1306 = vmatprep.subr.mxu0 %v1144
    %1307 = vmatpush1.msra.mxu0 %v1143
    %1308 = vmatprep.subr.mxu0 0.0
    %1309 = vmatpush2.msra.mxu0 0.0
    %1310 = vmatprep.subr.mxu0 0.0
    %1311 = vmatpush2.msra.mxu0 0.0
    %1312 = vmatprep.subr.mxu0 0.0
    %1313 = vmatpush2.msra.mxu0 0.0
    %1314 = vmatprep.subr.mxu0 0.0
    %1315 = vmatpush2.msra.mxu0 0.0
    %1316 = vmatprep.subr.mxu0 0.0
    %1317 = vmatpush2.msra.mxu0 0.0
    %1318 = vmatprep.subr.mxu0 0.0
    %1319 = vmatpush2.msra.mxu0 0.0
    %1320 = vmatprep.subr.mxu0 0.0
    %1321 = vmatpush2.msra.mxu0 0.0
    %1322 = vmatprep.subr.mxu0 0.0
    %1323 = vmatpush2.msra.mxu0 0.0
    %1324 = vmatprep.subr.mxu0 0.0
    %1325 = vmatpush2.msra.mxu0 0.0
    %1326 = vmatprep.subr.mxu0 0.0
    %1327 = vmatpush2.msra.mxu0 0.0
    %1328 = vmatprep.subr.mxu0 0.0
    %1329 = vmatpush2.msra.mxu0 0.0
    %1330 = vmatprep.subr.mxu0 0.0
    %1331 = vmatpush2.msra.mxu0 0.0
    %1332 = vmatprep.subr.mxu0 0.0
    %1333 = vmatpush2.msra.mxu0 0.0
    %1334 = vmatprep.subr.mxu0 0.0
    %1335 = vmatpush2.msra.mxu0 0.0
    %1336 = vmatprep.subr.mxu0 0.0
    %1337 = vmatpush2.msra.mxu0 0.0
    %1338 = vmatprep.subr.mxu0 0.0
    %1339 = vmatpush2.msra.mxu0 0.0
    %1340 = vmatprep.mubr.f32.mxu0 0.0
    %1341 = vmatmul.mubr.f32.gmra.mxu0 %v1131
    %v1342 = vpop.f32.mrf.mxu0
    %v1343 = vadd.f32 0.0, %v1342
    %v1344 = vpop.f32.mrf.mxu0
    %v1345 = vadd.f32 0.0, %v1344
    %1346 = vdwg.mxu0
    %v1347 = vadd.f32 %v1137, %v1272
    %v1348 = vadd.f32 %v1138, %v1274
    %v1349 = vadd.f32 %v1139, %v1343
    %v1350 = vadd.f32 %v1140, %v1345
    %v1351 = vxor.u32 %v1347, 2147483648
    %v1352 = vmul.f32 %v1351, 1.442695
    %v1353 = vpow.pop %v1352
    %v1354 = vadd.f32 %v1353, 1.0
    %v1355 = vrcp.pop %v1354
    %v1356 = vmul.f32 1.0, %v1355
    %v1357 = vxor.u32 %v1348, 2147483648
    %v1358 = vmul.f32 %v1357, 1.442695
    %v1359 = vpow.pop %v1358
    %v1360 = vadd.f32 %v1359, 1.0
    %v1361 = vrcp.pop %v1360
    %v1362 = vmul.f32 1.0, %v1361
    %v1363 = vtanh.pop %v1349
    %v1364 = vxor.u32 %v1350, 2147483648
    %v1365 = vmul.f32 %v1364, 1.442695
    %v1366 = vpow.pop %v1365
    %v1367 = vadd.f32 %v1366, 1.0
    %v1368 = vrcp.pop %v1367
    %v1369 = vmul.f32 1.0, %v1368
    %v1370 = vmul.f32 %v1362, %v1129
    %v1371 = vmul.f32 %v1356, %v1363
    %v1372 = vadd.f32 %v1370, %v1371
    %v1373 = vtanh.pop %v1372
    %v1374 = vmul.f32 %v1369, %v1373
    %s1375 = scalar_lea.vmem [#allocation3], 24
    %1376 = vst [vmem:[%s1375] sm:$0xff] %v1374
    %s1377 = smul.u32 4, 4
    %s1378 = smul.addr %s1377, 8
    %s1379 = scalar_lea.vmem [#allocation2], %s1378
    %v1380 = vld [vmem:[%s1379] sm:$0xff]
    %v1381 = vld [vmem:[%s1379 + $0x8] sm:$0xff]
    %v1382 = vld [vmem:[%s1379 + $0x10] sm:$0xff]
    %v1383 = vld [vmem:[%s1379 + $0x18] sm:$0xff]
    %v1384 = vld [vmem:[#allocation7] sm:$0xff]
    %v1385 = vld [vmem:[#allocation7 + $0x8] sm:$0xff]
    %v1386 = vld [vmem:[#allocation7 + $0x10] sm:$0xff]
    %v1387 = vld [vmem:[#allocation7 + $0x18] sm:$0xff]
    %v1388 = vld [vmem:[#allocation7 + $0x20] sm:$0xff]
    %v1389 = vld [vmem:[#allocation7 + $0x28] sm:$0xff]
    %v1390 = vld [vmem:[#allocation7 + $0x30] sm:$0xff]
    %v1391 = vld [vmem:[#allocation7 + $0x38] sm:$0xff]
    %v1392 = vld [vmem:[#allocation7 + $0x40] sm:$0xff]
    %v1393 = vld [vmem:[#allocation7 + $0x48] sm:$0xff]
    %v1394 = vld [vmem:[#allocation7 + $0x50] sm:$0xff]
    %v1395 = vld [vmem:[#allocation7 + $0x58] sm:$0xff]
    %v1396 = vld [vmem:[#allocation7 + $0x60] sm:$0xff]
    %v1397 = vld [vmem:[#allocation7 + $0x68] sm:$0xff]
    %v1398 = vld [vmem:[#allocation7 + $0x70] sm:$0xff]
    %v1399 = vld [vmem:[#allocation7 + $0x78] sm:$0xff]
    %v1400 = vld [vmem:[#allocation7 + $0x80] sm:$0xff]
    %v1401 = vld [vmem:[#allocation7 + $0x88] sm:$0xff]
    %v1402 = vld [vmem:[#allocation7 + $0x90] sm:$0xff]
    %v1403 = vld [vmem:[#allocation7 + $0x98] sm:$0xff]
    %v1404 = vld [vmem:[#allocation7 + $0xa0] sm:$0xff]
    %v1405 = vld [vmem:[#allocation7 + $0xa8] sm:$0xff]
    %v1406 = vld [vmem:[#allocation7 + $0xb0] sm:$0xff]
    %v1407 = vld [vmem:[#allocation7 + $0xb8] sm:$0xff]
    %v1408 = vld [vmem:[#allocation7 + $0xc0] sm:$0xff]
    %v1409 = vld [vmem:[#allocation7 + $0xc8] sm:$0xff]
    %v1410 = vld [vmem:[#allocation7 + $0xd0] sm:$0xff]
    %v1411 = vld [vmem:[#allocation7 + $0xd8] sm:$0xff]
    %v1412 = vld [vmem:[#allocation7 + $0xe0] sm:$0xff]
    %v1413 = vld [vmem:[#allocation7 + $0xe8] sm:$0xff]
    %v1414 = vld [vmem:[#allocation7 + $0xf0] sm:$0xff]
    %v1415 = vld [vmem:[#allocation7 + $0xf8] sm:$0xff]
    %v1416 = vld [vmem:[#allocation7 + $0x100] sm:$0xff]
    %v1417 = vld [vmem:[#allocation7 + $0x108] sm:$0xff]
    %v1418 = vld [vmem:[#allocation7 + $0x110] sm:$0xff]
    %v1419 = vld [vmem:[#allocation7 + $0x118] sm:$0xff]
    %v1420 = vld [vmem:[#allocation7 + $0x120] sm:$0xff]
    %v1421 = vld [vmem:[#allocation7 + $0x128] sm:$0xff]
    %v1422 = vld [vmem:[#allocation7 + $0x130] sm:$0xff]
    %v1423 = vld [vmem:[#allocation7 + $0x138] sm:$0xff]
    %v1424 = vld [vmem:[#allocation7 + $0x140] sm:$0xff]
    %v1425 = vld [vmem:[#allocation7 + $0x148] sm:$0xff]
    %v1426 = vld [vmem:[#allocation7 + $0x150] sm:$0xff]
    %v1427 = vld [vmem:[#allocation7 + $0x158] sm:$0xff]
    %v1428 = vld [vmem:[#allocation7 + $0x160] sm:$0xff]
    %v1429 = vld [vmem:[#allocation7 + $0x168] sm:$0xff]
    %v1430 = vld [vmem:[#allocation7 + $0x170] sm:$0xff]
    %v1431 = vld [vmem:[#allocation7 + $0x178] sm:$0xff]
    %v1432 = vld [vmem:[#allocation7 + $0x180] sm:$0xff]
    %v1433 = vld [vmem:[#allocation7 + $0x188] sm:$0xff]
    %v1434 = vld [vmem:[#allocation7 + $0x190] sm:$0xff]
    %v1435 = vld [vmem:[#allocation7 + $0x198] sm:$0xff]
    %v1436 = vld [vmem:[#allocation7 + $0x1a0] sm:$0xff]
    %v1437 = vld [vmem:[#allocation7 + $0x1a8] sm:$0xff]
    %v1438 = vld [vmem:[#allocation7 + $0x1b0] sm:$0xff]
    %v1439 = vld [vmem:[#allocation7 + $0x1b8] sm:$0xff]
    %v1440 = vld [vmem:[#allocation7 + $0x1c0] sm:$0xff]
    %v1441 = vld [vmem:[#allocation7 + $0x1c8] sm:$0xff]
    %v1442 = vld [vmem:[#allocation7 + $0x1d0] sm:$0xff]
    %v1443 = vld [vmem:[#allocation7 + $0x1d8] sm:$0xff]
    %v1444 = vld [vmem:[#allocation7 + $0x1e0] sm:$0xff]
    %v1445 = vld [vmem:[#allocation7 + $0x1e8] sm:$0xff]
    %v1446 = vld [vmem:[#allocation7 + $0x1f0] sm:$0xff]
    %v1447 = vld [vmem:[#allocation7 + $0x1f8] sm:$0xff]
    %1448 = vmatprep.subr.mxu0 %v1445
    %1449 = vmatpush1.msra.mxu0 %v1444
    %1450 = vmatprep.subr.mxu0 %v1441
    %1451 = vmatpush1.msra.mxu0 %v1440
    %1452 = vmatprep.subr.mxu0 %v1437
    %1453 = vmatpush1.msra.mxu0 %v1436
    %1454 = vmatprep.subr.mxu0 %v1433
    %1455 = vmatpush1.msra.mxu0 %v1432
    %1456 = vmatprep.subr.mxu0 %v1429
    %1457 = vmatpush1.msra.mxu0 %v1428
    %1458 = vmatprep.subr.mxu0 %v1425
    %1459 = vmatpush1.msra.mxu0 %v1424
    %1460 = vmatprep.subr.mxu0 %v1421
    %1461 = vmatpush1.msra.mxu0 %v1420
    %1462 = vmatprep.subr.mxu0 %v1417
    %1463 = vmatpush1.msra.mxu0 %v1416
    %1464 = vmatprep.subr.mxu0 %v1413
    %1465 = vmatpush1.msra.mxu0 %v1412
    %1466 = vmatprep.subr.mxu0 %v1409
    %1467 = vmatpush1.msra.mxu0 %v1408
    %1468 = vmatprep.subr.mxu0 %v1405
    %1469 = vmatpush1.msra.mxu0 %v1404
    %1470 = vmatprep.subr.mxu0 %v1401
    %1471 = vmatpush1.msra.mxu0 %v1400
    %1472 = vmatprep.subr.mxu0 %v1397
    %1473 = vmatpush1.msra.mxu0 %v1396
    %1474 = vmatprep.subr.mxu0 %v1393
    %1475 = vmatpush1.msra.mxu0 %v1392
    %1476 = vmatprep.subr.mxu0 %v1389
    %1477 = vmatpush1.msra.mxu0 %v1388
    %1478 = vmatprep.subr.mxu0 %v1385
    %1479 = vmatpush1.msra.mxu0 %v1384
    %1480 = vmatprep.subr.mxu0 0.0
    %1481 = vmatpush2.msra.mxu0 0.0
    %1482 = vmatprep.subr.mxu0 0.0
    %1483 = vmatpush2.msra.mxu0 0.0
    %1484 = vmatprep.subr.mxu0 0.0
    %1485 = vmatpush2.msra.mxu0 0.0
    %1486 = vmatprep.subr.mxu0 0.0
    %1487 = vmatpush2.msra.mxu0 0.0
    %1488 = vmatprep.subr.mxu0 0.0
    %1489 = vmatpush2.msra.mxu0 0.0
    %1490 = vmatprep.subr.mxu0 0.0
    %1491 = vmatpush2.msra.mxu0 0.0
    %1492 = vmatprep.subr.mxu0 0.0
    %1493 = vmatpush2.msra.mxu0 0.0
    %1494 = vmatprep.subr.mxu0 0.0
    %1495 = vmatpush2.msra.mxu0 0.0
    %1496 = vmatprep.subr.mxu0 0.0
    %1497 = vmatpush2.msra.mxu0 0.0
    %1498 = vmatprep.subr.mxu0 0.0
    %1499 = vmatpush2.msra.mxu0 0.0
    %1500 = vmatprep.subr.mxu0 0.0
    %1501 = vmatpush2.msra.mxu0 0.0
    %1502 = vmatprep.subr.mxu0 0.0
    %1503 = vmatpush2.msra.mxu0 0.0
    %1504 = vmatprep.subr.mxu0 0.0
    %1505 = vmatpush2.msra.mxu0 0.0
    %1506 = vmatprep.subr.mxu0 0.0
    %1507 = vmatpush2.msra.mxu0 0.0
    %1508 = vmatprep.subr.mxu0 0.0
    %1509 = vmatpush2.msra.mxu0 0.0
    %1510 = vmatprep.subr.mxu0 0.0
    %1511 = vmatpush2.msra.mxu0 0.0
    %1512 = vmatprep.mubr.f32.mxu0 0.0
    %1513 = vmatmul.mubr.f32.gmra.mxu0 %v1374
    %v1514 = vpop.f32.mrf.mxu0
    %v1515 = vadd.f32 0.0, %v1514
    %v1516 = vpop.f32.mrf.mxu0
    %v1517 = vadd.f32 0.0, %v1516
    %1518 = vdwg.mxu0
    %1519 = vmatprep.subr.mxu0 %v1447
    %1520 = vmatpush1.msra.mxu0 %v1446
    %1521 = vmatprep.subr.mxu0 %v1443
    %1522 = vmatpush1.msra.mxu0 %v1442
    %1523 = vmatprep.subr.mxu0 %v1439
    %1524 = vmatpush1.msra.mxu0 %v1438
    %1525 = vmatprep.subr.mxu0 %v1435
    %1526 = vmatpush1.msra.mxu0 %v1434
    %1527 = vmatprep.subr.mxu0 %v1431
    %1528 = vmatpush1.msra.mxu0 %v1430
    %1529 = vmatprep.subr.mxu0 %v1427
    %1530 = vmatpush1.msra.mxu0 %v1426
    %1531 = vmatprep.subr.mxu0 %v1423
    %1532 = vmatpush1.msra.mxu0 %v1422
    %1533 = vmatprep.subr.mxu0 %v1419
    %1534 = vmatpush1.msra.mxu0 %v1418
    %1535 = vmatprep.subr.mxu0 %v1415
    %1536 = vmatpush1.msra.mxu0 %v1414
    %1537 = vmatprep.subr.mxu0 %v1411
    %1538 = vmatpush1.msra.mxu0 %v1410
    %1539 = vmatprep.subr.mxu0 %v1407
    %1540 = vmatpush1.msra.mxu0 %v1406
    %1541 = vmatprep.subr.mxu0 %v1403
    %1542 = vmatpush1.msra.mxu0 %v1402
    %1543 = vmatprep.subr.mxu0 %v1399
    %1544 = vmatpush1.msra.mxu0 %v1398
    %1545 = vmatprep.subr.mxu0 %v1395
    %1546 = vmatpush1.msra.mxu0 %v1394
    %1547 = vmatprep.subr.mxu0 %v1391
    %1548 = vmatpush1.msra.mxu0 %v1390
    %1549 = vmatprep.subr.mxu0 %v1387
    %1550 = vmatpush1.msra.mxu0 %v1386
    %1551 = vmatprep.subr.mxu0 0.0
    %1552 = vmatpush2.msra.mxu0 0.0
    %1553 = vmatprep.subr.mxu0 0.0
    %1554 = vmatpush2.msra.mxu0 0.0
    %1555 = vmatprep.subr.mxu0 0.0
    %1556 = vmatpush2.msra.mxu0 0.0
    %1557 = vmatprep.subr.mxu0 0.0
    %1558 = vmatpush2.msra.mxu0 0.0
    %1559 = vmatprep.subr.mxu0 0.0
    %1560 = vmatpush2.msra.mxu0 0.0
    %1561 = vmatprep.subr.mxu0 0.0
    %1562 = vmatpush2.msra.mxu0 0.0
    %1563 = vmatprep.subr.mxu0 0.0
    %1564 = vmatpush2.msra.mxu0 0.0
    %1565 = vmatprep.subr.mxu0 0.0
    %1566 = vmatpush2.msra.mxu0 0.0
    %1567 = vmatprep.subr.mxu0 0.0
    %1568 = vmatpush2.msra.mxu0 0.0
    %1569 = vmatprep.subr.mxu0 0.0
    %1570 = vmatpush2.msra.mxu0 0.0
    %1571 = vmatprep.subr.mxu0 0.0
    %1572 = vmatpush2.msra.mxu0 0.0
    %1573 = vmatprep.subr.mxu0 0.0
    %1574 = vmatpush2.msra.mxu0 0.0
    %1575 = vmatprep.subr.mxu0 0.0
    %1576 = vmatpush2.msra.mxu0 0.0
    %1577 = vmatprep.subr.mxu0 0.0
    %1578 = vmatpush2.msra.mxu0 0.0
    %1579 = vmatprep.subr.mxu0 0.0
    %1580 = vmatpush2.msra.mxu0 0.0
    %1581 = vmatprep.subr.mxu0 0.0
    %1582 = vmatpush2.msra.mxu0 0.0
    %1583 = vmatprep.mubr.f32.mxu0 0.0
    %1584 = vmatmul.mubr.f32.gmra.mxu0 %v1374
    %v1585 = vpop.f32.mrf.mxu0
    %v1586 = vadd.f32 0.0, %v1585
    %v1587 = vpop.f32.mrf.mxu0
    %v1588 = vadd.f32 0.0, %v1587
    %1589 = vdwg.mxu0
    %v1590 = vadd.f32 %v1380, %v1515
    %v1591 = vadd.f32 %v1381, %v1517
    %v1592 = vadd.f32 %v1382, %v1586
    %v1593 = vadd.f32 %v1383, %v1588
    %v1594 = vxor.u32 %v1590, 2147483648
    %v1595 = vmul.f32 %v1594, 1.442695
    %v1596 = vpow.pop %v1595
    %v1597 = vadd.f32 %v1596, 1.0
    %v1598 = vrcp.pop %v1597
    %v1599 = vmul.f32 1.0, %v1598
    %v1600 = vxor.u32 %v1591, 2147483648
    %v1601 = vmul.f32 %v1600, 1.442695
    %v1602 = vpow.pop %v1601
    %v1603 = vadd.f32 %v1602, 1.0
    %v1604 = vrcp.pop %v1603
    %v1605 = vmul.f32 1.0, %v1604
    %v1606 = vtanh.pop %v1592
    %v1607 = vxor.u32 %v1593, 2147483648
    %v1608 = vmul.f32 %v1607, 1.442695
    %v1609 = vpow.pop %v1608
    %v1610 = vadd.f32 %v1609, 1.0
    %v1611 = vrcp.pop %v1610
    %v1612 = vmul.f32 1.0, %v1611
    %v1613 = vmul.f32 %v1605, %v1372
    %v1614 = vmul.f32 %v1599, %v1606
    %v1615 = vadd.f32 %v1613, %v1614
    %v1616 = vtanh.pop %v1615
    %v1617 = vmul.f32 %v1612, %v1616
    %s1618 = scalar_lea.vmem [#allocation3], 32
    %1619 = vst [vmem:[%s1618] sm:$0xff] %v1617
    %s1620 = smul.u32 5, 4
    %s1621 = smul.addr %s1620, 8
    %s1622 = scalar_lea.vmem [#allocation2], %s1621
    %v1623 = vld [vmem:[%s1622] sm:$0xff]
    %v1624 = vld [vmem:[%s1622 + $0x8] sm:$0xff]
    %v1625 = vld [vmem:[%s1622 + $0x10] sm:$0xff]
    %v1626 = vld [vmem:[%s1622 + $0x18] sm:$0xff]
    %v1627 = vld [vmem:[#allocation7] sm:$0xff]
    %v1628 = vld [vmem:[#allocation7 + $0x8] sm:$0xff]
    %v1629 = vld [vmem:[#allocation7 + $0x10] sm:$0xff]
    %v1630 = vld [vmem:[#allocation7 + $0x18] sm:$0xff]
    %v1631 = vld [vmem:[#allocation7 + $0x20] sm:$0xff]
    %v1632 = vld [vmem:[#allocation7 + $0x28] sm:$0xff]
    %v1633 = vld [vmem:[#allocation7 + $0x30] sm:$0xff]
    %v1634 = vld [vmem:[#allocation7 + $0x38] sm:$0xff]
    %v1635 = vld [vmem:[#allocation7 + $0x40] sm:$0xff]
    %v1636 = vld [vmem:[#allocation7 + $0x48] sm:$0xff]
    %v1637 = vld [vmem:[#allocation7 + $0x50] sm:$0xff]
    %v1638 = vld [vmem:[#allocation7 + $0x58] sm:$0xff]
    %v1639 = vld [vmem:[#allocation7 + $0x60] sm:$0xff]
    %v1640 = vld [vmem:[#allocation7 + $0x68] sm:$0xff]
    %v1641 = vld [vmem:[#allocation7 + $0x70] sm:$0xff]
    %v1642 = vld [vmem:[#allocation7 + $0x78] sm:$0xff]
    %v1643 = vld [vmem:[#allocation7 + $0x80] sm:$0xff]
    %v1644 = vld [vmem:[#allocation7 + $0x88] sm:$0xff]
    %v1645 = vld [vmem:[#allocation7 + $0x90] sm:$0xff]
    %v1646 = vld [vmem:[#allocation7 + $0x98] sm:$0xff]
    %v1647 = vld [vmem:[#allocation7 + $0xa0] sm:$0xff]
    %v1648 = vld [vmem:[#allocation7 + $0xa8] sm:$0xff]
    %v1649 = vld [vmem:[#allocation7 + $0xb0] sm:$0xff]
    %v1650 = vld [vmem:[#allocation7 + $0xb8] sm:$0xff]
    %v1651 = vld [vmem:[#allocation7 + $0xc0] sm:$0xff]
    %v1652 = vld [vmem:[#allocation7 + $0xc8] sm:$0xff]
    %v1653 = vld [vmem:[#allocation7 + $0xd0] sm:$0xff]
    %v1654 = vld [vmem:[#allocation7 + $0xd8] sm:$0xff]
    %v1655 = vld [vmem:[#allocation7 + $0xe0] sm:$0xff]
    %v1656 = vld [vmem:[#allocation7 + $0xe8] sm:$0xff]
    %v1657 = vld [vmem:[#allocation7 + $0xf0] sm:$0xff]
    %v1658 = vld [vmem:[#allocation7 + $0xf8] sm:$0xff]
    %v1659 = vld [vmem:[#allocation7 + $0x100] sm:$0xff]
    %v1660 = vld [vmem:[#allocation7 + $0x108] sm:$0xff]
    %v1661 = vld [vmem:[#allocation7 + $0x110] sm:$0xff]
    %v1662 = vld [vmem:[#allocation7 + $0x118] sm:$0xff]
    %v1663 = vld [vmem:[#allocation7 + $0x120] sm:$0xff]
    %v1664 = vld [vmem:[#allocation7 + $0x128] sm:$0xff]
    %v1665 = vld [vmem:[#allocation7 + $0x130] sm:$0xff]
    %v1666 = vld [vmem:[#allocation7 + $0x138] sm:$0xff]
    %v1667 = vld [vmem:[#allocation7 + $0x140] sm:$0xff]
    %v1668 = vld [vmem:[#allocation7 + $0x148] sm:$0xff]
    %v1669 = vld [vmem:[#allocation7 + $0x150] sm:$0xff]
    %v1670 = vld [vmem:[#allocation7 + $0x158] sm:$0xff]
    %v1671 = vld [vmem:[#allocation7 + $0x160] sm:$0xff]
    %v1672 = vld [vmem:[#allocation7 + $0x168] sm:$0xff]
    %v1673 = vld [vmem:[#allocation7 + $0x170] sm:$0xff]
    %v1674 = vld [vmem:[#allocation7 + $0x178] sm:$0xff]
    %v1675 = vld [vmem:[#allocation7 + $0x180] sm:$0xff]
    %v1676 = vld [vmem:[#allocation7 + $0x188] sm:$0xff]
    %v1677 = vld [vmem:[#allocation7 + $0x190] sm:$0xff]
    %v1678 = vld [vmem:[#allocation7 + $0x198] sm:$0xff]
    %v1679 = vld [vmem:[#allocation7 + $0x1a0] sm:$0xff]
    %v1680 = vld [vmem:[#allocation7 + $0x1a8] sm:$0xff]
    %v1681 = vld [vmem:[#allocation7 + $0x1b0] sm:$0xff]
    %v1682 = vld [vmem:[#allocation7 + $0x1b8] sm:$0xff]
    %v1683 = vld [vmem:[#allocation7 + $0x1c0] sm:$0xff]
    %v1684 = vld [vmem:[#allocation7 + $0x1c8] sm:$0xff]
    %v1685 = vld [vmem:[#allocation7 + $0x1d0] sm:$0xff]
    %v1686 = vld [vmem:[#allocation7 + $0x1d8] sm:$0xff]
    %v1687 = vld [vmem:[#allocation7 + $0x1e0] sm:$0xff]
    %v1688 = vld [vmem:[#allocation7 + $0x1e8] sm:$0xff]
    %v1689 = vld [vmem:[#allocation7 + $0x1f0] sm:$0xff]
    %v1690 = vld [vmem:[#allocation7 + $0x1f8] sm:$0xff]
    %1691 = vmatprep.subr.mxu0 %v1688
    %1692 = vmatpush1.msra.mxu0 %v1687
    %1693 = vmatprep.subr.mxu0 %v1684
    %1694 = vmatpush1.msra.mxu0 %v1683
    %1695 = vmatprep.subr.mxu0 %v1680
    %1696 = vmatpush1.msra.mxu0 %v1679
    %1697 = vmatprep.subr.mxu0 %v1676
    %1698 = vmatpush1.msra.mxu0 %v1675
    %1699 = vmatprep.subr.mxu0 %v1672
    %1700 = vmatpush1.msra.mxu0 %v1671
    %1701 = vmatprep.subr.mxu0 %v1668
    %1702 = vmatpush1.msra.mxu0 %v1667
    %1703 = vmatprep.subr.mxu0 %v1664
    %1704 = vmatpush1.msra.mxu0 %v1663
    %1705 = vmatprep.subr.mxu0 %v1660
    %1706 = vmatpush1.msra.mxu0 %v1659
    %1707 = vmatprep.subr.mxu0 %v1656
    %1708 = vmatpush1.msra.mxu0 %v1655
    %1709 = vmatprep.subr.mxu0 %v1652
    %1710 = vmatpush1.msra.mxu0 %v1651
    %1711 = vmatprep.subr.mxu0 %v1648
    %1712 = vmatpush1.msra.mxu0 %v1647
    %1713 = vmatprep.subr.mxu0 %v1644
    %1714 = vmatpush1.msra.mxu0 %v1643
    %1715 = vmatprep.subr.mxu0 %v1640
    %1716 = vmatpush1.msra.mxu0 %v1639
    %1717 = vmatprep.subr.mxu0 %v1636
    %1718 = vmatpush1.msra.mxu0 %v1635
    %1719 = vmatprep.subr.mxu0 %v1632
    %1720 = vmatpush1.msra.mxu0 %v1631
    %1721 = vmatprep.subr.mxu0 %v1628
    %1722 = vmatpush1.msra.mxu0 %v1627
    %1723 = vmatprep.subr.mxu0 0.0
    %1724 = vmatpush2.msra.mxu0 0.0
    %1725 = vmatprep.subr.mxu0 0.0
    %1726 = vmatpush2.msra.mxu0 0.0
    %1727 = vmatprep.subr.mxu0 0.0
    %1728 = vmatpush2.msra.mxu0 0.0
    %1729 = vmatprep.subr.mxu0 0.0
    %1730 = vmatpush2.msra.mxu0 0.0
    %1731 = vmatprep.subr.mxu0 0.0
    %1732 = vmatpush2.msra.mxu0 0.0
    %1733 = vmatprep.subr.mxu0 0.0
    %1734 = vmatpush2.msra.mxu0 0.0
    %1735 = vmatprep.subr.mxu0 0.0
    %1736 = vmatpush2.msra.mxu0 0.0
    %1737 = vmatprep.subr.mxu0 0.0
    %1738 = vmatpush2.msra.mxu0 0.0
    %1739 = vmatprep.subr.mxu0 0.0
    %1740 = vmatpush2.msra.mxu0 0.0
    %1741 = vmatprep.subr.mxu0 0.0
    %1742 = vmatpush2.msra.mxu0 0.0
    %1743 = vmatprep.subr.mxu0 0.0
    %1744 = vmatpush2.msra.mxu0 0.0
    %1745 = vmatprep.subr.mxu0 0.0
    %1746 = vmatpush2.msra.mxu0 0.0
    %1747 = vmatprep.subr.mxu0 0.0
    %1748 = vmatpush2.msra.mxu0 0.0
    %1749 = vmatprep.subr.mxu0 0.0
    %1750 = vmatpush2.msra.mxu0 0.0
    %1751 = vmatprep.subr.mxu0 0.0
    %1752 = vmatpush2.msra.mxu0 0.0
    %1753 = vmatprep.subr.mxu0 0.0
    %1754 = vmatpush2.msra.mxu0 0.0
    %1755 = vmatprep.mubr.f32.mxu0 0.0
    %1756 = vmatmul.mubr.f32.gmra.mxu0 %v1617
    %v1757 = vpop.f32.mrf.mxu0
    %v1758 = vadd.f32 0.0, %v1757
    %v1759 = vpop.f32.mrf.mxu0
    %v1760 = vadd.f32 0.0, %v1759
    %1761 = vdwg.mxu0
    %1762 = vmatprep.subr.mxu0 %v1690
    %1763 = vmatpush1.msra.mxu0 %v1689
    %1764 = vmatprep.subr.mxu0 %v1686
    %1765 = vmatpush1.msra.mxu0 %v1685
    %1766 = vmatprep.subr.mxu0 %v1682
    %1767 = vmatpush1.msra.mxu0 %v1681
    %1768 = vmatprep.subr.mxu0 %v1678
    %1769 = vmatpush1.msra.mxu0 %v1677
    %1770 = vmatprep.subr.mxu0 %v1674
    %1771 = vmatpush1.msra.mxu0 %v1673
    %1772 = vmatprep.subr.mxu0 %v1670
    %1773 = vmatpush1.msra.mxu0 %v1669
    %1774 = vmatprep.subr.mxu0 %v1666
    %1775 = vmatpush1.msra.mxu0 %v1665
    %1776 = vmatprep.subr.mxu0 %v1662
    %1777 = vmatpush1.msra.mxu0 %v1661
    %1778 = vmatprep.subr.mxu0 %v1658
    %1779 = vmatpush1.msra.mxu0 %v1657
    %1780 = vmatprep.subr.mxu0 %v1654
    %1781 = vmatpush1.msra.mxu0 %v1653
    %1782 = vmatprep.subr.mxu0 %v1650
    %1783 = vmatpush1.msra.mxu0 %v1649
    %1784 = vmatprep.subr.mxu0 %v1646
    %1785 = vmatpush1.msra.mxu0 %v1645
    %1786 = vmatprep.subr.mxu0 %v1642
    %1787 = vmatpush1.msra.mxu0 %v1641
    %1788 = vmatprep.subr.mxu0 %v1638
    %1789 = vmatpush1.msra.mxu0 %v1637
    %1790 = vmatprep.subr.mxu0 %v1634
    %1791 = vmatpush1.msra.mxu0 %v1633
    %1792 = vmatprep.subr.mxu0 %v1630
    %1793 = vmatpush1.msra.mxu0 %v1629
    %1794 = vmatprep.subr.mxu0 0.0
    %1795 = vmatpush2.msra.mxu0 0.0
    %1796 = vmatprep.subr.mxu0 0.0
    %1797 = vmatpush2.msra.mxu0 0.0
    %1798 = vmatprep.subr.mxu0 0.0
    %1799 = vmatpush2.msra.mxu0 0.0
    %1800 = vmatprep.subr.mxu0 0.0
    %1801 = vmatpush2.msra.mxu0 0.0
    %1802 = vmatprep.subr.mxu0 0.0
    %1803 = vmatpush2.msra.mxu0 0.0
    %1804 = vmatprep.subr.mxu0 0.0
    %1805 = vmatpush2.msra.mxu0 0.0
    %1806 = vmatprep.subr.mxu0 0.0
    %1807 = vmatpush2.msra.mxu0 0.0
    %1808 = vmatprep.subr.mxu0 0.0
    %1809 = vmatpush2.msra.mxu0 0.0
    %1810 = vmatprep.subr.mxu0 0.0
    %1811 = vmatpush2.msra.mxu0 0.0
    %1812 = vmatprep.subr.mxu0 0.0
    %1813 = vmatpush2.msra.mxu0 0.0
    %1814 = vmatprep.subr.mxu0 0.0
    %1815 = vmatpush2.msra.mxu0 0.0
    %1816 = vmatprep.subr.mxu0 0.0
    %1817 = vmatpush2.msra.mxu0 0.0
    %1818 = vmatprep.subr.mxu0 0.0
    %1819 = vmatpush2.msra.mxu0 0.0
    %1820 = vmatprep.subr.mxu0 0.0
    %1821 = vmatpush2.msra.mxu0 0.0
    %1822 = vmatprep.subr.mxu0 0.0
    %1823 = vmatpush2.msra.mxu0 0.0
    %1824 = vmatprep.subr.mxu0 0.0
    %1825 = vmatpush2.msra.mxu0 0.0
    %1826 = vmatprep.mubr.f32.mxu0 0.0
    %1827 = vmatmul.mubr.f32.gmra.mxu0 %v1617
    %v1828 = vpop.f32.mrf.mxu0
    %v1829 = vadd.f32 0.0, %v1828
    %v1830 = vpop.f32.mrf.mxu0
    %v1831 = vadd.f32 0.0, %v1830
    %1832 = vdwg.mxu0
    %v1833 = vadd.f32 %v1623, %v1758
    %v1834 = vadd.f32 %v1624, %v1760
    %v1835 = vadd.f32 %v1625, %v1829
    %v1836 = vadd.f32 %v1626, %v1831
    %v1837 = vxor.u32 %v1833, 2147483648
    %v1838 = vmul.f32 %v1837, 1.442695
    %v1839 = vpow.pop %v1838
    %v1840 = vadd.f32 %v1839, 1.0
    %v1841 = vrcp.pop %v1840
    %v1842 = vmul.f32 1.0, %v1841
    %v1843 = vxor.u32 %v1834, 2147483648
    %v1844 = vmul.f32 %v1843, 1.442695
    %v1845 = vpow.pop %v1844
    %v1846 = vadd.f32 %v1845, 1.0
    %v1847 = vrcp.pop %v1846
    %v1848 = vmul.f32 1.0, %v1847
    %v1849 = vtanh.pop %v1835
    %v1850 = vxor.u32 %v1836, 2147483648
    %v1851 = vmul.f32 %v1850, 1.442695
    %v1852 = vpow.pop %v1851
    %v1853 = vadd.f32 %v1852, 1.0
    %v1854 = vrcp.pop %v1853
    %v1855 = vmul.f32 1.0, %v1854
    %v1856 = vmul.f32 %v1848, %v1615
    %v1857 = vmul.f32 %v1842, %v1849
    %v1858 = vadd.f32 %v1856, %v1857
    %v1859 = vtanh.pop %v1858
    %v1860 = vmul.f32 %v1855, %v1859
    %s1861 = scalar_lea.vmem [#allocation3], 40
    %1862 = vst [vmem:[%s1861] sm:$0xff] %v1860
    %s1863 = smul.u32 6, 4
    %s1864 = smul.addr %s1863, 8
    %s1865 = scalar_lea.vmem [#allocation2], %s1864
    %v1866 = vld [vmem:[%s1865] sm:$0xff]
    %v1867 = vld [vmem:[%s1865 + $0x8] sm:$0xff]
    %v1868 = vld [vmem:[%s1865 + $0x10] sm:$0xff]
    %v1869 = vld [vmem:[%s1865 + $0x18] sm:$0xff]
    %v1870 = vld [vmem:[#allocation7] sm:$0xff]
    %v1871 = vld [vmem:[#allocation7 + $0x8] sm:$0xff]
    %v1872 = vld [vmem:[#allocation7 + $0x10] sm:$0xff]
    %v1873 = vld [vmem:[#allocation7 + $0x18] sm:$0xff]
    %v1874 = vld [vmem:[#allocation7 + $0x20] sm:$0xff]
    %v1875 = vld [vmem:[#allocation7 + $0x28] sm:$0xff]
    %v1876 = vld [vmem:[#allocation7 + $0x30] sm:$0xff]
    %v1877 = vld [vmem:[#allocation7 + $0x38] sm:$0xff]
    %v1878 = vld [vmem:[#allocation7 + $0x40] sm:$0xff]
    %v1879 = vld [vmem:[#allocation7 + $0x48] sm:$0xff]
    %v1880 = vld [vmem:[#allocation7 + $0x50] sm:$0xff]
    %v1881 = vld [vmem:[#allocation7 + $0x58] sm:$0xff]
    %v1882 = vld [vmem:[#allocation7 + $0x60] sm:$0xff]
    %v1883 = vld [vmem:[#allocation7 + $0x68] sm:$0xff]
    %v1884 = vld [vmem:[#allocation7 + $0x70] sm:$0xff]
    %v1885 = vld [vmem:[#allocation7 + $0x78] sm:$0xff]
    %v1886 = vld [vmem:[#allocation7 + $0x80] sm:$0xff]
    %v1887 = vld [vmem:[#allocation7 + $0x88] sm:$0xff]
    %v1888 = vld [vmem:[#allocation7 + $0x90] sm:$0xff]
    %v1889 = vld [vmem:[#allocation7 + $0x98] sm:$0xff]
    %v1890 = vld [vmem:[#allocation7 + $0xa0] sm:$0xff]
    %v1891 = vld [vmem:[#allocation7 + $0xa8] sm:$0xff]
    %v1892 = vld [vmem:[#allocation7 + $0xb0] sm:$0xff]
    %v1893 = vld [vmem:[#allocation7 + $0xb8] sm:$0xff]
    %v1894 = vld [vmem:[#allocation7 + $0xc0] sm:$0xff]
    %v1895 = vld [vmem:[#allocation7 + $0xc8] sm:$0xff]
    %v1896 = vld [vmem:[#allocation7 + $0xd0] sm:$0xff]
    %v1897 = vld [vmem:[#allocation7 + $0xd8] sm:$0xff]
    %v1898 = vld [vmem:[#allocation7 + $0xe0] sm:$0xff]
    %v1899 = vld [vmem:[#allocation7 + $0xe8] sm:$0xff]
    %v1900 = vld [vmem:[#allocation7 + $0xf0] sm:$0xff]
    %v1901 = vld [vmem:[#allocation7 + $0xf8] sm:$0xff]
    %v1902 = vld [vmem:[#allocation7 + $0x100] sm:$0xff]
    %v1903 = vld [vmem:[#allocation7 + $0x108] sm:$0xff]
    %v1904 = vld [vmem:[#allocation7 + $0x110] sm:$0xff]
    %v1905 = vld [vmem:[#allocation7 + $0x118] sm:$0xff]
    %v1906 = vld [vmem:[#allocation7 + $0x120] sm:$0xff]
    %v1907 = vld [vmem:[#allocation7 + $0x128] sm:$0xff]
    %v1908 = vld [vmem:[#allocation7 + $0x130] sm:$0xff]
    %v1909 = vld [vmem:[#allocation7 + $0x138] sm:$0xff]
    %v1910 = vld [vmem:[#allocation7 + $0x140] sm:$0xff]
    %v1911 = vld [vmem:[#allocation7 + $0x148] sm:$0xff]
    %v1912 = vld [vmem:[#allocation7 + $0x150] sm:$0xff]
    %v1913 = vld [vmem:[#allocation7 + $0x158] sm:$0xff]
    %v1914 = vld [vmem:[#allocation7 + $0x160] sm:$0xff]
    %v1915 = vld [vmem:[#allocation7 + $0x168] sm:$0xff]
    %v1916 = vld [vmem:[#allocation7 + $0x170] sm:$0xff]
    %v1917 = vld [vmem:[#allocation7 + $0x178] sm:$0xff]
    %v1918 = vld [vmem:[#allocation7 + $0x180] sm:$0xff]
    %v1919 = vld [vmem:[#allocation7 + $0x188] sm:$0xff]
    %v1920 = vld [vmem:[#allocation7 + $0x190] sm:$0xff]
    %v1921 = vld [vmem:[#allocation7 + $0x198] sm:$0xff]
    %v1922 = vld [vmem:[#allocation7 + $0x1a0] sm:$0xff]
    %v1923 = vld [vmem:[#allocation7 + $0x1a8] sm:$0xff]
    %v1924 = vld [vmem:[#allocation7 + $0x1b0] sm:$0xff]
    %v1925 = vld [vmem:[#allocation7 + $0x1b8] sm:$0xff]
    %v1926 = vld [vmem:[#allocation7 + $0x1c0] sm:$0xff]
    %v1927 = vld [vmem:[#allocation7 + $0x1c8] sm:$0xff]
    %v1928 = vld [vmem:[#allocation7 + $0x1d0] sm:$0xff]
    %v1929 = vld [vmem:[#allocation7 + $0x1d8] sm:$0xff]
    %v1930 = vld [vmem:[#allocation7 + $0x1e0] sm:$0xff]
    %v1931 = vld [vmem:[#allocation7 + $0x1e8] sm:$0xff]
    %v1932 = vld [vmem:[#allocation7 + $0x1f0] sm:$0xff]
    %v1933 = vld [vmem:[#allocation7 + $0x1f8] sm:$0xff]
    %1934 = vmatprep.subr.mxu0 %v1931
    %1935 = vmatpush1.msra.mxu0 %v1930
    %1936 = vmatprep.subr.mxu0 %v1927
    %1937 = vmatpush1.msra.mxu0 %v1926
    %1938 = vmatprep.subr.mxu0 %v1923
    %1939 = vmatpush1.msra.mxu0 %v1922
    %1940 = vmatprep.subr.mxu0 %v1919
    %1941 = vmatpush1.msra.mxu0 %v1918
    %1942 = vmatprep.subr.mxu0 %v1915
    %1943 = vmatpush1.msra.mxu0 %v1914
    %1944 = vmatprep.subr.mxu0 %v1911
    %1945 = vmatpush1.msra.mxu0 %v1910
    %1946 = vmatprep.subr.mxu0 %v1907
    %1947 = vmatpush1.msra.mxu0 %v1906
    %1948 = vmatprep.subr.mxu0 %v1903
    %1949 = vmatpush1.msra.mxu0 %v1902
    %1950 = vmatprep.subr.mxu0 %v1899
    %1951 = vmatpush1.msra.mxu0 %v1898
    %1952 = vmatprep.subr.mxu0 %v1895
    %1953 = vmatpush1.msra.mxu0 %v1894
    %1954 = vmatprep.subr.mxu0 %v1891
    %1955 = vmatpush1.msra.mxu0 %v1890
    %1956 = vmatprep.subr.mxu0 %v1887
    %1957 = vmatpush1.msra.mxu0 %v1886
    %1958 = vmatprep.subr.mxu0 %v1883
    %1959 = vmatpush1.msra.mxu0 %v1882
    %1960 = vmatprep.subr.mxu0 %v1879
    %1961 = vmatpush1.msra.mxu0 %v1878
    %1962 = vmatprep.subr.mxu0 %v1875
    %1963 = vmatpush1.msra.mxu0 %v1874
    %1964 = vmatprep.subr.mxu0 %v1871
    %1965 = vmatpush1.msra.mxu0 %v1870
    %1966 = vmatprep.subr.mxu0 0.0
    %1967 = vmatpush2.msra.mxu0 0.0
    %1968 = vmatprep.subr.mxu0 0.0
    %1969 = vmatpush2.msra.mxu0 0.0
    %1970 = vmatprep.subr.mxu0 0.0
    %1971 = vmatpush2.msra.mxu0 0.0
    %1972 = vmatprep.subr.mxu0 0.0
    %1973 = vmatpush2.msra.mxu0 0.0
    %1974 = vmatprep.subr.mxu0 0.0
    %1975 = vmatpush2.msra.mxu0 0.0
    %1976 = vmatprep.subr.mxu0 0.0
    %1977 = vmatpush2.msra.mxu0 0.0
    %1978 = vmatprep.subr.mxu0 0.0
    %1979 = vmatpush2.msra.mxu0 0.0
    %1980 = vmatprep.subr.mxu0 0.0
    %1981 = vmatpush2.msra.mxu0 0.0
    %1982 = vmatprep.subr.mxu0 0.0
    %1983 = vmatpush2.msra.mxu0 0.0
    %1984 = vmatprep.subr.mxu0 0.0
    %1985 = vmatpush2.msra.mxu0 0.0
    %1986 = vmatprep.subr.mxu0 0.0
    %1987 = vmatpush2.msra.mxu0 0.0
    %1988 = vmatprep.subr.mxu0 0.0
    %1989 = vmatpush2.msra.mxu0 0.0
    %1990 = vmatprep.subr.mxu0 0.0
    %1991 = vmatpush2.msra.mxu0 0.0
    %1992 = vmatprep.subr.mxu0 0.0
    %1993 = vmatpush2.msra.mxu0 0.0
    %1994 = vmatprep.subr.mxu0 0.0
    %1995 = vmatpush2.msra.mxu0 0.0
    %1996 = vmatprep.subr.mxu0 0.0
    %1997 = vmatpush2.msra.mxu0 0.0
    %1998 = vmatprep.mubr.f32.mxu0 0.0
    %1999 = vmatmul.mubr.f32.gmra.mxu0 %v1860
    %v2000 = vpop.f32.mrf.mxu0
    %v2001 = vadd.f32 0.0, %v2000
    %v2002 = vpop.f32.mrf.mxu0
    %v2003 = vadd.f32 0.0, %v2002
    %2004 = vdwg.mxu0
    %2005 = vmatprep.subr.mxu0 %v1933
    %2006 = vmatpush1.msra.mxu0 %v1932
    %2007 = vmatprep.subr.mxu0 %v1929
    %2008 = vmatpush1.msra.mxu0 %v1928
    %2009 = vmatprep.subr.mxu0 %v1925
    %2010 = vmatpush1.msra.mxu0 %v1924
    %2011 = vmatprep.subr.mxu0 %v1921
    %2012 = vmatpush1.msra.mxu0 %v1920
    %2013 = vmatprep.subr.mxu0 %v1917
    %2014 = vmatpush1.msra.mxu0 %v1916
    %2015 = vmatprep.subr.mxu0 %v1913
    %2016 = vmatpush1.msra.mxu0 %v1912
    %2017 = vmatprep.subr.mxu0 %v1909
    %2018 = vmatpush1.msra.mxu0 %v1908
    %2019 = vmatprep.subr.mxu0 %v1905
    %2020 = vmatpush1.msra.mxu0 %v1904
    %2021 = vmatprep.subr.mxu0 %v1901
    %2022 = vmatpush1.msra.mxu0 %v1900
    %2023 = vmatprep.subr.mxu0 %v1897
    %2024 = vmatpush1.msra.mxu0 %v1896
    %2025 = vmatprep.subr.mxu0 %v1893
    %2026 = vmatpush1.msra.mxu0 %v1892
    %2027 = vmatprep.subr.mxu0 %v1889
    %2028 = vmatpush1.msra.mxu0 %v1888
    %2029 = vmatprep.subr.mxu0 %v1885
    %2030 = vmatpush1.msra.mxu0 %v1884
    %2031 = vmatprep.subr.mxu0 %v1881
    %2032 = vmatpush1.msra.mxu0 %v1880
    %2033 = vmatprep.subr.mxu0 %v1877
    %2034 = vmatpush1.msra.mxu0 %v1876
    %2035 = vmatprep.subr.mxu0 %v1873
    %2036 = vmatpush1.msra.mxu0 %v1872
    %2037 = vmatprep.subr.mxu0 0.0
    %2038 = vmatpush2.msra.mxu0 0.0
    %2039 = vmatprep.subr.mxu0 0.0
    %2040 = vmatpush2.msra.mxu0 0.0
    %2041 = vmatprep.subr.mxu0 0.0
    %2042 = vmatpush2.msra.mxu0 0.0
    %2043 = vmatprep.subr.mxu0 0.0
    %2044 = vmatpush2.msra.mxu0 0.0
    %2045 = vmatprep.subr.mxu0 0.0
    %2046 = vmatpush2.msra.mxu0 0.0
    %2047 = vmatprep.subr.mxu0 0.0
    %2048 = vmatpush2.msra.mxu0 0.0
    %2049 = vmatprep.subr.mxu0 0.0
    %2050 = vmatpush2.msra.mxu0 0.0
    %2051 = vmatprep.subr.mxu0 0.0
    %2052 = vmatpush2.msra.mxu0 0.0
    %2053 = vmatprep.subr.mxu0 0.0
    %2054 = vmatpush2.msra.mxu0 0.0
    %2055 = vmatprep.subr.mxu0 0.0
    %2056 = vmatpush2.msra.mxu0 0.0
    %2057 = vmatprep.subr.mxu0 0.0
    %2058 = vmatpush2.msra.mxu0 0.0
    %2059 = vmatprep.subr.mxu0 0.0
    %2060 = vmatpush2.msra.mxu0 0.0
    %2061 = vmatprep.subr.mxu0 0.0
    %2062 = vmatpush2.msra.mxu0 0.0
    %2063 = vmatprep.subr.mxu0 0.0
    %2064 = vmatpush2.msra.mxu0 0.0
    %2065 = vmatprep.subr.mxu0 0.0
    %2066 = vmatpush2.msra.mxu0 0.0
    %2067 = vmatprep.subr.mxu0 0.0
    %2068 = vmatpush2.msra.mxu0 0.0
    %2069 = vmatprep.mubr.f32.mxu0 0.0
    %2070 = vmatmul.mubr.f32.gmra.mxu0 %v1860
    %v2071 = vpop.f32.mrf.mxu0
    %v2072 = vadd.f32 0.0, %v2071
    %v2073 = vpop.f32.mrf.mxu0
    %v2074 = vadd.f32 0.0, %v2073
    %2075 = vdwg.mxu0
    %v2076 = vadd.f32 %v1866, %v2001
    %v2077 = vadd.f32 %v1867, %v2003
    %v2078 = vadd.f32 %v1868, %v2072
    %v2079 = vadd.f32 %v1869, %v2074
    %v2080 = vxor.u32 %v2076, 2147483648
    %v2081 = vmul.f32 %v2080, 1.442695
    %v2082 = vpow.pop %v2081
    %v2083 = vadd.f32 %v2082, 1.0
    %v2084 = vrcp.pop %v2083
    %v2085 = vmul.f32 1.0, %v2084
    %v2086 = vxor.u32 %v2077, 2147483648
    %v2087 = vmul.f32 %v2086, 1.442695
    %v2088 = vpow.pop %v2087
    %v2089 = vadd.f32 %v2088, 1.0
    %v2090 = vrcp.pop %v2089
    %v2091 = vmul.f32 1.0, %v2090
    %v2092 = vtanh.pop %v2078
    %v2093 = vxor.u32 %v2079, 2147483648
    %v2094 = vmul.f32 %v2093, 1.442695
    %v2095 = vpow.pop %v2094
    %v2096 = vadd.f32 %v2095, 1.0
    %v2097 = vrcp.pop %v2096
    %v2098 = vmul.f32 1.0, %v2097
    %v2099 = vmul.f32 %v2091, %v1858
    %v2100 = vmul.f32 %v2085, %v2092
    %v2101 = vadd.f32 %v2099, %v2100
    %v2102 = vtanh.pop %v2101
    %v2103 = vmul.f32 %v2098, %v2102
    %s2104 = scalar_lea.vmem [#allocation3], 48
    %2105 = vst [vmem:[%s2104] sm:$0xff] %v2103
    %s2106 = smul.u32 7, 4
    %s2107 = smul.addr %s2106, 8
    %s2108 = scalar_lea.vmem [#allocation2], %s2107
    %v2109 = vld [vmem:[%s2108] sm:$0xff]
    %v2110 = vld [vmem:[%s2108 + $0x8] sm:$0xff]
    %v2111 = vld [vmem:[%s2108 + $0x10] sm:$0xff]
    %v2112 = vld [vmem:[%s2108 + $0x18] sm:$0xff]
    %v2113 = vld [vmem:[#allocation7] sm:$0xff]
    %v2114 = vld [vmem:[#allocation7 + $0x8] sm:$0xff]
    %v2115 = vld [vmem:[#allocation7 + $0x10] sm:$0xff]
    %v2116 = vld [vmem:[#allocation7 + $0x18] sm:$0xff]
    %v2117 = vld [vmem:[#allocation7 + $0x20] sm:$0xff]
    %v2118 = vld [vmem:[#allocation7 + $0x28] sm:$0xff]
    %v2119 = vld [vmem:[#allocation7 + $0x30] sm:$0xff]
    %v2120 = vld [vmem:[#allocation7 + $0x38] sm:$0xff]
    %v2121 = vld [vmem:[#allocation7 + $0x40] sm:$0xff]
    %v2122 = vld [vmem:[#allocation7 + $0x48] sm:$0xff]
    %v2123 = vld [vmem:[#allocation7 + $0x50] sm:$0xff]
    %v2124 = vld [vmem:[#allocation7 + $0x58] sm:$0xff]
    %v2125 = vld [vmem:[#allocation7 + $0x60] sm:$0xff]
    %v2126 = vld [vmem:[#allocation7 + $0x68] sm:$0xff]
    %v2127 = vld [vmem:[#allocation7 + $0x70] sm:$0xff]
    %v2128 = vld [vmem:[#allocation7 + $0x78] sm:$0xff]
    %v2129 = vld [vmem:[#allocation7 + $0x80] sm:$0xff]
    %v2130 = vld [vmem:[#allocation7 + $0x88] sm:$0xff]
    %v2131 = vld [vmem:[#allocation7 + $0x90] sm:$0xff]
    %v2132 = vld [vmem:[#allocation7 + $0x98] sm:$0xff]
    %v2133 = vld [vmem:[#allocation7 + $0xa0] sm:$0xff]
    %v2134 = vld [vmem:[#allocation7 + $0xa8] sm:$0xff]
    %v2135 = vld [vmem:[#allocation7 + $0xb0] sm:$0xff]
    %v2136 = vld [vmem:[#allocation7 + $0xb8] sm:$0xff]
    %v2137 = vld [vmem:[#allocation7 + $0xc0] sm:$0xff]
    %v2138 = vld [vmem:[#allocation7 + $0xc8] sm:$0xff]
    %v2139 = vld [vmem:[#allocation7 + $0xd0] sm:$0xff]
    %v2140 = vld [vmem:[#allocation7 + $0xd8] sm:$0xff]
    %v2141 = vld [vmem:[#allocation7 + $0xe0] sm:$0xff]
    %v2142 = vld [vmem:[#allocation7 + $0xe8] sm:$0xff]
    %v2143 = vld [vmem:[#allocation7 + $0xf0] sm:$0xff]
    %v2144 = vld [vmem:[#allocation7 + $0xf8] sm:$0xff]
    %v2145 = vld [vmem:[#allocation7 + $0x100] sm:$0xff]
    %v2146 = vld [vmem:[#allocation7 + $0x108] sm:$0xff]
    %v2147 = vld [vmem:[#allocation7 + $0x110] sm:$0xff]
    %v2148 = vld [vmem:[#allocation7 + $0x118] sm:$0xff]
    %v2149 = vld [vmem:[#allocation7 + $0x120] sm:$0xff]
    %v2150 = vld [vmem:[#allocation7 + $0x128] sm:$0xff]
    %v2151 = vld [vmem:[#allocation7 + $0x130] sm:$0xff]
    %v2152 = vld [vmem:[#allocation7 + $0x138] sm:$0xff]
    %v2153 = vld [vmem:[#allocation7 + $0x140] sm:$0xff]
    %v2154 = vld [vmem:[#allocation7 + $0x148] sm:$0xff]
    %v2155 = vld [vmem:[#allocation7 + $0x150] sm:$0xff]
    %v2156 = vld [vmem:[#allocation7 + $0x158] sm:$0xff]
    %v2157 = vld [vmem:[#allocation7 + $0x160] sm:$0xff]
    %v2158 = vld [vmem:[#allocation7 + $0x168] sm:$0xff]
    %v2159 = vld [vmem:[#allocation7 + $0x170] sm:$0xff]
    %v2160 = vld [vmem:[#allocation7 + $0x178] sm:$0xff]
    %v2161 = vld [vmem:[#allocation7 + $0x180] sm:$0xff]
    %v2162 = vld [vmem:[#allocation7 + $0x188] sm:$0xff]
    %v2163 = vld [vmem:[#allocation7 + $0x190] sm:$0xff]
    %v2164 = vld [vmem:[#allocation7 + $0x198] sm:$0xff]
    %v2165 = vld [vmem:[#allocation7 + $0x1a0] sm:$0xff]
    %v2166 = vld [vmem:[#allocation7 + $0x1a8] sm:$0xff]
    %v2167 = vld [vmem:[#allocation7 + $0x1b0] sm:$0xff]
    %v2168 = vld [vmem:[#allocation7 + $0x1b8] sm:$0xff]
    %v2169 = vld [vmem:[#allocation7 + $0x1c0] sm:$0xff]
    %v2170 = vld [vmem:[#allocation7 + $0x1c8] sm:$0xff]
    %v2171 = vld [vmem:[#allocation7 + $0x1d0] sm:$0xff]
    %v2172 = vld [vmem:[#allocation7 + $0x1d8] sm:$0xff]
    %v2173 = vld [vmem:[#allocation7 + $0x1e0] sm:$0xff]
    %v2174 = vld [vmem:[#allocation7 + $0x1e8] sm:$0xff]
    %v2175 = vld [vmem:[#allocation7 + $0x1f0] sm:$0xff]
    %v2176 = vld [vmem:[#allocation7 + $0x1f8] sm:$0xff]
    %2177 = vmatprep.subr.mxu0 %v2174
    %2178 = vmatpush1.msra.mxu0 %v2173
    %2179 = vmatprep.subr.mxu0 %v2170
    %2180 = vmatpush1.msra.mxu0 %v2169
    %2181 = vmatprep.subr.mxu0 %v2166
    %2182 = vmatpush1.msra.mxu0 %v2165
    %2183 = vmatprep.subr.mxu0 %v2162
    %2184 = vmatpush1.msra.mxu0 %v2161
    %2185 = vmatprep.subr.mxu0 %v2158
    %2186 = vmatpush1.msra.mxu0 %v2157
    %2187 = vmatprep.subr.mxu0 %v2154
    %2188 = vmatpush1.msra.mxu0 %v2153
    %2189 = vmatprep.subr.mxu0 %v2150
    %2190 = vmatpush1.msra.mxu0 %v2149
    %2191 = vmatprep.subr.mxu0 %v2146
    %2192 = vmatpush1.msra.mxu0 %v2145
    %2193 = vmatprep.subr.mxu0 %v2142
    %2194 = vmatpush1.msra.mxu0 %v2141
    %2195 = vmatprep.subr.mxu0 %v2138
    %2196 = vmatpush1.msra.mxu0 %v2137
    %2197 = vmatprep.subr.mxu0 %v2134
    %2198 = vmatpush1.msra.mxu0 %v2133
    %2199 = vmatprep.subr.mxu0 %v2130
    %2200 = vmatpush1.msra.mxu0 %v2129
    %2201 = vmatprep.subr.mxu0 %v2126
    %2202 = vmatpush1.msra.mxu0 %v2125
    %2203 = vmatprep.subr.mxu0 %v2122
    %2204 = vmatpush1.msra.mxu0 %v2121
    %2205 = vmatprep.subr.mxu0 %v2118
    %2206 = vmatpush1.msra.mxu0 %v2117
    %2207 = vmatprep.subr.mxu0 %v2114
    %2208 = vmatpush1.msra.mxu0 %v2113
    %2209 = vmatprep.subr.mxu0 0.0
    %2210 = vmatpush2.msra.mxu0 0.0
    %2211 = vmatprep.subr.mxu0 0.0
    %2212 = vmatpush2.msra.mxu0 0.0
    %2213 = vmatprep.subr.mxu0 0.0
    %2214 = vmatpush2.msra.mxu0 0.0
    %2215 = vmatprep.subr.mxu0 0.0
    %2216 = vmatpush2.msra.mxu0 0.0
    %2217 = vmatprep.subr.mxu0 0.0
    %2218 = vmatpush2.msra.mxu0 0.0
    %2219 = vmatprep.subr.mxu0 0.0
    %2220 = vmatpush2.msra.mxu0 0.0
    %2221 = vmatprep.subr.mxu0 0.0
    %2222 = vmatpush2.msra.mxu0 0.0
    %2223 = vmatprep.subr.mxu0 0.0
    %2224 = vmatpush2.msra.mxu0 0.0
    %2225 = vmatprep.subr.mxu0 0.0
    %2226 = vmatpush2.msra.mxu0 0.0
    %2227 = vmatprep.subr.mxu0 0.0
    %2228 = vmatpush2.msra.mxu0 0.0
    %2229 = vmatprep.subr.mxu0 0.0
    %2230 = vmatpush2.msra.mxu0 0.0
    %2231 = vmatprep.subr.mxu0 0.0
    %2232 = vmatpush2.msra.mxu0 0.0
    %2233 = vmatprep.subr.mxu0 0.0
    %2234 = vmatpush2.msra.mxu0 0.0
    %2235 = vmatprep.subr.mxu0 0.0
    %2236 = vmatpush2.msra.mxu0 0.0
    %2237 = vmatprep.subr.mxu0 0.0
    %2238 = vmatpush2.msra.mxu0 0.0
    %2239 = vmatprep.subr.mxu0 0.0
    %2240 = vmatpush2.msra.mxu0 0.0
    %2241 = vmatprep.mubr.f32.mxu0 0.0
    %2242 = vmatmul.mubr.f32.gmra.mxu0 %v2103
    %v2243 = vpop.f32.mrf.mxu0
    %v2244 = vadd.f32 0.0, %v2243
    %v2245 = vpop.f32.mrf.mxu0
    %v2246 = vadd.f32 0.0, %v2245
    %2247 = vdwg.mxu0
    %2248 = vmatprep.subr.mxu0 %v2176
    %2249 = vmatpush1.msra.mxu0 %v2175
    %2250 = vmatprep.subr.mxu0 %v2172
    %2251 = vmatpush1.msra.mxu0 %v2171
    %2252 = vmatprep.subr.mxu0 %v2168
    %2253 = vmatpush1.msra.mxu0 %v2167
    %2254 = vmatprep.subr.mxu0 %v2164
    %2255 = vmatpush1.msra.mxu0 %v2163
    %2256 = vmatprep.subr.mxu0 %v2160
    %2257 = vmatpush1.msra.mxu0 %v2159
    %2258 = vmatprep.subr.mxu0 %v2156
    %2259 = vmatpush1.msra.mxu0 %v2155
    %2260 = vmatprep.subr.mxu0 %v2152
    %2261 = vmatpush1.msra.mxu0 %v2151
    %2262 = vmatprep.subr.mxu0 %v2148
    %2263 = vmatpush1.msra.mxu0 %v2147
    %2264 = vmatprep.subr.mxu0 %v2144
    %2265 = vmatpush1.msra.mxu0 %v2143
    %2266 = vmatprep.subr.mxu0 %v2140
    %2267 = vmatpush1.msra.mxu0 %v2139
    %2268 = vmatprep.subr.mxu0 %v2136
    %2269 = vmatpush1.msra.mxu0 %v2135
    %2270 = vmatprep.subr.mxu0 %v2132
    %2271 = vmatpush1.msra.mxu0 %v2131
    %2272 = vmatprep.subr.mxu0 %v2128
    %2273 = vmatpush1.msra.mxu0 %v2127
    %2274 = vmatprep.subr.mxu0 %v2124
    %2275 = vmatpush1.msra.mxu0 %v2123
    %2276 = vmatprep.subr.mxu0 %v2120
    %2277 = vmatpush1.msra.mxu0 %v2119
    %2278 = vmatprep.subr.mxu0 %v2116
    %2279 = vmatpush1.msra.mxu0 %v2115
    %2280 = vmatprep.subr.mxu0 0.0
    %2281 = vmatpush2.msra.mxu0 0.0
    %2282 = vmatprep.subr.mxu0 0.0
    %2283 = vmatpush2.msra.mxu0 0.0
    %2284 = vmatprep.subr.mxu0 0.0
    %2285 = vmatpush2.msra.mxu0 0.0
    %2286 = vmatprep.subr.mxu0 0.0
    %2287 = vmatpush2.msra.mxu0 0.0
    %2288 = vmatprep.subr.mxu0 0.0
    %2289 = vmatpush2.msra.mxu0 0.0
    %2290 = vmatprep.subr.mxu0 0.0
    %2291 = vmatpush2.msra.mxu0 0.0
    %2292 = vmatprep.subr.mxu0 0.0
    %2293 = vmatpush2.msra.mxu0 0.0
    %2294 = vmatprep.subr.mxu0 0.0
    %2295 = vmatpush2.msra.mxu0 0.0
    %2296 = vmatprep.subr.mxu0 0.0
    %2297 = vmatpush2.msra.mxu0 0.0
    %2298 = vmatprep.subr.mxu0 0.0
    %2299 = vmatpush2.msra.mxu0 0.0
    %2300 = vmatprep.subr.mxu0 0.0
    %2301 = vmatpush2.msra.mxu0 0.0
    %2302 = vmatprep.subr.mxu0 0.0
    %2303 = vmatpush2.msra.mxu0 0.0
    %2304 = vmatprep.subr.mxu0 0.0
    %2305 = vmatpush2.msra.mxu0 0.0
    %2306 = vmatprep.subr.mxu0 0.0
    %2307 = vmatpush2.msra.mxu0 0.0
    %2308 = vmatprep.subr.mxu0 0.0
    %2309 = vmatpush2.msra.mxu0 0.0
    %2310 = vmatprep.subr.mxu0 0.0
    %2311 = vmatpush2.msra.mxu0 0.0
    %2312 = vmatprep.mubr.f32.mxu0 0.0
    %2313 = vmatmul.mubr.f32.gmra.mxu0 %v2103
    %v2314 = vpop.f32.mrf.mxu0
    %v2315 = vadd.f32 0.0, %v2314
    %v2316 = vpop.f32.mrf.mxu0
    %v2317 = vadd.f32 0.0, %v2316
    %2318 = vdwg.mxu0
    %v2319 = vadd.f32 %v2109, %v2244
    %v2320 = vadd.f32 %v2110, %v2246
    %v2321 = vadd.f32 %v2111, %v2315
    %v2322 = vadd.f32 %v2112, %v2317
    %v2323 = vxor.u32 %v2319, 2147483648
    %v2324 = vmul.f32 %v2323, 1.442695
    %v2325 = vpow.pop %v2324
    %v2326 = vadd.f32 %v2325, 1.0
    %v2327 = vrcp.pop %v2326
    %v2328 = vmul.f32 1.0, %v2327
    %v2329 = vxor.u32 %v2320, 2147483648
    %v2330 = vmul.f32 %v2329, 1.442695
    %v2331 = vpow.pop %v2330
    %v2332 = vadd.f32 %v2331, 1.0
    %v2333 = vrcp.pop %v2332
    %v2334 = vmul.f32 1.0, %v2333
    %v2335 = vtanh.pop %v2321
    %v2336 = vxor.u32 %v2322, 2147483648
    %v2337 = vmul.f32 %v2336, 1.442695
    %v2338 = vpow.pop %v2337
    %v2339 = vadd.f32 %v2338, 1.0
    %v2340 = vrcp.pop %v2339
    %v2341 = vmul.f32 1.0, %v2340
    %v2342 = vmul.f32 %v2334, %v2101
    %v2343 = vmul.f32 %v2328, %v2335
    %v2344 = vadd.f32 %v2342, %v2343
    %v2345 = vtanh.pop %v2344
    %v2346 = vmul.f32 %v2341, %v2345
    %s2347 = scalar_lea.vmem [#allocation3], 56
    %2348 = vst [vmem:[%s2347] sm:$0xff] %v2346
    %2349 = vst [vmem:[#allocation11] sm:$0xff] %v2346
    %2350 = vst [vmem:[#allocation13] sm:$0xff] %v2344
    %v2351 = vld [vmem:[#allocation3] sm:$0xff]
    %v2352 = vld [vmem:[#allocation3 + $0x8] sm:$0xff]
    %v2353 = vld [vmem:[#allocation3 + $0x10] sm:$0xff]
    %v2354 = vld [vmem:[#allocation3 + $0x18] sm:$0xff]
    %v2355 = vld [vmem:[#allocation3 + $0x20] sm:$0xff]
    %v2356 = vld [vmem:[#allocation3 + $0x28] sm:$0xff]
    %v2357 = vld [vmem:[#allocation3 + $0x30] sm:$0xff]
    %v2358 = vld [vmem:[#allocation3 + $0x38] sm:$0xff]
    %v2359 = vld [vmem:[#allocation9] sm:$0xff]
    %v2360 = vld [vmem:[#allocation9 + $0x8] sm:$0xff]
    %v2361 = vld [vmem:[#allocation9 + $0x10] sm:$0xff]
    %v2362 = vld [vmem:[#allocation9 + $0x18] sm:$0xff]
    %v2363 = vld [vmem:[#allocation9 + $0x20] sm:$0xff]
    %v2364 = vld [vmem:[#allocation9 + $0x28] sm:$0xff]
    %v2365 = vld [vmem:[#allocation9 + $0x30] sm:$0xff]
    %v2366 = vld [vmem:[#allocation9 + $0x38] sm:$0xff]
    %v2367 = vld [vmem:[#allocation9 + $0x40] sm:$0xff]
    %v2368 = vld [vmem:[#allocation9 + $0x48] sm:$0xff]
    %v2369 = vld [vmem:[#allocation9 + $0x50] sm:$0xff]
    %v2370 = vld [vmem:[#allocation9 + $0x58] sm:$0xff]
    %v2371 = vld [vmem:[#allocation9 + $0x60] sm:$0xff]
    %v2372 = vld [vmem:[#allocation9 + $0x68] sm:$0xff]
    %v2373 = vld [vmem:[#allocation9 + $0x70] sm:$0xff]
    %v2374 = vld [vmem:[#allocation9 + $0x78] sm:$0xff]
    %v2375 = vld [vmem:[%s7] sm:$0x1]
    %v2377 = vlaneseq
    %v2378 = vshrl.u32 %v2377, 7
    %v2379 = vsub.s32 0, %v2378
    %v2380 = vrot.slane %v2375, %v2379
    %2382 = vmatprep.subr.mxu0 0.0
    %2383 = vmatpush1.msra.mxu0 %v2374
    %2384 = vmatprep.subr.mxu0 0.0
    %2385 = vmatpush1.msra.mxu0 %v2373
    %2386 = vmatprep.subr.mxu0 0.0
    %2387 = vmatpush1.msra.mxu0 %v2372
    %2388 = vmatprep.subr.mxu0 0.0
    %2389 = vmatpush1.msra.mxu0 %v2371
    %2390 = vmatprep.subr.mxu0 0.0
    %2391 = vmatpush1.msra.mxu0 %v2370
    %2392 = vmatprep.subr.mxu0 0.0
    %2393 = vmatpush1.msra.mxu0 %v2369
    %2394 = vmatprep.subr.mxu0 0.0
    %2395 = vmatpush1.msra.mxu0 %v2368
    %2396 = vmatprep.subr.mxu0 0.0
    %2397 = vmatpush1.msra.mxu0 %v2367
    %2398 = vmatprep.subr.mxu0 0.0
    %2399 = vmatpush1.msra.mxu0 %v2366
    %2400 = vmatprep.subr.mxu0 0.0
    %2401 = vmatpush1.msra.mxu0 %v2365
    %2402 = vmatprep.subr.mxu0 0.0
    %2403 = vmatpush1.msra.mxu0 %v2364
    %2404 = vmatprep.subr.mxu0 0.0
    %2405 = vmatpush1.msra.mxu0 %v2363
    %2406 = vmatprep.subr.mxu0 0.0
    %2407 = vmatpush1.msra.mxu0 %v2362
    %2408 = vmatprep.subr.mxu0 0.0
    %2409 = vmatpush1.msra.mxu0 %v2361
    %2410 = vmatprep.subr.mxu0 0.0
    %2411 = vmatpush1.msra.mxu0 %v2360
    %2412 = vmatprep.subr.mxu0 0.0
    %2413 = vmatpush1.msra.mxu0 %v2359
    %2414 = vmatprep.subr.mxu0 0.0
    %2415 = vmatpush2.msra.mxu0 0.0
    %2416 = vmatprep.subr.mxu0 0.0
    %2417 = vmatpush2.msra.mxu0 0.0
    %2418 = vmatprep.subr.mxu0 0.0
    %2419 = vmatpush2.msra.mxu0 0.0
    %2420 = vmatprep.subr.mxu0 0.0
    %2421 = vmatpush2.msra.mxu0 0.0
    %2422 = vmatprep.subr.mxu0 0.0
    %2423 = vmatpush2.msra.mxu0 0.0
    %2424 = vmatprep.subr.mxu0 0.0
    %2425 = vmatpush2.msra.mxu0 0.0
    %2426 = vmatprep.subr.mxu0 0.0
    %2427 = vmatpush2.msra.mxu0 0.0
    %2428 = vmatprep.subr.mxu0 0.0
    %2429 = vmatpush2.msra.mxu0 0.0
    %2430 = vmatprep.subr.mxu0 0.0
    %2431 = vmatpush2.msra.mxu0 0.0
    %2432 = vmatprep.subr.mxu0 0.0
    %2433 = vmatpush2.msra.mxu0 0.0
    %2434 = vmatprep.subr.mxu0 0.0
    %2435 = vmatpush2.msra.mxu0 0.0
    %2436 = vmatprep.subr.mxu0 0.0
    %2437 = vmatpush2.msra.mxu0 0.0
    %2438 = vmatprep.subr.mxu0 0.0
    %2439 = vmatpush2.msra.mxu0 0.0
    %2440 = vmatprep.subr.mxu0 0.0
    %2441 = vmatpush2.msra.mxu0 0.0
    %2442 = vmatprep.subr.mxu0 0.0
    %2443 = vmatpush2.msra.mxu0 0.0
    %2444 = vmatprep.subr.mxu0 0.0
    %2445 = vmatpush2.msra.mxu0 0.0
    %2446 = vmatprep.mubr.f32.mxu0 0.0
    %2447 = vmatmul.mubr.f32.gmra.mxu0 %v2351
    %v2448 = vpop.f32.mrf.mxu0
    %v2449 = vadd.f32 %v2380, %v2448
    %v2450 = vpop.f32.mrf.mxu0
    %2451 = vmatprep.mubr.f32.mxu0 0.0
    %2452 = vmatmul.mubr.f32.gmra.mxu0 %v2352
    %v2453 = vpop.f32.mrf.mxu0
    %v2454 = vadd.f32 %v2380, %v2453
    %v2455 = vpop.f32.mrf.mxu0
    %2456 = vmatprep.mubr.f32.mxu0 0.0
    %2457 = vmatmul.mubr.f32.gmra.mxu0 %v2353
    %v2458 = vpop.f32.mrf.mxu0
    %v2459 = vadd.f32 %v2380, %v2458
    %v2460 = vpop.f32.mrf.mxu0
    %2461 = vmatprep.mubr.f32.mxu0 0.0
    %2462 = vmatmul.mubr.f32.gmra.mxu0 %v2354
    %v2463 = vpop.f32.mrf.mxu0
    %v2464 = vadd.f32 %v2380, %v2463
    %v2465 = vpop.f32.mrf.mxu0
    %2466 = vmatprep.mubr.f32.mxu0 0.0
    %2467 = vmatmul.mubr.f32.gmra.mxu0 %v2355
    %v2468 = vpop.f32.mrf.mxu0
    %v2469 = vadd.f32 %v2380, %v2468
    %v2470 = vpop.f32.mrf.mxu0
    %2471 = vmatprep.mubr.f32.mxu0 0.0
    %2472 = vmatmul.mubr.f32.gmra.mxu0 %v2356
    %v2473 = vpop.f32.mrf.mxu0
    %v2474 = vadd.f32 %v2380, %v2473
    %v2475 = vpop.f32.mrf.mxu0
    %2476 = vmatprep.mubr.f32.mxu0 0.0
    %2477 = vmatmul.mubr.f32.gmra.mxu0 %v2357
    %v2478 = vpop.f32.mrf.mxu0
    %v2479 = vadd.f32 %v2380, %v2478
    %v2480 = vpop.f32.mrf.mxu0
    %2481 = vmatprep.mubr.f32.mxu0 0.0
    %2482 = vmatmul.mubr.f32.gmra.mxu0 %v2358
    %v2483 = vpop.f32.mrf.mxu0
    %v2484 = vadd.f32 %v2380, %v2483
    %v2485 = vpop.f32.mrf.mxu0
    %2486 = vdwg.mxu0
    %2487 = vst [vmem:[#allocation10] sm:$0xff] %v2449
    %2488 = vst [vmem:[#allocation10 + $0x8] sm:$0xff] %v2454
    %2489 = vst [vmem:[#allocation10 + $0x10] sm:$0xff] %v2459
    %2490 = vst [vmem:[#allocation10 + $0x18] sm:$0xff] %v2464
    %2491 = vst [vmem:[#allocation10 + $0x20] sm:$0xff] %v2469
    %2492 = vst [vmem:[#allocation10 + $0x28] sm:$0xff] %v2474
    %2493 = vst [vmem:[#allocation10 + $0x30] sm:$0xff] %v2479
    %2494 = vst [vmem:[#allocation10 + $0x38] sm:$0xff] %v2484
    // Predicated region
    $region46: #{tpu_custom_call.1} parent=1 // pred_check
      _
    $region47: #{tpu_custom_call.1} parent=1 // pred_check_branch
      %2496 = sbr.rel (0) target = $region49
    $region48: #{tpu_custom_call.1} parent=1 // pred_region
      %s2498 = ssub.s32 1024, 1024
      %2499 = vsyncadd [#allocation6], %s2498
      %s2500 = sshll.u32 [#allocation10], 4
      %s2501 = int_to_ptr.vmem [resolvable:$true] %s2500
      %2506 = dma.vmem_to_hbm [thread:$0]  %s2501, 1024, %s8, [#allocation6], 128, 128, 8
    $region49: #{tpu_custom_call.1} parent=1 // pred_fallthru
      _
    // Predicated region
    $region50: #{tpu_custom_call.1} parent=1 // pred_check
      _
    $region51: #{tpu_custom_call.1} parent=1 // pred_check_branch
      %2508 = sbr.rel (0) target = $region53
    $region52: #{tpu_custom_call.1} parent=1 // pred_region
      %s2510 = ssub.s32 128, 128
      %2511 = vsyncadd [#allocation12], %s2510
      %s2513 = sshll.u32 [#allocation11], 4
      %s2514 = int_to_ptr.vmem [resolvable:$true] %s2513
      %2516 = dma.vmem_to_hbm [thread:$0]  %s2514, 128, %s9, [#allocation12]
    $region53: #{tpu_custom_call.1} parent=1 // pred_fallthru
      _
    // Predicated region
    $region54: #{tpu_custom_call.1} parent=1 // pred_check
      _
    $region55: #{tpu_custom_call.1} parent=1 // pred_check_branch
      %2518 = sbr.rel (0) target = $region57
    $region56: #{tpu_custom_call.1} parent=1 // pred_region
      %s2520 = ssub.s32 128, 128
      %2521 = vsyncadd [#allocation12], %s2520
      %s2523 = sshll.u32 [#allocation13], 4
      %s2524 = int_to_ptr.vmem [resolvable:$true] %s2523
      %2526 = dma.vmem_to_hbm [thread:$0]  %s2524, 128, %s10, [#allocation12]
    $region57: #{tpu_custom_call.1} parent=1 // pred_fallthru
      _
    // Predicated region
    $region58: #{tpu_custom_call.1} parent=1 // pred_check
      _
    $region59: #{tpu_custom_call.1} parent=1 // pred_check_branch
      %2528 = sbr.rel (0) target = $region61
    $region60: #{tpu_custom_call.1} parent=1 // pred_region
      %2529 = dma.done [#allocation6], 1024
    $region61: #{tpu_custom_call.1} parent=1 // pred_fallthru
      _
    // Predicated region
    $region62: #{tpu_custom_call.1} parent=1 // pred_check
      _
    $region63: #{tpu_custom_call.1} parent=1 // pred_check_branch
      %2531 = sbr.rel (0) target = $region65
    $region64: #{tpu_custom_call.1} parent=1 // pred_region
      %2532 = dma.done [#allocation12], 128
    $region65: #{tpu_custom_call.1} parent=1 // pred_fallthru
      _
    // Predicated region
    $region66: #{tpu_custom_call.1} parent=1 // pred_check
      _
    $region67: #{tpu_custom_call.1} parent=1 // pred_check_branch
      %2534 = sbr.rel (0) target = $region69
    $region68: #{tpu_custom_call.1} parent=1 // pred_region
      %2535 = dma.done [#allocation12], 128
    $region69: #{tpu_custom_call.1} parent=1 // pred_fallthru
      _
    %2536 = vsyncpa [#allocation5], 1
    %2537 = vsyncpa [#allocation8], 1
    %2538 = vsyncpa [#allocation6], 1
    %2539 = vsyncpa [#allocation12], 1

</llo_original>
